<compile_context>
chip_gen: v7x
topology: tpu7x:2x2x1
jax: 0.10.0
libtpu: 0.0.40
codegen_flags: <defaults>
</compile_context>

<pallas_src>
import math
import functools

import jax
import jax.numpy as jnp
import numpy as np
from jax.experimental import pallas as pl
from jax.experimental.pallas import tpu as pltpu

NUM_HEADS = 8


def _decoder_block_kernel(q_ref, k_ref, v_ref,
                          wq_ref, bq_ref, wk_ref, bk_ref, wv_ref, bv_ref,
                          wo_ref, bo_ref, w1_ref, b1_ref, w2_ref, b2_ref,
                          o_ref, ctx_ref,
                          *, num_heads, head_dim_padded, ff_chunk, compute_dtype):
    TQ, E = q_ref.shape          # one (batch, q-row-tile) block; batch dim squeezed away
    Lk, _ = k_ref.shape
    Dp = head_dim_padded
    cdt = compute_dtype

    q_in = q_ref[...]                         # f32, kept for the residual path
    qb = q_in.astype(cdt)                     # bf16 MXU operands
    kb = k_ref[...].astype(cdt)
    vb = v_ref[...].astype(cdt)

    # Q/K/V projections: single dense GEMMs straight into the head-padded, lane-aligned
    # layout (columns of wq/wk/wv are grouped per head and padded to Dp lanes).
    # The 1/sqrt(head_dim) attention scale is pre-folded into wq/bq.
    # Results are held in bf16 (only ever used as MXU operands) to cut vreg pressure.
    Q = (jnp.dot(qb, wq_ref[...], preferred_element_type=jnp.float32) + bq_ref[...]).astype(cdt)
    K = (jnp.dot(kb, wk_ref[...], preferred_element_type=jnp.float32) + bk_ref[...]).astype(cdt)
    V = (jnp.dot(vb, wv_ref[...], preferred_element_type=jnp.float32) + bv_ref[...]).astype(cdt)

    # Contract the last dims directly (q·k with no K transpose).
    dn_qk = (((1,), (1,)), ((), ()))
    for h in range(num_heads):
        lo = h * Dp                           # 128-aligned -> lane-tile-aligned view (no copy)
        qh = Q[:, lo:lo + Dp]
        kh = K[:, lo:lo + Dp]
        vh = V[:, lo:lo + Dp]

        s = jax.lax.dot_general(qh, kh, dn_qk,
                                preferred_element_type=jnp.float32)       # (TQ, Lk) f32
        s = s - jnp.max(s, axis=-1, keepdims=True)                        # f32 softmax
        p = jnp.exp(s)
        p = p * pl.reciprocal(jnp.sum(p, axis=-1, keepdims=True), approx=True)

        ctx = jnp.dot(p.astype(cdt), vh, preferred_element_type=jnp.float32)  # (TQ, Dp)
        ctx_ref[:, lo:lo + Dp] = ctx          # aligned store into the context slab

    # Single dense output projection over the assembled, lane-aligned context slab.
    # (padded lanes hold zeros; the matching wo rows are zero -> exact)
    attn = jnp.dot(ctx_ref[...].astype(cdt), wo_ref[...],
                   preferred_element_type=jnp.float32) + bo_ref[...]
    attn_b = attn.astype(cdt)

    # Feed-forward, chunked over the 4E hidden dim: the full (TQ, 4E) f32 h1 never exists.
    DFF = w1_ref.shape[1]
    ffw = jnp.zeros((TQ, E), jnp.float32)
    for c0 in range(0, DFF, ff_chunk):
        h1 = jnp.dot(attn_b, w1_ref[:, c0:c0 + ff_chunk],
                     preferred_element_type=jnp.float32) + b1_ref[:, c0:c0 + ff_chunk]
        h1 = jnp.maximum(h1, 0.0).astype(cdt)
        ffw = ffw + jnp.dot(h1, w2_ref[c0:c0 + ff_chunk, :],
                            preferred_element_type=jnp.float32)
    ffw = ffw + b2_ref[...]

    out = ffw + q_in.astype(jnp.float32)      # residual in f32
    o_ref[...] = out.astype(o_ref.dtype)


def prepare_params(params, *, num_heads=NUM_HEADS, compute_dtype=jnp.bfloat16):
    """One-time conversion of PyTorch-layout params (Linear weight = (out, in)) into the
    kernel-ready layout: (in, out) bf16 weights, per-head columns/rows padded to a
    128-lane multiple, attention scale folded into Wq/bq, f32 biases.  Call ONCE."""
    E = params["wq"].shape[0]
    Dh = E // num_heads
    Dp = -(-Dh // 128) * 128                  # pad head dim up to a lane tile
    scale = 1.0 / math.sqrt(Dh)

    def pad_cols_per_head(w_io):              # (E, H*Dh) -> (E, H*Dp)
        w3 = w_io.reshape(E, num_heads, Dh)
        out = jnp.zeros((E, num_heads, Dp), w_io.dtype).at[:, :, :Dh].set(w3)
        return out.reshape(E, num_heads * Dp)

    def pad_vec_per_head(b):                  # (H*Dh,) -> (1, H*Dp)
        b2 = b.reshape(num_heads, Dh)
        out = jnp.zeros((num_heads, Dp), b.dtype).at[:, :Dh].set(b2)
        return out.reshape(1, num_heads * Dp)

    def pad_rows_per_head(w_io):              # (H*Dh, E) -> (H*Dp, E)
        w3 = w_io.reshape(num_heads, Dh, E)
        out = jnp.zeros((num_heads, Dp, E), w_io.dtype).at[:, :Dh, :].set(w3)
        return out.reshape(num_heads * Dp, E)

    return {
        "wq": pad_cols_per_head(params["wq"].T * scale).astype(compute_dtype),
        "bq": pad_vec_per_head(params["bq"] * scale).astype(jnp.float32),
        "wk": pad_cols_per_head(params["wk"].T).astype(compute_dtype),
        "bk": pad_vec_per_head(params["bk"]).astype(jnp.float32),
        "wv": pad_cols_per_head(params["wv"].T).astype(compute_dtype),
        "bv": pad_vec_per_head(params["bv"]).astype(jnp.float32),
        "wo": pad_rows_per_head(params["wo"].T).astype(compute_dtype),
        "bo": params["bo"].reshape(1, E).astype(jnp.float32),
        "w1": params["w1"].T.astype(compute_dtype),
        "b1": params["b1"].reshape(1, -1).astype(jnp.float32),
        "w2": params["w2"].T.astype(compute_dtype),
        "b2": params["b2"].reshape(1, E).astype(jnp.float32),
    }


def decoder_transformer_block(query, key, value, prep, *, num_heads=NUM_HEADS,
                              q_tile=256, ff_chunk=512, compute_dtype=jnp.bfloat16):
    """Pallas implementation of DecoderTransformerBlock.forward (batch_first)."""
    B, Lq, E = query.shape
    Bk, Lk, Ek = key.shape
    assert Bk == B and Ek == E and value.shape == key.shape
    assert E % num_heads == 0
    Dp = prep["wq"].shape[1] // num_heads
    DFF = prep["w1"].shape[1]

    TQ = min(q_tile, Lq)
    assert Lq % TQ == 0
    # f32 inputs -> sublane tile 8 (use %16 if the HBM inputs themselves move to bf16).
    assert Lq % 8 == 0 and Lk % 8 == 0, "pad Lq/Lk to a multiple of 8"
    tc_ff = min(ff_chunk, DFF)
    assert DFF % tc_ff == 0

    grid = (B, Lq // TQ)          # both axes "parallel" -> shards across v7x's 2 TCs

    def rows_spec(T):
        return pl.BlockSpec((pl.Squeezed(), T, E), lambda b, i: (b, i, 0))

    def kv_spec():
        return pl.BlockSpec((pl.Squeezed(), Lk, E), lambda b, i: (b, 0, 0))

    def w_spec(arr):              # constant index_map -> DMA'd once, stays resident
        return pl.BlockSpec(arr.shape, lambda b, i: (0, 0))

    kernel = functools.partial(_decoder_block_kernel, num_heads=num_heads,
                               head_dim_padded=Dp, ff_chunk=tc_ff,
                               compute_dtype=compute_dtype)

    return pl.pallas_call(
        kernel,
        out_shape=jax.ShapeDtypeStruct((B, Lq, E), query.dtype),
        grid_spec=pltpu.PrefetchScalarGridSpec(
            num_scalar_prefetch=0,
            grid=grid,
            in_specs=[
                rows_spec(TQ), kv_spec(), kv_spec(),
                w_spec(prep["wq"]), w_spec(prep["bq"]),
                w_spec(prep["wk"]), w_spec(prep["bk"]),
                w_spec(prep["wv"]), w_spec(prep["bv"]),
                w_spec(prep["wo"]), w_spec(prep["bo"]),
                w_spec(prep["w1"]), w_spec(prep["b1"]),
                w_spec(prep["w2"]), w_spec(prep["b2"]),
            ],
            out_specs=rows_spec(TQ),
            # Lane-aligned per-head context slab (f32 for clean (8,128) tiling).
            scratch_shapes=[pltpu.VMEM((TQ, num_heads * Dp), jnp.float32)],
        ),
        compiler_params=pltpu.CompilerParams(
            dimension_semantics=("parallel", "parallel"),
            vmem_limit_bytes=32 * 1024 * 1024,   # explicit; re-derive for v7x / large E
        ),
    )(query, key, value,
      prep["wq"], prep["bq"], prep["wk"], prep["bk"], prep["wv"], prep["bv"],
      prep["wo"], prep["bo"], prep["w1"], prep["b1"], prep["w2"], prep["b2"])


def reference_forward(query, key, value, params, *, num_heads=NUM_HEADS):
    """Pure-JAX f32 reference matching torch.nn.MultiheadAttention + FFW + residual."""
    B, Lq, E = query.shape
    Dh = E // num_heads

    def lin(x, w, b):  # PyTorch Linear: x @ W.T + b
        return jnp.einsum("ble,oe->blo", x, w) + b

    Q = lin(query, params["wq"], params["bq"])
    K = lin(key, params["wk"], params["bk"])
    V = lin(value, params["wv"], params["bv"])

    Qh = Q.reshape(B, Lq, num_heads, Dh).transpose(0, 2, 1, 3)
    Kh = K.reshape(B, -1, num_heads, Dh).transpose(0, 2, 1, 3)
    Vh = V.reshape(B, -1, num_heads, Dh).transpose(0, 2, 1, 3)

    s = jnp.einsum("bhqd,bhkd->bhqk", Qh, Kh) / math.sqrt(Dh)
    p = jax.nn.softmax(s, axis=-1)
    o = jnp.einsum("bhqk,bhkd->bhqd", p, Vh)
    o = o.transpose(0, 2, 1, 3).reshape(B, Lq, E)

    attn = lin(o, params["wo"], params["bo"])
    h1 = jax.nn.relu(lin(attn, params["w1"], params["b1"]))
    ffw = lin(h1, params["w2"], params["b2"])
    return ffw + query


def init_params(hidden_size, rng):
    """Deterministic synthetic parameters with PyTorch shapes: Linear weight = (out, in)."""
    keys = jax.random.split(rng, 12)
    E = hidden_size
    n = lambda k, shape: (jax.random.normal(k, shape, dtype=jnp.float32) * 0.05)
    return {
        "wq": n(keys[0], (E, E)),  "bq": n(keys[1], (E,)),
        "wk": n(keys[2], (E, E)),  "bk": n(keys[3], (E,)),
        "wv": n(keys[4], (E, E)),  "bv": n(keys[5], (E,)),
        "wo": n(keys[6], (E, E)),  "bo": n(keys[7], (E,)),
        "w1": n(keys[8], (4 * E, E)), "b1": n(keys[9], (4 * E,)),
        "w2": n(keys[10], (E, 4 * E)), "b2": n(keys[11], (E,)),
    }


if __name__ == "__main__":
    # hidden_size=32 with 8 heads -> head_dim=4 (padded to 128 lanes in the kernel).
    B, Lq, Lk, E = 2, 16, 16, 32

    root = jax.random.PRNGKey(0)
    kq, kk, kv, kp = jax.random.split(root, 4)
    query = jax.random.normal(kq, (B, Lq, E), dtype=jnp.float32)
    key = jax.random.normal(kk, (B, Lk, E), dtype=jnp.float32)
    value = jax.random.normal(kv, (B, Lk, E), dtype=jnp.float32)

    params = init_params(E, kp)
    prep = prepare_params(params)          # one-time weight re-layout / bf16 cast

    out = decoder_transformer_block(query, key, value, prep)
    out = jax.block_until_ready(out)

    ref = reference_forward(query, key, value, params)
    # Tolerance accounts for bf16 MXU operands + EUP approximate reciprocal; softmax,
    # biases and the residual are exact f32.
    np.testing.assert_allclose(np.asarray(out), np.asarray(ref), atol=3e-2, rtol=3e-2)

    print("KERNEL_OK")
</pallas_src>

<mosaic_0001>
module attributes {stable_mosaic.version = 11 : i64} {
  func.func @_decoder_block_kernel(%arg0: i32, %arg1: i32, %arg2: memref<1x16x32xf32, #tpu.memory_space<vmem>>, %arg3: memref<1x16x32xf32, #tpu.memory_space<vmem>>, %arg4: memref<1x16x32xf32, #tpu.memory_space<vmem>>, %arg5: memref<32x1024xbf16, #tpu.memory_space<vmem>>, %arg6: memref<1x1024xf32, #tpu.memory_space<vmem>>, %arg7: memref<32x1024xbf16, #tpu.memory_space<vmem>>, %arg8: memref<1x1024xf32, #tpu.memory_space<vmem>>, %arg9: memref<32x1024xbf16, #tpu.memory_space<vmem>>, %arg10: memref<1x1024xf32, #tpu.memory_space<vmem>>, %arg11: memref<1024x32xbf16, #tpu.memory_space<vmem>>, %arg12: memref<1x32xf32, #tpu.memory_space<vmem>>, %arg13: memref<32x128xbf16, #tpu.memory_space<vmem>>, %arg14: memref<1x128xf32, #tpu.memory_space<vmem>>, %arg15: memref<128x32xbf16, #tpu.memory_space<vmem>>, %arg16: memref<1x32xf32, #tpu.memory_space<vmem>>, %arg17: memref<1x16x32xf32, #tpu.memory_space<vmem>>, %arg18: memref<16x1024xf32, #tpu.memory_space<vmem>>) attributes {dimension_semantics = [#tpu.dimension_semantics<parallel>, #tpu.dimension_semantics<parallel>], iteration_bounds = array<i64: 2, 1>, scalar_prefetch = 0 : i64, scratch_operands = 1 : i64, tpu.core_type = #tpu.core_type<tc>, window_params = [{transform_indices = @transform_0, window_bounds = array<i64: 1, 16, 32>}, {transform_indices = @transform_1, window_bounds = array<i64: 1, 16, 32>}, {transform_indices = @transform_2, window_bounds = array<i64: 1, 16, 32>}, {pipeline_mode = #tpu.pipeline_mode<synchronous>, transform_indices = @transform_3, window_bounds = array<i64: 32, 1024>}, {pipeline_mode = #tpu.pipeline_mode<synchronous>, transform_indices = @transform_4, window_bounds = array<i64: 1, 1024>}, {pipeline_mode = #tpu.pipeline_mode<synchronous>, transform_indices = @transform_5, window_bounds = array<i64: 32, 1024>}, {pipeline_mode = #tpu.pipeline_mode<synchronous>, transform_indices = @transform_6, window_bounds = array<i64: 1, 1024>}, {pipeline_mode = #tpu.pipeline_mode<synchronous>, transform_indices = @transform_7, window_bounds = array<i64: 32, 1024>}, {pipeline_mode = #tpu.pipeline_mode<synchronous>, transform_indices = @transform_8, window_bounds = array<i64: 1, 1024>}, {pipeline_mode = #tpu.pipeline_mode<synchronous>, transform_indices = @transform_9, window_bounds = array<i64: 1024, 32>}, {pipeline_mode = #tpu.pipeline_mode<synchronous>, transform_indices = @transform_10, window_bounds = array<i64: 1, 32>}, {pipeline_mode = #tpu.pipeline_mode<synchronous>, transform_indices = @transform_11, window_bounds = array<i64: 32, 128>}, {pipeline_mode = #tpu.pipeline_mode<synchronous>, transform_indices = @transform_12, window_bounds = array<i64: 1, 128>}, {pipeline_mode = #tpu.pipeline_mode<synchronous>, transform_indices = @transform_13, window_bounds = array<i64: 128, 32>}, {pipeline_mode = #tpu.pipeline_mode<synchronous>, transform_indices = @transform_14, window_bounds = array<i64: 1, 32>}, {transform_indices = @transform_15, window_bounds = array<i64: 1, 16, 32>}]} {
    %c0 = arith.constant 0 : index
    %c0_0 = arith.constant 0 : index
    %c0_1 = arith.constant 0 : index
    %0 = vector.load %arg2[%c0, %c0_0, %c0_1] : memref<1x16x32xf32, #tpu.memory_space<vmem>>, vector<1x16x32xf32>
    %1 = vector.shape_cast %0 : vector<1x16x32xf32> to vector<16x32xf32>
    %2 = arith.truncf %1 : vector<16x32xf32> to vector<16x32xbf16>
    %c0_2 = arith.constant 0 : index
    %c0_3 = arith.constant 0 : index
    %c0_4 = arith.constant 0 : index
    %3 = vector.load %arg3[%c0_2, %c0_3, %c0_4] : memref<1x16x32xf32, #tpu.memory_space<vmem>>, vector<1x16x32xf32>
    %4 = vector.shape_cast %3 : vector<1x16x32xf32> to vector<16x32xf32>
    %5 = arith.truncf %4 : vector<16x32xf32> to vector<16x32xbf16>
    %c0_5 = arith.constant 0 : index
    %c0_6 = arith.constant 0 : index
    %c0_7 = arith.constant 0 : index
    %6 = vector.load %arg4[%c0_5, %c0_6, %c0_7] : memref<1x16x32xf32, #tpu.memory_space<vmem>>, vector<1x16x32xf32>
    %7 = vector.shape_cast %6 : vector<1x16x32xf32> to vector<16x32xf32>
    %8 = arith.truncf %7 : vector<16x32xf32> to vector<16x32xbf16>
    %c0_8 = arith.constant 0 : index
    %c0_9 = arith.constant 0 : index
    %9 = vector.load %arg5[%c0_8, %c0_9] : memref<32x1024xbf16, #tpu.memory_space<vmem>>, vector<32x1024xbf16>
    %cst = arith.constant dense<0.000000e+00> : vector<16x1024xf32>
    %10 = tpu.matmul %2, %9, %cst {dimension_numbers = #tpu.dot_dimension_numbers<[1], [0], [0], [1], [0, 0, 1, 1], [], []>} : vector<16x32xbf16>, vector<32x1024xbf16>, vector<16x1024xf32> -> vector<16x1024xf32>
    %c0_10 = arith.constant 0 : index
    %c0_11 = arith.constant 0 : index
    %11 = vector.load %arg6[%c0_10, %c0_11] : memref<1x1024xf32, #tpu.memory_space<vmem>>, vector<1x1024xf32>
    %12 = vector.broadcast %11 : vector<1x1024xf32> to vector<16x1024xf32>
    %13 = arith.addf %10, %12 : vector<16x1024xf32>
    %14 = arith.truncf %13 : vector<16x1024xf32> to vector<16x1024xbf16>
    %c0_12 = arith.constant 0 : index
    %c0_13 = arith.constant 0 : index
    %15 = vector.load %arg7[%c0_12, %c0_13] : memref<32x1024xbf16, #tpu.memory_space<vmem>>, vector<32x1024xbf16>
    %cst_14 = arith.constant dense<0.000000e+00> : vector<16x1024xf32>
    %16 = tpu.matmul %5, %15, %cst_14 {dimension_numbers = #tpu.dot_dimension_numbers<[1], [0], [0], [1], [0, 0, 1, 1], [], []>} : vector<16x32xbf16>, vector<32x1024xbf16>, vector<16x1024xf32> -> vector<16x1024xf32>
    %c0_15 = arith.constant 0 : index
    %c0_16 = arith.constant 0 : index
    %17 = vector.load %arg8[%c0_15, %c0_16] : memref<1x1024xf32, #tpu.memory_space<vmem>>, vector<1x1024xf32>
    %18 = vector.broadcast %17 : vector<1x1024xf32> to vector<16x1024xf32>
    %19 = arith.addf %16, %18 : vector<16x1024xf32>
    %20 = arith.truncf %19 : vector<16x1024xf32> to vector<16x1024xbf16>
    %c0_17 = arith.constant 0 : index
    %c0_18 = arith.constant 0 : index
    %21 = vector.load %arg9[%c0_17, %c0_18] : memref<32x1024xbf16, #tpu.memory_space<vmem>>, vector<32x1024xbf16>
    %cst_19 = arith.constant dense<0.000000e+00> : vector<16x1024xf32>
    %22 = tpu.matmul %8, %21, %cst_19 {dimension_numbers = #tpu.dot_dimension_numbers<[1], [0], [0], [1], [0, 0, 1, 1], [], []>} : vector<16x32xbf16>, vector<32x1024xbf16>, vector<16x1024xf32> -> vector<16x1024xf32>
    %c0_20 = arith.constant 0 : index
    %c0_21 = arith.constant 0 : index
    %23 = vector.load %arg10[%c0_20, %c0_21] : memref<1x1024xf32, #tpu.memory_space<vmem>>, vector<1x1024xf32>
    %24 = vector.broadcast %23 : vector<1x1024xf32> to vector<16x1024xf32>
    %25 = arith.addf %22, %24 : vector<16x1024xf32>
    %26 = arith.truncf %25 : vector<16x1024xf32> to vector<16x1024xbf16>
    %27 = vector.extract_strided_slice %14 {offsets = [0, 0], sizes = [16, 128], strides = [1, 1]} : vector<16x1024xbf16> to vector<16x128xbf16>
    %28 = vector.extract_strided_slice %20 {offsets = [0, 0], sizes = [16, 128], strides = [1, 1]} : vector<16x1024xbf16> to vector<16x128xbf16>
    %29 = vector.extract_strided_slice %26 {offsets = [0, 0], sizes = [16, 128], strides = [1, 1]} : vector<16x1024xbf16> to vector<16x128xbf16>
    %cst_22 = arith.constant dense<0.000000e+00> : vector<16x16xf32>
    %30 = tpu.matmul %27, %28, %cst_22 {dimension_numbers = #tpu.dot_dimension_numbers<[1], [1], [0], [0], [0, 0, 1, 0], [], []>} : vector<16x128xbf16>, vector<16x128xbf16>, vector<16x16xf32> -> vector<16x16xf32>
    %cst_23 = arith.constant dense<0xFF800000> : vector<16xf32>
    %31 = vector.multi_reduction <maximumf>, %30, %cst_23 [1] : vector<16x16xf32> to vector<16xf32>
    %32 = vector.shape_cast %31 : vector<16xf32> to vector<16x1xf32>
    %33 = vector.broadcast %32 : vector<16x1xf32> to vector<16x16xf32>
    %34 = arith.subf %30, %33 : vector<16x16xf32>
    %35 = math.exp %34 : vector<16x16xf32>
    %cst_24 = arith.constant dense<0.000000e+00> : vector<16xf32>
    %36 = vector.multi_reduction <add>, %35, %cst_24 [1] : vector<16x16xf32> to vector<16xf32>
    %37 = vector.shape_cast %36 : vector<16xf32> to vector<16x1xf32>
    %38 = tpu.reciprocal %37 {approx = true} : vector<16x1xf32> -> vector<16x1xf32>
    %39 = vector.broadcast %38 : vector<16x1xf32> to vector<16x16xf32>
    %40 = arith.mulf %35, %39 : vector<16x16xf32>
    %41 = arith.truncf %40 : vector<16x16xf32> to vector<16x16xbf16>
    %cst_25 = arith.constant dense<0.000000e+00> : vector<16x128xf32>
    %42 = tpu.matmul %41, %29, %cst_25 {dimension_numbers = #tpu.dot_dimension_numbers<[1], [0], [0], [1], [0, 0, 1, 1], [], []>} : vector<16x16xbf16>, vector<16x128xbf16>, vector<16x128xf32> -> vector<16x128xf32>
    %c0_26 = arith.constant 0 : index
    %c0_27 = arith.constant 0 : index
    %43 = vector.load %arg18[%c0_26, %c0_27] : memref<16x1024xf32, #tpu.memory_space<vmem>>, vector<16x128xf32>
    tpu.vector_store %arg18[%c0_26, %c0_27], %42 {strides = array<i32>} : memref<16x1024xf32, #tpu.memory_space<vmem>>, vector<16x128xf32>,
    %44 = vector.extract_strided_slice %14 {offsets = [0, 128], sizes = [16, 128], strides = [1, 1]} : vector<16x1024xbf16> to vector<16x128xbf16>
    %45 = vector.extract_strided_slice %20 {offsets = [0, 128], sizes = [16, 128], strides = [1, 1]} : vector<16x1024xbf16> to vector<16x128xbf16>
    %46 = vector.extract_strided_slice %26 {offsets = [0, 128], sizes = [16, 128], strides = [1, 1]} : vector<16x1024xbf16> to vector<16x128xbf16>
    %cst_28 = arith.constant dense<0.000000e+00> : vector<16x16xf32>
    %47 = tpu.matmul %44, %45, %cst_28 {dimension_numbers = #tpu.dot_dimension_numbers<[1], [1], [0], [0], [0, 0, 1, 0], [], []>} : vector<16x128xbf16>, vector<16x128xbf16>, vector<16x16xf32> -> vector<16x16xf32>
    %cst_29 = arith.constant dense<0xFF800000> : vector<16xf32>
    %48 = vector.multi_reduction <maximumf>, %47, %cst_29 [1] : vector<16x16xf32> to vector<16xf32>
    %49 = vector.shape_cast %48 : vector<16xf32> to vector<16x1xf32>
    %50 = vector.broadcast %49 : vector<16x1xf32> to vector<16x16xf32>
    %51 = arith.subf %47, %50 : vector<16x16xf32>
    %52 = math.exp %51 : vector<16x16xf32>
    %cst_30 = arith.constant dense<0.000000e+00> : vector<16xf32>
    %53 = vector.multi_reduction <add>, %52, %cst_30 [1] : vector<16x16xf32> to vector<16xf32>
    %54 = vector.shape_cast %53 : vector<16xf32> to vector<16x1xf32>
    %55 = tpu.reciprocal %54 {approx = true} : vector<16x1xf32> -> vector<16x1xf32>
    %56 = vector.broadcast %55 : vector<16x1xf32> to vector<16x16xf32>
    %57 = arith.mulf %52, %56 : vector<16x16xf32>
    %58 = arith.truncf %57 : vector<16x16xf32> to vector<16x16xbf16>
    %cst_31 = arith.constant dense<0.000000e+00> : vector<16x128xf32>
    %59 = tpu.matmul %58, %46, %cst_31 {dimension_numbers = #tpu.dot_dimension_numbers<[1], [0], [0], [1], [0, 0, 1, 1], [], []>} : vector<16x16xbf16>, vector<16x128xbf16>, vector<16x128xf32> -> vector<16x128xf32>
    %c0_32 = arith.constant 0 : index
    %c128 = arith.constant 128 : index
    %60 = vector.load %arg18[%c0_32, %c128] : memref<16x1024xf32, #tpu.memory_space<vmem>>, vector<16x128xf32>
    tpu.vector_store %arg18[%c0_32, %c128], %59 {strides = array<i32>} : memref<16x1024xf32, #tpu.memory_space<vmem>>, vector<16x128xf32>,
    %61 = vector.extract_strided_slice %14 {offsets = [0, 256], sizes = [16, 128], strides = [1, 1]} : vector<16x1024xbf16> to vector<16x128xbf16>
    %62 = vector.extract_strided_slice %20 {offsets = [0, 256], sizes = [16, 128], strides = [1, 1]} : vector<16x1024xbf16> to vector<16x128xbf16>
    %63 = vector.extract_strided_slice %26 {offsets = [0, 256], sizes = [16, 128], strides = [1, 1]} : vector<16x1024xbf16> to vector<16x128xbf16>
    %cst_33 = arith.constant dense<0.000000e+00> : vector<16x16xf32>
    %64 = tpu.matmul %61, %62, %cst_33 {dimension_numbers = #tpu.dot_dimension_numbers<[1], [1], [0], [0], [0, 0, 1, 0], [], []>} : vector<16x128xbf16>, vector<16x128xbf16>, vector<16x16xf32> -> vector<16x16xf32>
    %cst_34 = arith.constant dense<0xFF800000> : vector<16xf32>
    %65 = vector.multi_reduction <maximumf>, %64, %cst_34 [1] : vector<16x16xf32> to vector<16xf32>
    %66 = vector.shape_cast %65 : vector<16xf32> to vector<16x1xf32>
    %67 = vector.broadcast %66 : vector<16x1xf32> to vector<16x16xf32>
    %68 = arith.subf %64, %67 : vector<16x16xf32>
    %69 = math.exp %68 : vector<16x16xf32>
    %cst_35 = arith.constant dense<0.000000e+00> : vector<16xf32>
    %70 = vector.multi_reduction <add>, %69, %cst_35 [1] : vector<16x16xf32> to vector<16xf32>
    %71 = vector.shape_cast %70 : vector<16xf32> to vector<16x1xf32>
    %72 = tpu.reciprocal %71 {approx = true} : vector<16x1xf32> -> vector<16x1xf32>
    %73 = vector.broadcast %72 : vector<16x1xf32> to vector<16x16xf32>
    %74 = arith.mulf %69, %73 : vector<16x16xf32>
    %75 = arith.truncf %74 : vector<16x16xf32> to vector<16x16xbf16>
    %cst_36 = arith.constant dense<0.000000e+00> : vector<16x128xf32>
    %76 = tpu.matmul %75, %63, %cst_36 {dimension_numbers = #tpu.dot_dimension_numbers<[1], [0], [0], [1], [0, 0, 1, 1], [], []>} : vector<16x16xbf16>, vector<16x128xbf16>, vector<16x128xf32> -> vector<16x128xf32>
    %c0_37 = arith.constant 0 : index
    %c256 = arith.constant 256 : index
    %77 = vector.load %arg18[%c0_37, %c256] : memref<16x1024xf32, #tpu.memory_space<vmem>>, vector<16x128xf32>
    tpu.vector_store %arg18[%c0_37, %c256], %76 {strides = array<i32>} : memref<16x1024xf32, #tpu.memory_space<vmem>>, vector<16x128xf32>,
    %78 = vector.extract_strided_slice %14 {offsets = [0, 384], sizes = [16, 128], strides = [1, 1]} : vector<16x1024xbf16> to vector<16x128xbf16>
    %79 = vector.extract_strided_slice %20 {offsets = [0, 384], sizes = [16, 128], strides = [1, 1]} : vector<16x1024xbf16> to vector<16x128xbf16>
    %80 = vector.extract_strided_slice %26 {offsets = [0, 384], sizes = [16, 128], strides = [1, 1]} : vector<16x1024xbf16> to vector<16x128xbf16>
    %cst_38 = arith.constant dense<0.000000e+00> : vector<16x16xf32>
    %81 = tpu.matmul %78, %79, %cst_38 {dimension_numbers = #tpu.dot_dimension_numbers<[1], [1], [0], [0], [0, 0, 1, 0], [], []>} : vector<16x128xbf16>, vector<16x128xbf16>, vector<16x16xf32> -> vector<16x16xf32>
    %cst_39 = arith.constant dense<0xFF800000> : vector<16xf32>
    %82 = vector.multi_reduction <maximumf>, %81, %cst_39 [1] : vector<16x16xf32> to vector<16xf32>
    %83 = vector.shape_cast %82 : vector<16xf32> to vector<16x1xf32>
    %84 = vector.broadcast %83 : vector<16x1xf32> to vector<16x16xf32>
    %85 = arith.subf %81, %84 : vector<16x16xf32>
    %86 = math.exp %85 : vector<16x16xf32>
    %cst_40 = arith.constant dense<0.000000e+00> : vector<16xf32>
    %87 = vector.multi_reduction <add>, %86, %cst_40 [1] : vector<16x16xf32> to vector<16xf32>
    %88 = vector.shape_cast %87 : vector<16xf32> to vector<16x1xf32>
    %89 = tpu.reciprocal %88 {approx = true} : vector<16x1xf32> -> vector<16x1xf32>
    %90 = vector.broadcast %89 : vector<16x1xf32> to vector<16x16xf32>
    %91 = arith.mulf %86, %90 : vector<16x16xf32>
    %92 = arith.truncf %91 : vector<16x16xf32> to vector<16x16xbf16>
    %cst_41 = arith.constant dense<0.000000e+00> : vector<16x128xf32>
    %93 = tpu.matmul %92, %80, %cst_41 {dimension_numbers = #tpu.dot_dimension_numbers<[1], [0], [0], [1], [0, 0, 1, 1], [], []>} : vector<16x16xbf16>, vector<16x128xbf16>, vector<16x128xf32> -> vector<16x128xf32>
    %c0_42 = arith.constant 0 : index
    %c384 = arith.constant 384 : index
    %94 = vector.load %arg18[%c0_42, %c384] : memref<16x1024xf32, #tpu.memory_space<vmem>>, vector<16x128xf32>
    tpu.vector_store %arg18[%c0_42, %c384], %93 {strides = array<i32>} : memref<16x1024xf32, #tpu.memory_space<vmem>>, vector<16x128xf32>,
    %95 = vector.extract_strided_slice %14 {offsets = [0, 512], sizes = [16, 128], strides = [1, 1]} : vector<16x1024xbf16> to vector<16x128xbf16>
    %96 = vector.extract_strided_slice %20 {offsets = [0, 512], sizes = [16, 128], strides = [1, 1]} : vector<16x1024xbf16> to vector<16x128xbf16>
    %97 = vector.extract_strided_slice %26 {offsets = [0, 512], sizes = [16, 128], strides = [1, 1]} : vector<16x1024xbf16> to vector<16x128xbf16>
    %cst_43 = arith.constant dense<0.000000e+00> : vector<16x16xf32>
    %98 = tpu.matmul %95, %96, %cst_43 {dimension_numbers = #tpu.dot_dimension_numbers<[1], [1], [0], [0], [0, 0, 1, 0], [], []>} : vector<16x128xbf16>, vector<16x128xbf16>, vector<16x16xf32> -> vector<16x16xf32>
    %cst_44 = arith.constant dense<0xFF800000> : vector<16xf32>
    %99 = vector.multi_reduction <maximumf>, %98, %cst_44 [1] : vector<16x16xf32> to vector<16xf32>
    %100 = vector.shape_cast %99 : vector<16xf32> to vector<16x1xf32>
    %101 = vector.broadcast %100 : vector<16x1xf32> to vector<16x16xf32>
    %102 = arith.subf %98, %101 : vector<16x16xf32>
    %103 = math.exp %102 : vector<16x16xf32>
    %cst_45 = arith.constant dense<0.000000e+00> : vector<16xf32>
    %104 = vector.multi_reduction <add>, %103, %cst_45 [1] : vector<16x16xf32> to vector<16xf32>
    %105 = vector.shape_cast %104 : vector<16xf32> to vector<16x1xf32>
    %106 = tpu.reciprocal %105 {approx = true} : vector<16x1xf32> -> vector<16x1xf32>
    %107 = vector.broadcast %106 : vector<16x1xf32> to vector<16x16xf32>
    %108 = arith.mulf %103, %107 : vector<16x16xf32>
    %109 = arith.truncf %108 : vector<16x16xf32> to vector<16x16xbf16>
    %cst_46 = arith.constant dense<0.000000e+00> : vector<16x128xf32>
    %110 = tpu.matmul %109, %97, %cst_46 {dimension_numbers = #tpu.dot_dimension_numbers<[1], [0], [0], [1], [0, 0, 1, 1], [], []>} : vector<16x16xbf16>, vector<16x128xbf16>, vector<16x128xf32> -> vector<16x128xf32>
    %c0_47 = arith.constant 0 : index
    %c512 = arith.constant 512 : index
    %111 = vector.load %arg18[%c0_47, %c512] : memref<16x1024xf32, #tpu.memory_space<vmem>>, vector<16x128xf32>
    tpu.vector_store %arg18[%c0_47, %c512], %110 {strides = array<i32>} : memref<16x1024xf32, #tpu.memory_space<vmem>>, vector<16x128xf32>,
    %112 = vector.extract_strided_slice %14 {offsets = [0, 640], sizes = [16, 128], strides = [1, 1]} : vector<16x1024xbf16> to vector<16x128xbf16>
    %113 = vector.extract_strided_slice %20 {offsets = [0, 640], sizes = [16, 128], strides = [1, 1]} : vector<16x1024xbf16> to vector<16x128xbf16>
    %114 = vector.extract_strided_slice %26 {offsets = [0, 640], sizes = [16, 128], strides = [1, 1]} : vector<16x1024xbf16> to vector<16x128xbf16>
    %cst_48 = arith.constant dense<0.000000e+00> : vector<16x16xf32>
    %115 = tpu.matmul %112, %113, %cst_48 {dimension_numbers = #tpu.dot_dimension_numbers<[1], [1], [0], [0], [0, 0, 1, 0], [], []>} : vector<16x128xbf16>, vector<16x128xbf16>, vector<16x16xf32> -> vector<16x16xf32>
    %cst_49 = arith.constant dense<0xFF800000> : vector<16xf32>
    %116 = vector.multi_reduction <maximumf>, %115, %cst_49 [1] : vector<16x16xf32> to vector<16xf32>
    %117 = vector.shape_cast %116 : vector<16xf32> to vector<16x1xf32>
    %118 = vector.broadcast %117 : vector<16x1xf32> to vector<16x16xf32>
    %119 = arith.subf %115, %118 : vector<16x16xf32>
    %120 = math.exp %119 : vector<16x16xf32>
    %cst_50 = arith.constant dense<0.000000e+00> : vector<16xf32>
    %121 = vector.multi_reduction <add>, %120, %cst_50 [1] : vector<16x16xf32> to vector<16xf32>
    %122 = vector.shape_cast %121 : vector<16xf32> to vector<16x1xf32>
    %123 = tpu.reciprocal %122 {approx = true} : vector<16x1xf32> -> vector<16x1xf32>
    %124 = vector.broadcast %123 : vector<16x1xf32> to vector<16x16xf32>
    %125 = arith.mulf %120, %124 : vector<16x16xf32>
    %126 = arith.truncf %125 : vector<16x16xf32> to vector<16x16xbf16>
    %cst_51 = arith.constant dense<0.000000e+00> : vector<16x128xf32>
    %127 = tpu.matmul %126, %114, %cst_51 {dimension_numbers = #tpu.dot_dimension_numbers<[1], [0], [0], [1], [0, 0, 1, 1], [], []>} : vector<16x16xbf16>, vector<16x128xbf16>, vector<16x128xf32> -> vector<16x128xf32>
    %c0_52 = arith.constant 0 : index
    %c640 = arith.constant 640 : index
    %128 = vector.load %arg18[%c0_52, %c640] : memref<16x1024xf32, #tpu.memory_space<vmem>>, vector<16x128xf32>
    tpu.vector_store %arg18[%c0_52, %c640], %127 {strides = array<i32>} : memref<16x1024xf32, #tpu.memory_space<vmem>>, vector<16x128xf32>,
    %129 = vector.extract_strided_slice %14 {offsets = [0, 768], sizes = [16, 128], strides = [1, 1]} : vector<16x1024xbf16> to vector<16x128xbf16>
    %130 = vector.extract_strided_slice %20 {offsets = [0, 768], sizes = [16, 128], strides = [1, 1]} : vector<16x1024xbf16> to vector<16x128xbf16>
    %131 = vector.extract_strided_slice %26 {offsets = [0, 768], sizes = [16, 128], strides = [1, 1]} : vector<16x1024xbf16> to vector<16x128xbf16>
    %cst_53 = arith.constant dense<0.000000e+00> : vector<16x16xf32>
    %132 = tpu.matmul %129, %130, %cst_53 {dimension_numbers = #tpu.dot_dimension_numbers<[1], [1], [0], [0], [0, 0, 1, 0], [], []>} : vector<16x128xbf16>, vector<16x128xbf16>, vector<16x16xf32> -> vector<16x16xf32>
    %cst_54 = arith.constant dense<0xFF800000> : vector<16xf32>
    %133 = vector.multi_reduction <maximumf>, %132, %cst_54 [1] : vector<16x16xf32> to vector<16xf32>
    %134 = vector.shape_cast %133 : vector<16xf32> to vector<16x1xf32>
    %135 = vector.broadcast %134 : vector<16x1xf32> to vector<16x16xf32>
    %136 = arith.subf %132, %135 : vector<16x16xf32>
    %137 = math.exp %136 : vector<16x16xf32>
    %cst_55 = arith.constant dense<0.000000e+00> : vector<16xf32>
    %138 = vector.multi_reduction <add>, %137, %cst_55 [1] : vector<16x16xf32> to vector<16xf32>
    %139 = vector.shape_cast %138 : vector<16xf32> to vector<16x1xf32>
    %140 = tpu.reciprocal %139 {approx = true} : vector<16x1xf32> -> vector<16x1xf32>
    %141 = vector.broadcast %140 : vector<16x1xf32> to vector<16x16xf32>
    %142 = arith.mulf %137, %141 : vector<16x16xf32>
    %143 = arith.truncf %142 : vector<16x16xf32> to vector<16x16xbf16>
    %cst_56 = arith.constant dense<0.000000e+00> : vector<16x128xf32>
    %144 = tpu.matmul %143, %131, %cst_56 {dimension_numbers = #tpu.dot_dimension_numbers<[1], [0], [0], [1], [0, 0, 1, 1], [], []>} : vector<16x16xbf16>, vector<16x128xbf16>, vector<16x128xf32> -> vector<16x128xf32>
    %c0_57 = arith.constant 0 : index
    %c768 = arith.constant 768 : index
    %145 = vector.load %arg18[%c0_57, %c768] : memref<16x1024xf32, #tpu.memory_space<vmem>>, vector<16x128xf32>
    tpu.vector_store %arg18[%c0_57, %c768], %144 {strides = array<i32>} : memref<16x1024xf32, #tpu.memory_space<vmem>>, vector<16x128xf32>,
    %146 = vector.extract_strided_slice %14 {offsets = [0, 896], sizes = [16, 128], strides = [1, 1]} : vector<16x1024xbf16> to vector<16x128xbf16>
    %147 = vector.extract_strided_slice %20 {offsets = [0, 896], sizes = [16, 128], strides = [1, 1]} : vector<16x1024xbf16> to vector<16x128xbf16>
    %148 = vector.extract_strided_slice %26 {offsets = [0, 896], sizes = [16, 128], strides = [1, 1]} : vector<16x1024xbf16> to vector<16x128xbf16>
    %cst_58 = arith.constant dense<0.000000e+00> : vector<16x16xf32>
    %149 = tpu.matmul %146, %147, %cst_58 {dimension_numbers = #tpu.dot_dimension_numbers<[1], [1], [0], [0], [0, 0, 1, 0], [], []>} : vector<16x128xbf16>, vector<16x128xbf16>, vector<16x16xf32> -> vector<16x16xf32>
    %cst_59 = arith.constant dense<0xFF800000> : vector<16xf32>
    %150 = vector.multi_reduction <maximumf>, %149, %cst_59 [1] : vector<16x16xf32> to vector<16xf32>
    %151 = vector.shape_cast %150 : vector<16xf32> to vector<16x1xf32>
    %152 = vector.broadcast %151 : vector<16x1xf32> to vector<16x16xf32>
    %153 = arith.subf %149, %152 : vector<16x16xf32>
    %154 = math.exp %153 : vector<16x16xf32>
    %cst_60 = arith.constant dense<0.000000e+00> : vector<16xf32>
    %155 = vector.multi_reduction <add>, %154, %cst_60 [1] : vector<16x16xf32> to vector<16xf32>
    %156 = vector.shape_cast %155 : vector<16xf32> to vector<16x1xf32>
    %157 = tpu.reciprocal %156 {approx = true} : vector<16x1xf32> -> vector<16x1xf32>
    %158 = vector.broadcast %157 : vector<16x1xf32> to vector<16x16xf32>
    %159 = arith.mulf %154, %158 : vector<16x16xf32>
    %160 = arith.truncf %159 : vector<16x16xf32> to vector<16x16xbf16>
    %cst_61 = arith.constant dense<0.000000e+00> : vector<16x128xf32>
    %161 = tpu.matmul %160, %148, %cst_61 {dimension_numbers = #tpu.dot_dimension_numbers<[1], [0], [0], [1], [0, 0, 1, 1], [], []>} : vector<16x16xbf16>, vector<16x128xbf16>, vector<16x128xf32> -> vector<16x128xf32>
    %c0_62 = arith.constant 0 : index
    %c896 = arith.constant 896 : index
    %162 = vector.load %arg18[%c0_62, %c896] : memref<16x1024xf32, #tpu.memory_space<vmem>>, vector<16x128xf32>
    tpu.vector_store %arg18[%c0_62, %c896], %161 {strides = array<i32>} : memref<16x1024xf32, #tpu.memory_space<vmem>>, vector<16x128xf32>,
    %c0_63 = arith.constant 0 : index
    %c0_64 = arith.constant 0 : index
    %163 = vector.load %arg18[%c0_63, %c0_64] : memref<16x1024xf32, #tpu.memory_space<vmem>>, vector<16x1024xf32>
    %164 = arith.truncf %163 : vector<16x1024xf32> to vector<16x1024xbf16>
    %c0_65 = arith.constant 0 : index
    %c0_66 = arith.constant 0 : index
    %165 = vector.load %arg11[%c0_65, %c0_66] : memref<1024x32xbf16, #tpu.memory_space<vmem>>, vector<1024x32xbf16>
    %cst_67 = arith.constant dense<0.000000e+00> : vector<16x32xf32>
    %166 = tpu.matmul %164, %165, %cst_67 {dimension_numbers = #tpu.dot_dimension_numbers<[1], [0], [0], [1], [0, 0, 1, 1], [], []>} : vector<16x1024xbf16>, vector<1024x32xbf16>, vector<16x32xf32> -> vector<16x32xf32>
    %c0_68 = arith.constant 0 : index
    %c0_69 = arith.constant 0 : index
    %167 = vector.load %arg12[%c0_68, %c0_69] : memref<1x32xf32, #tpu.memory_space<vmem>>, vector<1x32xf32>
    %168 = vector.broadcast %167 : vector<1x32xf32> to vector<16x32xf32>
    %169 = arith.addf %166, %168 : vector<16x32xf32>
    %170 = arith.truncf %169 : vector<16x32xf32> to vector<16x32xbf16>
    %cst_70 = arith.constant 0.000000e+00 : f32
    %171 = vector.broadcast %cst_70 : f32 to vector<16x32xf32>
    %c0_71 = arith.constant 0 : index
    %c0_72 = arith.constant 0 : index
    %172 = vector.load %arg13[%c0_71, %c0_72] : memref<32x128xbf16, #tpu.memory_space<vmem>>, vector<32x128xbf16>
    %cst_73 = arith.constant dense<0.000000e+00> : vector<16x128xf32>
    %173 = tpu.matmul %170, %172, %cst_73 {dimension_numbers = #tpu.dot_dimension_numbers<[1], [0], [0], [1], [0, 0, 1, 1], [], []>} : vector<16x32xbf16>, vector<32x128xbf16>, vector<16x128xf32> -> vector<16x128xf32>
    %c0_74 = arith.constant 0 : index
    %c0_75 = arith.constant 0 : index
    %174 = vector.load %arg14[%c0_74, %c0_75] : memref<1x128xf32, #tpu.memory_space<vmem>>, vector<1x128xf32>
    %175 = vector.broadcast %174 : vector<1x128xf32> to vector<16x128xf32>
    %176 = arith.addf %173, %175 : vector<16x128xf32>
    %cst_76 = arith.constant 0.000000e+00 : f32
    %177 = vector.broadcast %cst_76 : f32 to vector<16x128xf32>
    %178 = arith.maximumf %176, %177 : vector<16x128xf32>
    %179 = arith.truncf %178 : vector<16x128xf32> to vector<16x128xbf16>
    %c0_77 = arith.constant 0 : index
    %c0_78 = arith.constant 0 : index
    %180 = vector.load %arg15[%c0_77, %c0_78] : memref<128x32xbf16, #tpu.memory_space<vmem>>, vector<128x32xbf16>
    %cst_79 = arith.constant dense<0.000000e+00> : vector<16x32xf32>
    %181 = tpu.matmul %179, %180, %cst_79 {dimension_numbers = #tpu.dot_dimension_numbers<[1], [0], [0], [1], [0, 0, 1, 1], [], []>} : vector<16x128xbf16>, vector<128x32xbf16>, vector<16x32xf32> -> vector<16x32xf32>
    %182 = arith.addf %171, %181 : vector<16x32xf32>
    %c0_80 = arith.constant 0 : index
    %c0_81 = arith.constant 0 : index
    %183 = vector.load %arg16[%c0_80, %c0_81] : memref<1x32xf32, #tpu.memory_space<vmem>>, vector<1x32xf32>
    %184 = vector.broadcast %183 : vector<1x32xf32> to vector<16x32xf32>
    %185 = arith.addf %182, %184 : vector<16x32xf32>
    %186 = arith.addf %185, %1 : vector<16x32xf32>
    %c0_82 = arith.constant 0 : index
    %c0_83 = arith.constant 0 : index
    %c0_84 = arith.constant 0 : index
    %187 = vector.load %arg17[%c0_82, %c0_83, %c0_84] : memref<1x16x32xf32, #tpu.memory_space<vmem>>, vector<1x16x32xf32>
    %188 = vector.shape_cast %187 : vector<1x16x32xf32> to vector<16x32xf32>
    %189 = vector.shape_cast %186 : vector<16x32xf32> to vector<1x16x32xf32>
    tpu.vector_store %arg17[%c0_82, %c0_83, %c0_84], %189 {strides = array<i32>} : memref<1x16x32xf32, #tpu.memory_space<vmem>>, vector<1x16x32xf32>,
    return
  }
  func.func @transform_0(%arg0: i32, %arg1: i32) -> (i32, i32, i32) {
    %c0_i32 = arith.constant 0 : i32
    %c0_i32_0 = arith.constant 0 : i32
    return %arg0, %arg1, %c0_i32 : i32, i32, i32
  }
  func.func @transform_1(%arg0: i32, %arg1: i32) -> (i32, i32, i32) {
    %c0_i32 = arith.constant 0 : i32
    %c0_i32_0 = arith.constant 0 : i32
    %c0_i32_1 = arith.constant 0 : i32
    return %arg0, %c0_i32, %c0_i32_0 : i32, i32, i32
  }
  func.func @transform_2(%arg0: i32, %arg1: i32) -> (i32, i32, i32) {
    %c0_i32 = arith.constant 0 : i32
    %c0_i32_0 = arith.constant 0 : i32
    %c0_i32_1 = arith.constant 0 : i32
    return %arg0, %c0_i32, %c0_i32_0 : i32, i32, i32
  }
  func.func @transform_3(%arg0: i32, %arg1: i32) -> (i32, i32) {
    %c0_i32 = arith.constant 0 : i32
    %c0_i32_0 = arith.constant 0 : i32
    %c0_i32_1 = arith.constant 0 : i32
    return %c0_i32, %c0_i32_0 : i32, i32
  }
  func.func @transform_4(%arg0: i32, %arg1: i32) -> (i32, i32) {
    %c0_i32 = arith.constant 0 : i32
    %c0_i32_0 = arith.constant 0 : i32
    %c0_i32_1 = arith.constant 0 : i32
    return %c0_i32, %c0_i32_0 : i32, i32
  }
  func.func @transform_5(%arg0: i32, %arg1: i32) -> (i32, i32) {
    %c0_i32 = arith.constant 0 : i32
    %c0_i32_0 = arith.constant 0 : i32
    %c0_i32_1 = arith.constant 0 : i32
    return %c0_i32, %c0_i32_0 : i32, i32
  }
  func.func @transform_6(%arg0: i32, %arg1: i32) -> (i32, i32) {
    %c0_i32 = arith.constant 0 : i32
    %c0_i32_0 = arith.constant 0 : i32
    %c0_i32_1 = arith.constant 0 : i32
    return %c0_i32, %c0_i32_0 : i32, i32
  }
  func.func @transform_7(%arg0: i32, %arg1: i32) -> (i32, i32) {
    %c0_i32 = arith.constant 0 : i32
    %c0_i32_0 = arith.constant 0 : i32
    %c0_i32_1 = arith.constant 0 : i32
    return %c0_i32, %c0_i32_0 : i32, i32
  }
  func.func @transform_8(%arg0: i32, %arg1: i32) -> (i32, i32) {
    %c0_i32 = arith.constant 0 : i32
    %c0_i32_0 = arith.constant 0 : i32
    %c0_i32_1 = arith.constant 0 : i32
    return %c0_i32, %c0_i32_0 : i32, i32
  }
  func.func @transform_9(%arg0: i32, %arg1: i32) -> (i32, i32) {
    %c0_i32 = arith.constant 0 : i32
    %c0_i32_0 = arith.constant 0 : i32
    %c0_i32_1 = arith.constant 0 : i32
    return %c0_i32, %c0_i32_0 : i32, i32
  }
  func.func @transform_10(%arg0: i32, %arg1: i32) -> (i32, i32) {
    %c0_i32 = arith.constant 0 : i32
    %c0_i32_0 = arith.constant 0 : i32
    %c0_i32_1 = arith.constant 0 : i32
    return %c0_i32, %c0_i32_0 : i32, i32
  }
  func.func @transform_11(%arg0: i32, %arg1: i32) -> (i32, i32) {
    %c0_i32 = arith.constant 0 : i32
    %c0_i32_0 = arith.constant 0 : i32
    %c0_i32_1 = arith.constant 0 : i32
    return %c0_i32, %c0_i32_0 : i32, i32
  }
  func.func @transform_12(%arg0: i32, %arg1: i32) -> (i32, i32) {
    %c0_i32 = arith.constant 0 : i32
    %c0_i32_0 = arith.constant 0 : i32
    %c0_i32_1 = arith.constant 0 : i32
    return %c0_i32, %c0_i32_0 : i32, i32
  }
  func.func @transform_13(%arg0: i32, %arg1: i32) -> (i32, i32) {
    %c0_i32 = arith.constant 0 : i32
    %c0_i32_0 = arith.constant 0 : i32
    %c0_i32_1 = arith.constant 0 : i32
    return %c0_i32, %c0_i32_0 : i32, i32
  }
  func.func @transform_14(%arg0: i32, %arg1: i32) -> (i32, i32) {
    %c0_i32 = arith.constant 0 : i32
    %c0_i32_0 = arith.constant 0 : i32
    %c0_i32_1 = arith.constant 0 : i32
    return %c0_i32, %c0_i32_0 : i32, i32
  }
  func.func @transform_15(%arg0: i32, %arg1: i32) -> (i32, i32, i32) {
    %c0_i32 = arith.constant 0 : i32
    %c0_i32_0 = arith.constant 0 : i32
    return %arg0, %arg1, %c0_i32 : i32, i32, i32
  }
}

</mosaic_0001>

<llo_original>
// kernel: tpu_custom_call.1
$region0: #{tpu_custom_call.1}
  #allocation0 [shape = 'u32[]', space=smem, size = 0x4, offset = 0x4, fixed_abs, tag = 'smem constant byte address 0x4 - core index']
  #allocation1 [shape = 'u32[144,128]{1,0:T(1,128)}', space=vmem, size = 0x12000, scoped, tag = 'internal scratch']
  #allocation2 [shape = 'f32[16,1024]{1,0:T(8,128)}', space=vmem, size = 0x10000, scoped, tag = 'scratch operand']
  %s0 = inlined_call_operand.vmem [shape: f32[2,16,32], index: 0, kind: input, shape index: {}]
  %s1 = inlined_call_operand.vmem [shape: f32[2,16,32], index: 1, kind: input, shape index: {}]
  %s2 = inlined_call_operand.vmem [shape: f32[2,16,32], index: 2, kind: input, shape index: {}]
  %s3 = inlined_call_operand.vmem [shape: bf16[32,1024], index: 3, kind: input, shape index: {}]
  %s4 = inlined_call_operand.vmem [shape: f32[1,1024], index: 4, kind: input, shape index: {}]
  %s5 = inlined_call_operand.vmem [shape: bf16[32,1024], index: 5, kind: input, shape index: {}]
  %s6 = inlined_call_operand.vmem [shape: f32[1,1024], index: 6, kind: input, shape index: {}]
  %s7 = inlined_call_operand.vmem [shape: bf16[32,1024], index: 7, kind: input, shape index: {}]
  %s8 = inlined_call_operand.vmem [shape: f32[1,1024], index: 8, kind: input, shape index: {}]
  %s9 = inlined_call_operand.vmem [shape: bf16[1024,32], index: 9, kind: input, shape index: {}]
  %s10 = inlined_call_operand.vmem [shape: f32[1,32], index: 10, kind: input, shape index: {}]
  %s11 = inlined_call_operand.vmem [shape: bf16[32,128], index: 11, kind: input, shape index: {}]
  %s12 = inlined_call_operand.vmem [shape: f32[1,128], index: 12, kind: input, shape index: {}]
  %s13 = inlined_call_operand.vmem [shape: bf16[128,32], index: 13, kind: input, shape index: {}]
  %s14 = inlined_call_operand.vmem [shape: f32[1,32], index: 14, kind: input, shape index: {}]
  %s15 = inlined_call_operand.hbm [shape: f32[2,16,32], index: 15, kind: output, shape index: {}]
  %s16 = sld [smem:[#allocation0]]
  $region93: #{tpu_custom_call.1} parent=0
    _
  %s18 = ssub.s32 1, %s16
  %s19 = scalar_select 0, %s18, %s16
  $region1: #{tpu_custom_call.1} parent=0
    #allocation3 [shape = 'u8[16384]{0}', space=vmem, size = 0x4000, scoped, tag = 'output window, operand 0']
    #allocation4 [shape = 's32[2]{0}', space=sflag, size = 0x8, scoped, tag = 'scoped memory for tpu_custom_call.1']
    %20 = vsyncpa [#allocation4], 0
    %s21 = scalar_lea.sflag [#allocation4], 1
    %22 = vsyncpa %s21, 0
    loop: start=0, step=1, limit=4
    $region2: #{tpu_custom_call.1} parent=1 // loop_pre_header
      _
    $region3: #{tpu_custom_call.1} parent=1 // loop_header
      %s24 = sphi 0, %s28
      %p25 = scmp.ge.s32.totalorder %s24, 4
      %s31 = sphi 0, %s43
      %s32 = sphi 0, %s39
      %s33 = sphi 0, %s31
      %s34 = sphi 0, %s32
      %s35 = sphi 0, %s33
      %s36 = sphi 0, %s34
      %s48 = sphi 0, %s50
      %s51 = sphi 0, %s48
      %s52 = sphi 0, %s51
      %s68 = sphi 0, %s52
      %s74 = sphi 0, %s76
      %s77 = sphi 0, %s74
      %s78 = sphi 0, %s77
      %s94 = sphi 0, %s78
      %s100 = sphi 0, %s102
      %s103 = sphi 0, %s100
      %s104 = sphi 0, %s103
      %s120 = sphi 0, %s104
      %s124 = sphi 0, %s124
      %s126 = sphi 0, %s124
      %s127 = sphi 0, %s126
      %s141 = sphi 0, %s127
      %s145 = sphi 0, %s145
      %s147 = sphi 0, %s145
      %s148 = sphi 0, %s147
      %s162 = sphi 0, %s148
      %s166 = sphi 0, %s166
      %s168 = sphi 0, %s166
      %s169 = sphi 0, %s168
      %s183 = sphi 0, %s169
      %s187 = sphi 0, %s187
      %s189 = sphi 0, %s187
      %s190 = sphi 0, %s189
      %s204 = sphi 0, %s190
      %s208 = sphi 0, %s208
      %s210 = sphi 0, %s208
      %s211 = sphi 0, %s210
      %s225 = sphi 0, %s211
      %s229 = sphi 0, %s229
      %s231 = sphi 0, %s229
      %s232 = sphi 0, %s231
      %s246 = sphi 0, %s232
      %s250 = sphi 0, %s250
      %s252 = sphi 0, %s250
      %s253 = sphi 0, %s252
      %s267 = sphi 0, %s253
      %s271 = sphi 0, %s271
      %s273 = sphi 0, %s271
      %s274 = sphi 0, %s273
      %s288 = sphi 0, %s274
      %s292 = sphi 0, %s292
      %s294 = sphi 0, %s292
      %s295 = sphi 0, %s294
      %s309 = sphi 0, %s295
      %s313 = sphi 0, %s313
      %s315 = sphi 0, %s313
      %s316 = sphi 0, %s315
      %s330 = sphi 0, %s316
      %s334 = sphi 0, %s334
      %s336 = sphi 0, %s334
      %s337 = sphi 0, %s336
      %s351 = sphi 0, %s337
      %s355 = sphi 0, %s355
      %s357 = sphi 0, %s355
      %s358 = sphi 0, %s357
      %s372 = sphi 0, %s358
      %s380 = sphi 0, %s382
      %s383 = sphi 0, %s380
      %s384 = sphi 0, %s383
      %s400 = sphi 0, %s384
    $region4: #{tpu_custom_call.1} parent=1 // loop_header_branch
      %27 = sbr.rel (%p25) target = $region8
    $region5: #{tpu_custom_call.1} parent=1 // loop_body
      %s29 = ssub.s32 %s24, 1
      %s30 = ssub.s32 %s24, 2
      %s37 = sadd.s32 1, %s32
      %p38 = scmp.ge.s32.totalorder %s37, 1
      %s39 = scalar_select %p38, 0, %s37
      %s40 = sadd.s32 1, %s31
      %s41 = scalar_select %p38, %s40, %s31
      %p42 = scmp.ge.s32.totalorder %s41, 2
      %s43 = scalar_select %p42, 0, %s41
      %s44 = ssub.s32 %s31, %s43
      %s45 = ssub.s32 %s32, %s39
      %s46 = sor.u32 %s44, %s45
      %p47 = scmp.eq.s32.totalorder %s46, 0
      %s49 = sadd.s32 %s48, 1
      %s50 = scalar_select %p47, %s48, %s49
      %p53 = pneg %p47
      %p54 = scmp.eq.s32.totalorder %s24, 1
      %p55 = por %p53, %p54
      %p56 = scmp.ne.s32.totalorder %s48, %s51
      %p57 = scmp.eq.s32.totalorder %s24, 0
      %p58 = por %p56, %p57
      %p59 = scmp.ne.s32.totalorder %s48, %s51
      %p60 = scmp.eq.s32.totalorder %s29, 1
      %p61 = por %p59, %p60
      %p62 = scmp.ne.s32.totalorder %s51, %s52
      %p63 = scmp.eq.s32.totalorder %s29, 0
      %p64 = por %p62, %p63
      %p65 = scmp.ne.s32.totalorder %s51, %s52
      %p66 = scmp.eq.s32.totalorder %s30, 1
      %p67 = por %p65, %p66
      %p69 = scmp.ne.s32.totalorder %s52, %s68
      %p70 = scmp.eq.s32.totalorder %s30, 0
      %p71 = por %p69, %p70
      %s72 = ssub.s32 %s31, %s43
      %p73 = scmp.eq.s32.totalorder %s72, 0
      %s75 = sadd.s32 %s74, 1
      %s76 = scalar_select %p73, %s74, %s75
      %p79 = pneg %p73
      %p80 = scmp.eq.s32.totalorder %s24, 1
      %p81 = por %p79, %p80
      %p82 = scmp.ne.s32.totalorder %s74, %s77
      %p83 = scmp.eq.s32.totalorder %s24, 0
      %p84 = por %p82, %p83
      %p85 = scmp.ne.s32.totalorder %s74, %s77
      %p86 = scmp.eq.s32.totalorder %s29, 1
      %p87 = por %p85, %p86
      %p88 = scmp.ne.s32.totalorder %s77, %s78
      %p89 = scmp.eq.s32.totalorder %s29, 0
      %p90 = por %p88, %p89
      %p91 = scmp.ne.s32.totalorder %s77, %s78
      %p92 = scmp.eq.s32.totalorder %s30, 1
      %p93 = por %p91, %p92
      %p95 = scmp.ne.s32.totalorder %s78, %s94
      %p96 = scmp.eq.s32.totalorder %s30, 0
      %p97 = por %p95, %p96
      %s98 = ssub.s32 %s31, %s43
      %p99 = scmp.eq.s32.totalorder %s98, 0
      %s101 = sadd.s32 %s100, 1
      %s102 = scalar_select %p99, %s100, %s101
      %p105 = pneg %p99
      %p106 = scmp.eq.s32.totalorder %s24, 1
      %p107 = por %p105, %p106
      %p108 = scmp.ne.s32.totalorder %s100, %s103
      %p109 = scmp.eq.s32.totalorder %s24, 0
      %p110 = por %p108, %p109
      %p111 = scmp.ne.s32.totalorder %s100, %s103
      %p112 = scmp.eq.s32.totalorder %s29, 1
      %p113 = por %p111, %p112
      %p114 = scmp.ne.s32.totalorder %s103, %s104
      %p115 = scmp.eq.s32.totalorder %s29, 0
      %p116 = por %p114, %p115
      %p117 = scmp.ne.s32.totalorder %s103, %s104
      %p118 = scmp.eq.s32.totalorder %s30, 1
      %p119 = por %p117, %p118
      %p121 = scmp.ne.s32.totalorder %s104, %s120
      %p122 = scmp.eq.s32.totalorder %s30, 0
      %p123 = por %p121, %p122
      %s125 = sadd.s32 %s124, 1
      %p128 = scmp.eq.s32.totalorder %s24, 1
      %p129 = scmp.ne.s32.totalorder %s124, %s126
      %p130 = scmp.eq.s32.totalorder %s24, 0
      %p131 = por %p129, %p130
      %p132 = scmp.ne.s32.totalorder %s124, %s126
      %p133 = scmp.eq.s32.totalorder %s29, 1
      %p134 = por %p132, %p133
      %p135 = scmp.ne.s32.totalorder %s126, %s127
      %p136 = scmp.eq.s32.totalorder %s29, 0
      %p137 = por %p135, %p136
      %p138 = scmp.ne.s32.totalorder %s126, %s127
      %p139 = scmp.eq.s32.totalorder %s30, 1
      %p140 = por %p138, %p139
      %p142 = scmp.ne.s32.totalorder %s127, %s141
      %p143 = scmp.eq.s32.totalorder %s30, 0
      %p144 = por %p142, %p143
      %s146 = sadd.s32 %s145, 1
      %p149 = scmp.eq.s32.totalorder %s24, 1
      %p150 = scmp.ne.s32.totalorder %s145, %s147
      %p151 = scmp.eq.s32.totalorder %s24, 0
      %p152 = por %p150, %p151
      %p153 = scmp.ne.s32.totalorder %s145, %s147
      %p154 = scmp.eq.s32.totalorder %s29, 1
      %p155 = por %p153, %p154
      %p156 = scmp.ne.s32.totalorder %s147, %s148
      %p157 = scmp.eq.s32.totalorder %s29, 0
      %p158 = por %p156, %p157
      %p159 = scmp.ne.s32.totalorder %s147, %s148
      %p160 = scmp.eq.s32.totalorder %s30, 1
      %p161 = por %p159, %p160
      %p163 = scmp.ne.s32.totalorder %s148, %s162
      %p164 = scmp.eq.s32.totalorder %s30, 0
      %p165 = por %p163, %p164
      %s167 = sadd.s32 %s166, 1
      %p170 = scmp.eq.s32.totalorder %s24, 1
      %p171 = scmp.ne.s32.totalorder %s166, %s168
      %p172 = scmp.eq.s32.totalorder %s24, 0
      %p173 = por %p171, %p172
      %p174 = scmp.ne.s32.totalorder %s166, %s168
      %p175 = scmp.eq.s32.totalorder %s29, 1
      %p176 = por %p174, %p175
      %p177 = scmp.ne.s32.totalorder %s168, %s169
      %p178 = scmp.eq.s32.totalorder %s29, 0
      %p179 = por %p177, %p178
      %p180 = scmp.ne.s32.totalorder %s168, %s169
      %p181 = scmp.eq.s32.totalorder %s30, 1
      %p182 = por %p180, %p181
      %p184 = scmp.ne.s32.totalorder %s169, %s183
      %p185 = scmp.eq.s32.totalorder %s30, 0
      %p186 = por %p184, %p185
      %s188 = sadd.s32 %s187, 1
      %p191 = scmp.eq.s32.totalorder %s24, 1
      %p192 = scmp.ne.s32.totalorder %s187, %s189
      %p193 = scmp.eq.s32.totalorder %s24, 0
      %p194 = por %p192, %p193
      %p195 = scmp.ne.s32.totalorder %s187, %s189
      %p196 = scmp.eq.s32.totalorder %s29, 1
      %p197 = por %p195, %p196
      %p198 = scmp.ne.s32.totalorder %s189, %s190
      %p199 = scmp.eq.s32.totalorder %s29, 0
      %p200 = por %p198, %p199
      %p201 = scmp.ne.s32.totalorder %s189, %s190
      %p202 = scmp.eq.s32.totalorder %s30, 1
      %p203 = por %p201, %p202
      %p205 = scmp.ne.s32.totalorder %s190, %s204
      %p206 = scmp.eq.s32.totalorder %s30, 0
      %p207 = por %p205, %p206
      %s209 = sadd.s32 %s208, 1
      %p212 = scmp.eq.s32.totalorder %s24, 1
      %p213 = scmp.ne.s32.totalorder %s208, %s210
      %p214 = scmp.eq.s32.totalorder %s24, 0
      %p215 = por %p213, %p214
      %p216 = scmp.ne.s32.totalorder %s208, %s210
      %p217 = scmp.eq.s32.totalorder %s29, 1
      %p218 = por %p216, %p217
      %p219 = scmp.ne.s32.totalorder %s210, %s211
      %p220 = scmp.eq.s32.totalorder %s29, 0
      %p221 = por %p219, %p220
      %p222 = scmp.ne.s32.totalorder %s210, %s211
      %p223 = scmp.eq.s32.totalorder %s30, 1
      %p224 = por %p222, %p223
      %p226 = scmp.ne.s32.totalorder %s211, %s225
      %p227 = scmp.eq.s32.totalorder %s30, 0
      %p228 = por %p226, %p227
      %s230 = sadd.s32 %s229, 1
      %p233 = scmp.eq.s32.totalorder %s24, 1
      %p234 = scmp.ne.s32.totalorder %s229, %s231
      %p235 = scmp.eq.s32.totalorder %s24, 0
      %p236 = por %p234, %p235
      %p237 = scmp.ne.s32.totalorder %s229, %s231
      %p238 = scmp.eq.s32.totalorder %s29, 1
      %p239 = por %p237, %p238
      %p240 = scmp.ne.s32.totalorder %s231, %s232
      %p241 = scmp.eq.s32.totalorder %s29, 0
      %p242 = por %p240, %p241
      %p243 = scmp.ne.s32.totalorder %s231, %s232
      %p244 = scmp.eq.s32.totalorder %s30, 1
      %p245 = por %p243, %p244
      %p247 = scmp.ne.s32.totalorder %s232, %s246
      %p248 = scmp.eq.s32.totalorder %s30, 0
      %p249 = por %p247, %p248
      %s251 = sadd.s32 %s250, 1
      %p254 = scmp.eq.s32.totalorder %s24, 1
      %p255 = scmp.ne.s32.totalorder %s250, %s252
      %p256 = scmp.eq.s32.totalorder %s24, 0
      %p257 = por %p255, %p256
      %p258 = scmp.ne.s32.totalorder %s250, %s252
      %p259 = scmp.eq.s32.totalorder %s29, 1
      %p260 = por %p258, %p259
      %p261 = scmp.ne.s32.totalorder %s252, %s253
      %p262 = scmp.eq.s32.totalorder %s29, 0
      %p263 = por %p261, %p262
      %p264 = scmp.ne.s32.totalorder %s252, %s253
      %p265 = scmp.eq.s32.totalorder %s30, 1
      %p266 = por %p264, %p265
      %p268 = scmp.ne.s32.totalorder %s253, %s267
      %p269 = scmp.eq.s32.totalorder %s30, 0
      %p270 = por %p268, %p269
      %s272 = sadd.s32 %s271, 1
      %p275 = scmp.eq.s32.totalorder %s24, 1
      %p276 = scmp.ne.s32.totalorder %s271, %s273
      %p277 = scmp.eq.s32.totalorder %s24, 0
      %p278 = por %p276, %p277
      %p279 = scmp.ne.s32.totalorder %s271, %s273
      %p280 = scmp.eq.s32.totalorder %s29, 1
      %p281 = por %p279, %p280
      %p282 = scmp.ne.s32.totalorder %s273, %s274
      %p283 = scmp.eq.s32.totalorder %s29, 0
      %p284 = por %p282, %p283
      %p285 = scmp.ne.s32.totalorder %s273, %s274
      %p286 = scmp.eq.s32.totalorder %s30, 1
      %p287 = por %p285, %p286
      %p289 = scmp.ne.s32.totalorder %s274, %s288
      %p290 = scmp.eq.s32.totalorder %s30, 0
      %p291 = por %p289, %p290
      %s293 = sadd.s32 %s292, 1
      %p296 = scmp.eq.s32.totalorder %s24, 1
      %p297 = scmp.ne.s32.totalorder %s292, %s294
      %p298 = scmp.eq.s32.totalorder %s24, 0
      %p299 = por %p297, %p298
      %p300 = scmp.ne.s32.totalorder %s292, %s294
      %p301 = scmp.eq.s32.totalorder %s29, 1
      %p302 = por %p300, %p301
      %p303 = scmp.ne.s32.totalorder %s294, %s295
      %p304 = scmp.eq.s32.totalorder %s29, 0
      %p305 = por %p303, %p304
      %p306 = scmp.ne.s32.totalorder %s294, %s295
      %p307 = scmp.eq.s32.totalorder %s30, 1
      %p308 = por %p306, %p307
      %p310 = scmp.ne.s32.totalorder %s295, %s309
      %p311 = scmp.eq.s32.totalorder %s30, 0
      %p312 = por %p310, %p311
      %s314 = sadd.s32 %s313, 1
      %p317 = scmp.eq.s32.totalorder %s24, 1
      %p318 = scmp.ne.s32.totalorder %s313, %s315
      %p319 = scmp.eq.s32.totalorder %s24, 0
      %p320 = por %p318, %p319
      %p321 = scmp.ne.s32.totalorder %s313, %s315
      %p322 = scmp.eq.s32.totalorder %s29, 1
      %p323 = por %p321, %p322
      %p324 = scmp.ne.s32.totalorder %s315, %s316
      %p325 = scmp.eq.s32.totalorder %s29, 0
      %p326 = por %p324, %p325
      %p327 = scmp.ne.s32.totalorder %s315, %s316
      %p328 = scmp.eq.s32.totalorder %s30, 1
      %p329 = por %p327, %p328
      %p331 = scmp.ne.s32.totalorder %s316, %s330
      %p332 = scmp.eq.s32.totalorder %s30, 0
      %p333 = por %p331, %p332
      %s335 = sadd.s32 %s334, 1
      %p338 = scmp.eq.s32.totalorder %s24, 1
      %p339 = scmp.ne.s32.totalorder %s334, %s336
      %p340 = scmp.eq.s32.totalorder %s24, 0
      %p341 = por %p339, %p340
      %p342 = scmp.ne.s32.totalorder %s334, %s336
      %p343 = scmp.eq.s32.totalorder %s29, 1
      %p344 = por %p342, %p343
      %p345 = scmp.ne.s32.totalorder %s336, %s337
      %p346 = scmp.eq.s32.totalorder %s29, 0
      %p347 = por %p345, %p346
      %p348 = scmp.ne.s32.totalorder %s336, %s337
      %p349 = scmp.eq.s32.totalorder %s30, 1
      %p350 = por %p348, %p349
      %p352 = scmp.ne.s32.totalorder %s337, %s351
      %p353 = scmp.eq.s32.totalorder %s30, 0
      %p354 = por %p352, %p353
      %s356 = sadd.s32 %s355, 1
      %p359 = scmp.eq.s32.totalorder %s24, 1
      %p360 = scmp.ne.s32.totalorder %s355, %s357
      %p361 = scmp.eq.s32.totalorder %s24, 0
      %p362 = por %p360, %p361
      %p363 = scmp.ne.s32.totalorder %s355, %s357
      %p364 = scmp.eq.s32.totalorder %s29, 1
      %p365 = por %p363, %p364
      %p366 = scmp.ne.s32.totalorder %s357, %s358
      %p367 = scmp.eq.s32.totalorder %s29, 0
      %p368 = por %p366, %p367
      %p369 = scmp.ne.s32.totalorder %s357, %s358
      %p370 = scmp.eq.s32.totalorder %s30, 1
      %p371 = por %p369, %p370
      %p373 = scmp.ne.s32.totalorder %s358, %s372
      %p374 = scmp.eq.s32.totalorder %s30, 0
      %p375 = por %p373, %p374
      %s376 = ssub.s32 %s31, %s43
      %s377 = ssub.s32 %s32, %s39
      %s378 = sor.u32 %s376, %s377
      %p379 = scmp.eq.s32.totalorder %s378, 0
      %s381 = sadd.s32 %s380, 1
      %s382 = scalar_select %p379, %s380, %s381
      %p385 = pneg %p379
      %p386 = scmp.eq.s32.totalorder %s24, 1
      %p387 = por %p385, %p386
      %p388 = scmp.ne.s32.totalorder %s380, %s383
      %p389 = scmp.eq.s32.totalorder %s24, 0
      %p390 = por %p388, %p389
      %p391 = scmp.ne.s32.totalorder %s380, %s383
      %p392 = scmp.eq.s32.totalorder %s29, 1
      %p393 = por %p391, %p392
      %p394 = scmp.ne.s32.totalorder %s383, %s384
      %p395 = scmp.eq.s32.totalorder %s29, 0
      %p396 = por %p394, %p395
      %p397 = scmp.ne.s32.totalorder %s383, %s384
      %p398 = scmp.eq.s32.totalorder %s30, 1
      %p399 = por %p397, %p398
      %p401 = scmp.ne.s32.totalorder %s384, %s400
      %p402 = scmp.eq.s32.totalorder %s30, 0
      %p403 = por %p401, %p402
      %p404 = scmp.le.s32.totalorder 1, %s24
      %p405 = scmp.lt.s32.totalorder %s24, 3
      %p406 = pnand %p404, %p405
      %p407 = pneg %p406
      // Predicated region
      $region9: #{tpu_custom_call.1} parent=5 // pred_check
        _
      $region10: #{tpu_custom_call.1} parent=5 // pred_check_branch
        %409 = sbr.rel (%p406) target = $region12
      $region11: #{tpu_custom_call.1} parent=5 // pred_region
        %s410 = ssub.s32 %s24, 1
        // Predicated region
        $region13: #{tpu_custom_call.1} parent=11 // pred_check
          %p411 = pneg %p137
        $region14: #{tpu_custom_call.1} parent=11 // pred_check_branch
          %413 = sbr.rel (%p411) target = $region16
        $region15: #{tpu_custom_call.1} parent=11 // pred_region
          _
        $region16: #{tpu_custom_call.1} parent=11 // pred_fallthru
          _
        // Predicated region
        $region17: #{tpu_custom_call.1} parent=11 // pred_check
          %p414 = pneg %p158
        $region18: #{tpu_custom_call.1} parent=11 // pred_check_branch
          %416 = sbr.rel (%p414) target = $region20
        $region19: #{tpu_custom_call.1} parent=11 // pred_region
          _
        $region20: #{tpu_custom_call.1} parent=11 // pred_fallthru
          _
        // Predicated region
        $region21: #{tpu_custom_call.1} parent=11 // pred_check
          %p417 = pneg %p179
        $region22: #{tpu_custom_call.1} parent=11 // pred_check_branch
          %419 = sbr.rel (%p417) target = $region24
        $region23: #{tpu_custom_call.1} parent=11 // pred_region
          _
        $region24: #{tpu_custom_call.1} parent=11 // pred_fallthru
          _
        // Predicated region
        $region25: #{tpu_custom_call.1} parent=11 // pred_check
          %p420 = pneg %p200
        $region26: #{tpu_custom_call.1} parent=11 // pred_check_branch
          %422 = sbr.rel (%p420) target = $region28
        $region27: #{tpu_custom_call.1} parent=11 // pred_region
          _
        $region28: #{tpu_custom_call.1} parent=11 // pred_fallthru
          _
        // Predicated region
        $region29: #{tpu_custom_call.1} parent=11 // pred_check
          %p423 = pneg %p221
        $region30: #{tpu_custom_call.1} parent=11 // pred_check_branch
          %425 = sbr.rel (%p423) target = $region32
        $region31: #{tpu_custom_call.1} parent=11 // pred_region
          _
        $region32: #{tpu_custom_call.1} parent=11 // pred_fallthru
          _
        // Predicated region
        $region33: #{tpu_custom_call.1} parent=11 // pred_check
          %p426 = pneg %p242
        $region34: #{tpu_custom_call.1} parent=11 // pred_check_branch
          %428 = sbr.rel (%p426) target = $region36
        $region35: #{tpu_custom_call.1} parent=11 // pred_region
          _
        $region36: #{tpu_custom_call.1} parent=11 // pred_fallthru
          _
        // Predicated region
        $region37: #{tpu_custom_call.1} parent=11 // pred_check
          %p429 = pneg %p263
        $region38: #{tpu_custom_call.1} parent=11 // pred_check_branch
          %431 = sbr.rel (%p429) target = $region40
        $region39: #{tpu_custom_call.1} parent=11 // pred_region
          _
        $region40: #{tpu_custom_call.1} parent=11 // pred_fallthru
          _
        // Predicated region
        $region41: #{tpu_custom_call.1} parent=11 // pred_check
          %p432 = pneg %p284
        $region42: #{tpu_custom_call.1} parent=11 // pred_check_branch
          %434 = sbr.rel (%p432) target = $region44
        $region43: #{tpu_custom_call.1} parent=11 // pred_region
          _
        $region44: #{tpu_custom_call.1} parent=11 // pred_fallthru
          _
        // Predicated region
        $region45: #{tpu_custom_call.1} parent=11 // pred_check
          %p435 = pneg %p305
        $region46: #{tpu_custom_call.1} parent=11 // pred_check_branch
          %437 = sbr.rel (%p435) target = $region48
        $region47: #{tpu_custom_call.1} parent=11 // pred_region
          _
        $region48: #{tpu_custom_call.1} parent=11 // pred_fallthru
          _
        // Predicated region
        $region49: #{tpu_custom_call.1} parent=11 // pred_check
          %p438 = pneg %p326
        $region50: #{tpu_custom_call.1} parent=11 // pred_check_branch
          %440 = sbr.rel (%p438) target = $region52
        $region51: #{tpu_custom_call.1} parent=11 // pred_region
          _
        $region52: #{tpu_custom_call.1} parent=11 // pred_fallthru
          _
        // Predicated region
        $region53: #{tpu_custom_call.1} parent=11 // pred_check
          %p441 = pneg %p347
        $region54: #{tpu_custom_call.1} parent=11 // pred_check_branch
          %443 = sbr.rel (%p441) target = $region56
        $region55: #{tpu_custom_call.1} parent=11 // pred_region
          _
        $region56: #{tpu_custom_call.1} parent=11 // pred_fallthru
          _
        // Predicated region
        $region57: #{tpu_custom_call.1} parent=11 // pred_check
          %p444 = pneg %p368
        $region58: #{tpu_custom_call.1} parent=11 // pred_check_branch
          %446 = sbr.rel (%p444) target = $region60
        $region59: #{tpu_custom_call.1} parent=11 // pred_region
          _
        $region60: #{tpu_custom_call.1} parent=11 // pred_fallthru
          _
      $region12: #{tpu_custom_call.1} parent=5 // pred_fallthru
        _
      %p447 = scmp.lt.s32.totalorder %s24, 2
      // Predicated region
      $region61: #{tpu_custom_call.1} parent=5 // pred_check
        %p448 = pneg %p447
      $region62: #{tpu_custom_call.1} parent=5 // pred_check_branch
        %450 = sbr.rel (%p448) target = $region64
      $region63: #{tpu_custom_call.1} parent=5 // pred_region
        // Predicated region
        $region65: #{tpu_custom_call.1} parent=63 // pred_check
          %p451 = pneg %p58
        $region66: #{tpu_custom_call.1} parent=63 // pred_check_branch
          %453 = sbr.rel (%p451) target = $region68
        $region67: #{tpu_custom_call.1} parent=63 // pred_region
          %s454 = smul.u32 2, %s32
          %p455 = scmp.lt.s32.totalorder %s31, 1
          %s456 = scalar_select %p455, %s31, 1
          %p457 = scmp.lt.s32.totalorder %s454, 1
          %s458 = scalar_select %p457, %s454, 1
          %s459 = smul.addr %s456, 2
          %s460 = sadd.s32 %s458, %s459
          %s461 = smul.addr %s460, 8
          %s462 = scalar_lea.vmem %s0, %s461
          %s463 = smul.u32 2, %s32
        $region68: #{tpu_custom_call.1} parent=63 // pred_fallthru
          _
        // Predicated region
        $region69: #{tpu_custom_call.1} parent=63 // pred_check
          %p464 = pneg %p84
        $region70: #{tpu_custom_call.1} parent=63 // pred_check_branch
          %466 = sbr.rel (%p464) target = $region72
        $region71: #{tpu_custom_call.1} parent=63 // pred_region
          %p467 = scmp.lt.s32.totalorder %s31, 1
          %s468 = scalar_select %p467, %s31, 1
          %s469 = smul.addr %s468, 2
          %s470 = smul.addr %s469, 8
          %s471 = scalar_lea.vmem %s1, %s470
        $region72: #{tpu_custom_call.1} parent=63 // pred_fallthru
          _
        // Predicated region
        $region73: #{tpu_custom_call.1} parent=63 // pred_check
          %p472 = pneg %p110
        $region74: #{tpu_custom_call.1} parent=63 // pred_check_branch
          %474 = sbr.rel (%p472) target = $region76
        $region75: #{tpu_custom_call.1} parent=63 // pred_region
          %p475 = scmp.lt.s32.totalorder %s31, 1
          %s476 = scalar_select %p475, %s31, 1
          %s477 = smul.addr %s476, 2
          %s478 = smul.addr %s477, 8
          %s479 = scalar_lea.vmem %s2, %s478
        $region76: #{tpu_custom_call.1} parent=63 // pred_fallthru
          _
      $region64: #{tpu_custom_call.1} parent=5 // pred_fallthru
        _
      %p480 = scmp.le.s32.totalorder 1, %s24
      %p481 = scmp.lt.s32.totalorder %s24, 3
      %p482 = pnand %p480, %p481
      %p483 = pneg %p482
      // Predicated region
      $region77: #{tpu_custom_call.1} parent=5 // pred_check
        _
      $region78: #{tpu_custom_call.1} parent=5 // pred_check_branch
        %485 = sbr.rel (%p482) target = $region80
      $region79: #{tpu_custom_call.1} parent=5 // pred_region
        %s486 = ssub.s32 %s24, 1
        %s487 = smul.u32 2, %s34
        %p488 = scmp.lt.s32.totalorder %s33, 1
        %s489 = scalar_select %p488, %s33, 1
        %p490 = scmp.lt.s32.totalorder %s487, 1
        %s491 = scalar_select %p490, %s487, 1
        %s492 = smul.addr %s489, 2
        %s493 = sadd.s32 %s491, %s492
        %s494 = smul.addr %s493, 8
        %s495 = scalar_lea.vmem %s0, %s494
        %p496 = pneg %p64
        %p497 = pneg %p61
        %p498 = scmp.lt.s32.totalorder %s33, 1
        %s499 = scalar_select %p498, %s33, 1
        %s500 = smul.addr %s499, 2
        %s501 = smul.addr %s500, 8
        %s502 = scalar_lea.vmem %s1, %s501
        %p503 = pneg %p90
        %p504 = pneg %p87
        %p505 = scmp.lt.s32.totalorder %s33, 1
        %s506 = scalar_select %p505, %s33, 1
        %s507 = smul.addr %s506, 2
        %s508 = smul.addr %s507, 8
        %s509 = scalar_lea.vmem %s2, %s508
        %p510 = pneg %p116
        %p511 = pneg %p113
        %p512 = pneg %p137
        %p513 = pneg %p134
        %p514 = pneg %p158
        %p515 = pneg %p155
        %p516 = pneg %p179
        %p517 = pneg %p176
        %p518 = pneg %p200
        %p519 = pneg %p197
        %p520 = pneg %p221
        %p521 = pneg %p218
        %p522 = pneg %p242
        %p523 = pneg %p239
        %p524 = pneg %p263
        %p525 = pneg %p260
        %p526 = pneg %p284
        %p527 = pneg %p281
        %p528 = pneg %p305
        %p529 = pneg %p302
        %p530 = pneg %p326
        %p531 = pneg %p323
        %p532 = pneg %p347
        %p533 = pneg %p344
        %p534 = pneg %p368
        %p535 = pneg %p365
        %p536 = pneg %p396
        %p537 = pneg %p393
        %s538 = sand.u32 %s383, 1
        %s539 = scalar_lea.sflag [#allocation4], %s538
        %s540 = sand.u32 %s383, 1
        %s541 = smul.addr %s540, 16
        %s542 = scalar_lea.vmem [#allocation3], %s541
        %s543 = smul.u32 2, %s34
        %p544 = scmp.lt.s32.totalorder %s33, 1
        %s545 = scalar_select %p544, %s33, 1
        %p546 = scmp.lt.s32.totalorder %s543, 1
        %s547 = scalar_select %p546, %s543, 1
        %s548 = smul.addr %s545, 2
        %s549 = sadd.s32 %s547, %s548
        %s550 = smul.addr %s549, 8
        %s551 = scalar_lea.vmem %s0, %s550
        %s552 = smul.u32 2, %s34
        %p553 = scmp.lt.s32.totalorder %s33, 1
        %s554 = scalar_select %p553, %s33, 1
        %s555 = smul.addr %s554, 2
        %s556 = smul.addr %s555, 8
        %s557 = scalar_lea.vmem %s1, %s556
        %p558 = scmp.lt.s32.totalorder %s33, 1
        %s559 = scalar_select %p558, %s33, 1
        %s560 = smul.addr %s559, 2
        %s561 = smul.addr %s560, 8
        %s562 = scalar_lea.vmem %s2, %s561
        %s563 = smul.u32 2, %s34
        %v565 = vld [vmem:[%s551] sm:$0xff]
        %v566 = vld [vmem:[%s551 + $0x8] sm:$0xff]
        %v567 = vpack.c.bf16 %v566, %v565
        %v568 = vld [vmem:[%s557] sm:$0xff]
        %v569 = vld [vmem:[%s557 + $0x8] sm:$0xff]
        %v570 = vpack.c.bf16 %v569, %v568
        %v571 = vld [vmem:[%s562] sm:$0xff]
        %v572 = vld [vmem:[%s562 + $0x8] sm:$0xff]
        %v573 = vpack.c.bf16 %v572, %v571
        %v574 = vld [vmem:[%s3] sm:$0xff]
        %v575 = vld [vmem:[%s3 + $0x8] sm:$0xff]
        %v576 = vld [vmem:[%s3 + $0x10] sm:$0xff]
        %v577 = vld [vmem:[%s3 + $0x18] sm:$0xff]
        %v578 = vld [vmem:[%s3 + $0x20] sm:$0xff]
        %v579 = vld [vmem:[%s3 + $0x28] sm:$0xff]
        %v580 = vld [vmem:[%s3 + $0x30] sm:$0xff]
        %v581 = vld [vmem:[%s3 + $0x38] sm:$0xff]
        %v582 = vld [vmem:[%s3 + $0x40] sm:$0xff]
        %v583 = vld [vmem:[%s3 + $0x48] sm:$0xff]
        %v584 = vld [vmem:[%s3 + $0x50] sm:$0xff]
        %v585 = vld [vmem:[%s3 + $0x58] sm:$0xff]
        %v586 = vld [vmem:[%s3 + $0x60] sm:$0xff]
        %v587 = vld [vmem:[%s3 + $0x68] sm:$0xff]
        %v588 = vld [vmem:[%s3 + $0x70] sm:$0xff]
        %v589 = vld [vmem:[%s3 + $0x78] sm:$0xff]
        %v590 = vld [vmem:[%s4] sm:$0xff]
        %v592 = vlaneseq
        %v593 = vshrl.u32 %v592, 7
        %v594 = vsub.s32 0, %v593
        %v595 = vrot.slane %v590, %v594
        %v596 = vlaneseq
        %v597 = vshrl.u32 %v596, 7
        %v598 = vsub.s32 1, %v597
        %v599 = vrot.slane %v590, %v598
        %v600 = vlaneseq
        %v601 = vshrl.u32 %v600, 7
        %v602 = vsub.s32 2, %v601
        %v603 = vrot.slane %v590, %v602
        %v604 = vlaneseq
        %v605 = vshrl.u32 %v604, 7
        %v606 = vsub.s32 3, %v605
        %v607 = vrot.slane %v590, %v606
        %v608 = vlaneseq
        %v609 = vshrl.u32 %v608, 7
        %v610 = vsub.s32 4, %v609
        %v611 = vrot.slane %v590, %v610
        %v612 = vlaneseq
        %v613 = vshrl.u32 %v612, 7
        %v614 = vsub.s32 5, %v613
        %v615 = vrot.slane %v590, %v614
        %v616 = vlaneseq
        %v617 = vshrl.u32 %v616, 7
        %v618 = vsub.s32 6, %v617
        %v619 = vrot.slane %v590, %v618
        %v620 = vlaneseq
        %v621 = vshrl.u32 %v620, 7
        %v622 = vsub.s32 7, %v621
        %v623 = vrot.slane %v590, %v622
        %v648 = vunpack.c.l.b16 %v574
        %v649 = vunpack.c.h.b16 %v574
        %v650 = vunpack.c.l.b16 %v575
        %v651 = vunpack.c.h.b16 %v575
        %v652 = vunpack.c.l.b16 %v576
        %v653 = vunpack.c.h.b16 %v576
        %v654 = vunpack.c.l.b16 %v577
        %v655 = vunpack.c.h.b16 %v577
        %v656 = vunpack.c.l.b16 %v578
        %v657 = vunpack.c.h.b16 %v578
        %v658 = vunpack.c.l.b16 %v579
        %v659 = vunpack.c.h.b16 %v579
        %v660 = vunpack.c.l.b16 %v580
        %v661 = vunpack.c.h.b16 %v580
        %v662 = vunpack.c.l.b16 %v581
        %v663 = vunpack.c.h.b16 %v581
        %v664 = vunpack.c.l.b16 %v582
        %v665 = vunpack.c.h.b16 %v582
        %v666 = vunpack.c.l.b16 %v583
        %v667 = vunpack.c.h.b16 %v583
        %v668 = vunpack.c.l.b16 %v584
        %v669 = vunpack.c.h.b16 %v584
        %v670 = vunpack.c.l.b16 %v585
        %v671 = vunpack.c.h.b16 %v585
        %v672 = vunpack.c.l.b16 %v586
        %v673 = vunpack.c.h.b16 %v586
        %v674 = vunpack.c.l.b16 %v587
        %v675 = vunpack.c.h.b16 %v587
        %v676 = vunpack.c.l.b16 %v588
        %v677 = vunpack.c.h.b16 %v588
        %v678 = vunpack.c.l.b16 %v589
        %v679 = vunpack.c.h.b16 %v589
        %v680 = vpack.c.b16 %v656, %v648
        %v681 = vpack.c.b16 %v657, %v649
        %v682 = vpack.c.b16 %v658, %v650
        %v683 = vpack.c.b16 %v659, %v651
        %v684 = vpack.c.b16 %v660, %v652
        %v685 = vpack.c.b16 %v661, %v653
        %v686 = vpack.c.b16 %v662, %v654
        %v687 = vpack.c.b16 %v663, %v655
        %v688 = vpack.c.b16 %v672, %v664
        %v689 = vpack.c.b16 %v673, %v665
        %v690 = vpack.c.b16 %v674, %v666
        %v691 = vpack.c.b16 %v675, %v667
        %v692 = vpack.c.b16 %v676, %v668
        %v693 = vpack.c.b16 %v677, %v669
        %v694 = vpack.c.b16 %v678, %v670
        %v695 = vpack.c.b16 %v679, %v671
        %vm712 = vcmask 261120
        %v714 = vsel %vm712, %v567, 0
        %716 = vmatprep.subr.bf16.mxu0 %v681
        %717 = vmatpush1.bf16.msra.mxu0 %v680
        %718 = vmatprep.subr.bf16.mxu0 %v689
        %719 = vmatpush1.bf16.msra.mxu0 %v688
        %720 = vmatprep.subr.bf16.mxu0 0
        %721 = vmatpush1.bf16.msra.mxu0 0
        %722 = vmatprep.subr.bf16.mxu0 0
        %723 = vmatpush1.bf16.msra.mxu0 0
        %724 = vmatprep.subr.bf16.mxu0 0
        %725 = vmatpush1.bf16.msra.mxu0 0
        %726 = vmatprep.subr.bf16.mxu0 0
        %727 = vmatpush1.bf16.msra.mxu0 0
        %728 = vmatprep.subr.bf16.mxu0 0
        %729 = vmatpush1.bf16.msra.mxu0 0
        %730 = vmatprep.subr.bf16.mxu0 0
        %731 = vmatpush1.bf16.msra.mxu0 0
        %732 = vmatprep.subr.bf16.mxu0 0
        %733 = vmatpush1.bf16.msra.mxu0 0
        %734 = vmatprep.subr.bf16.mxu0 0
        %735 = vmatpush1.bf16.msra.mxu0 0
        %736 = vmatprep.subr.bf16.mxu0 0
        %737 = vmatpush1.bf16.msra.mxu0 0
        %738 = vmatprep.subr.bf16.mxu0 0
        %739 = vmatpush1.bf16.msra.mxu0 0
        %740 = vmatprep.subr.bf16.mxu0 0
        %741 = vmatpush1.bf16.msra.mxu0 0
        %742 = vmatprep.subr.bf16.mxu0 0
        %743 = vmatpush1.bf16.msra.mxu0 0
        %744 = vmatprep.subr.bf16.mxu0 0
        %745 = vmatpush1.bf16.msra.mxu0 0
        %746 = vmatprep.subr.bf16.mxu0 0
        %747 = vmatpush1.bf16.msra.mxu0 0
        %748 = vmatprep.mubr.bf16.mxu0 0
        %749 = vmatmul.mubr.bf16.gmra.mrb[0].mxu0 %v714
        %v750 = vpop.f32.mrb[0].mxu0
        %v751 = vadd.f32 %v595, %v750
        %v752 = vpop.f32.mrb[0].mxu0
        %v753 = vadd.f32 %v599, %v752
        %v754 = vpop.f32.mrb[0].mxu0
        %v755 = vadd.f32 %v595, %v754
        %v756 = vpop.f32.mrb[0].mxu0
        %v757 = vadd.f32 %v599, %v756
        %758 = vdwg.mxu0
        %759 = vmatprep.subr.bf16.mxu0 %v683
        %760 = vmatpush1.bf16.msra.mxu0 %v682
        %761 = vmatprep.subr.bf16.mxu0 %v691
        %762 = vmatpush1.bf16.msra.mxu0 %v690
        %763 = vmatprep.subr.bf16.mxu0 0
        %764 = vmatpush1.bf16.msra.mxu0 0
        %765 = vmatprep.subr.bf16.mxu0 0
        %766 = vmatpush1.bf16.msra.mxu0 0
        %767 = vmatprep.subr.bf16.mxu0 0
        %768 = vmatpush1.bf16.msra.mxu0 0
        %769 = vmatprep.subr.bf16.mxu0 0
        %770 = vmatpush1.bf16.msra.mxu0 0
        %771 = vmatprep.subr.bf16.mxu0 0
        %772 = vmatpush1.bf16.msra.mxu0 0
        %773 = vmatprep.subr.bf16.mxu0 0
        %774 = vmatpush1.bf16.msra.mxu0 0
        %775 = vmatprep.subr.bf16.mxu0 0
        %776 = vmatpush1.bf16.msra.mxu0 0
        %777 = vmatprep.subr.bf16.mxu0 0
        %778 = vmatpush1.bf16.msra.mxu0 0
        %779 = vmatprep.subr.bf16.mxu0 0
        %780 = vmatpush1.bf16.msra.mxu0 0
        %781 = vmatprep.subr.bf16.mxu0 0
        %782 = vmatpush1.bf16.msra.mxu0 0
        %783 = vmatprep.subr.bf16.mxu0 0
        %784 = vmatpush1.bf16.msra.mxu0 0
        %785 = vmatprep.subr.bf16.mxu0 0
        %786 = vmatpush1.bf16.msra.mxu0 0
        %787 = vmatprep.subr.bf16.mxu0 0
        %788 = vmatpush1.bf16.msra.mxu0 0
        %789 = vmatprep.subr.bf16.mxu0 0
        %790 = vmatpush1.bf16.msra.mxu0 0
        %791 = vmatprep.mubr.bf16.mxu0 0
        %792 = vmatmul.mubr.bf16.gmra.mrb[0].mxu0 %v714
        %v793 = vpop.f32.mrb[0].mxu0
        %v794 = vadd.f32 %v603, %v793
        %v795 = vpop.f32.mrb[0].mxu0
        %v796 = vadd.f32 %v607, %v795
        %v797 = vpop.f32.mrb[0].mxu0
        %v798 = vadd.f32 %v603, %v797
        %v799 = vpop.f32.mrb[0].mxu0
        %v800 = vadd.f32 %v607, %v799
        %801 = vdwg.mxu0
        %802 = vmatprep.subr.bf16.mxu0 %v685
        %803 = vmatpush1.bf16.msra.mxu0 %v684
        %804 = vmatprep.subr.bf16.mxu0 %v693
        %805 = vmatpush1.bf16.msra.mxu0 %v692
        %806 = vmatprep.subr.bf16.mxu0 0
        %807 = vmatpush1.bf16.msra.mxu0 0
        %808 = vmatprep.subr.bf16.mxu0 0
        %809 = vmatpush1.bf16.msra.mxu0 0
        %810 = vmatprep.subr.bf16.mxu0 0
        %811 = vmatpush1.bf16.msra.mxu0 0
        %812 = vmatprep.subr.bf16.mxu0 0
        %813 = vmatpush1.bf16.msra.mxu0 0
        %814 = vmatprep.subr.bf16.mxu0 0
        %815 = vmatpush1.bf16.msra.mxu0 0
        %816 = vmatprep.subr.bf16.mxu0 0
        %817 = vmatpush1.bf16.msra.mxu0 0
        %818 = vmatprep.subr.bf16.mxu0 0
        %819 = vmatpush1.bf16.msra.mxu0 0
        %820 = vmatprep.subr.bf16.mxu0 0
        %821 = vmatpush1.bf16.msra.mxu0 0
        %822 = vmatprep.subr.bf16.mxu0 0
        %823 = vmatpush1.bf16.msra.mxu0 0
        %824 = vmatprep.subr.bf16.mxu0 0
        %825 = vmatpush1.bf16.msra.mxu0 0
        %826 = vmatprep.subr.bf16.mxu0 0
        %827 = vmatpush1.bf16.msra.mxu0 0
        %828 = vmatprep.subr.bf16.mxu0 0
        %829 = vmatpush1.bf16.msra.mxu0 0
        %830 = vmatprep.subr.bf16.mxu0 0
        %831 = vmatpush1.bf16.msra.mxu0 0
        %832 = vmatprep.subr.bf16.mxu0 0
        %833 = vmatpush1.bf16.msra.mxu0 0
        %834 = vmatprep.mubr.bf16.mxu0 0
        %835 = vmatmul.mubr.bf16.gmra.mrb[0].mxu0 %v714
        %v836 = vpop.f32.mrb[0].mxu0
        %v837 = vadd.f32 %v611, %v836
        %v838 = vpop.f32.mrb[0].mxu0
        %v839 = vadd.f32 %v615, %v838
        %v840 = vpop.f32.mrb[0].mxu0
        %v841 = vadd.f32 %v611, %v840
        %v842 = vpop.f32.mrb[0].mxu0
        %v843 = vadd.f32 %v615, %v842
        %844 = vdwg.mxu0
        %845 = vmatprep.subr.bf16.mxu0 %v687
        %846 = vmatpush1.bf16.msra.mxu0 %v686
        %847 = vmatprep.subr.bf16.mxu0 %v695
        %848 = vmatpush1.bf16.msra.mxu0 %v694
        %849 = vmatprep.subr.bf16.mxu0 0
        %850 = vmatpush1.bf16.msra.mxu0 0
        %851 = vmatprep.subr.bf16.mxu0 0
        %852 = vmatpush1.bf16.msra.mxu0 0
        %853 = vmatprep.subr.bf16.mxu0 0
        %854 = vmatpush1.bf16.msra.mxu0 0
        %855 = vmatprep.subr.bf16.mxu0 0
        %856 = vmatpush1.bf16.msra.mxu0 0
        %857 = vmatprep.subr.bf16.mxu0 0
        %858 = vmatpush1.bf16.msra.mxu0 0
        %859 = vmatprep.subr.bf16.mxu0 0
        %860 = vmatpush1.bf16.msra.mxu0 0
        %861 = vmatprep.subr.bf16.mxu0 0
        %862 = vmatpush1.bf16.msra.mxu0 0
        %863 = vmatprep.subr.bf16.mxu0 0
        %864 = vmatpush1.bf16.msra.mxu0 0
        %865 = vmatprep.subr.bf16.mxu0 0
        %866 = vmatpush1.bf16.msra.mxu0 0
        %867 = vmatprep.subr.bf16.mxu0 0
        %868 = vmatpush1.bf16.msra.mxu0 0
        %869 = vmatprep.subr.bf16.mxu0 0
        %870 = vmatpush1.bf16.msra.mxu0 0
        %871 = vmatprep.subr.bf16.mxu0 0
        %872 = vmatpush1.bf16.msra.mxu0 0
        %873 = vmatprep.subr.bf16.mxu0 0
        %874 = vmatpush1.bf16.msra.mxu0 0
        %875 = vmatprep.subr.bf16.mxu0 0
        %876 = vmatpush1.bf16.msra.mxu0 0
        %877 = vmatprep.mubr.bf16.mxu0 0
        %878 = vmatmul.mubr.bf16.gmra.mrb[0].mxu0 %v714
        %v879 = vpop.f32.mrb[0].mxu0
        %v880 = vadd.f32 %v619, %v879
        %v881 = vpop.f32.mrb[0].mxu0
        %v882 = vadd.f32 %v623, %v881
        %v883 = vpop.f32.mrb[0].mxu0
        %v884 = vadd.f32 %v619, %v883
        %v885 = vpop.f32.mrb[0].mxu0
        %v886 = vadd.f32 %v623, %v885
        %887 = vdwg.mxu0
        %v888 = vpack.c.bf16 %v755, %v751
        %v889 = vpack.c.bf16 %v757, %v753
        %v890 = vpack.c.bf16 %v798, %v794
        %v891 = vpack.c.bf16 %v800, %v796
        %v892 = vpack.c.bf16 %v841, %v837
        %v893 = vpack.c.bf16 %v843, %v839
        %v894 = vpack.c.bf16 %v884, %v880
        %v895 = vpack.c.bf16 %v886, %v882
        %v896 = vld [vmem:[%s5] sm:$0xff]
        %v897 = vld [vmem:[%s5 + $0x8] sm:$0xff]
        %v898 = vld [vmem:[%s5 + $0x10] sm:$0xff]
        %v899 = vld [vmem:[%s5 + $0x18] sm:$0xff]
        %v900 = vld [vmem:[%s5 + $0x20] sm:$0xff]
        %v901 = vld [vmem:[%s5 + $0x28] sm:$0xff]
        %v902 = vld [vmem:[%s5 + $0x30] sm:$0xff]
        %v903 = vld [vmem:[%s5 + $0x38] sm:$0xff]
        %v904 = vld [vmem:[%s5 + $0x40] sm:$0xff]
        %v905 = vld [vmem:[%s5 + $0x48] sm:$0xff]
        %v906 = vld [vmem:[%s5 + $0x50] sm:$0xff]
        %v907 = vld [vmem:[%s5 + $0x58] sm:$0xff]
        %v908 = vld [vmem:[%s5 + $0x60] sm:$0xff]
        %v909 = vld [vmem:[%s5 + $0x68] sm:$0xff]
        %v910 = vld [vmem:[%s5 + $0x70] sm:$0xff]
        %v911 = vld [vmem:[%s5 + $0x78] sm:$0xff]
        %v912 = vld [vmem:[%s6] sm:$0xff]
        %v914 = vlaneseq
        %v915 = vshrl.u32 %v914, 7
        %v916 = vsub.s32 0, %v915
        %v917 = vrot.slane %v912, %v916
        %v918 = vlaneseq
        %v919 = vshrl.u32 %v918, 7
        %v920 = vsub.s32 1, %v919
        %v921 = vrot.slane %v912, %v920
        %v922 = vlaneseq
        %v923 = vshrl.u32 %v922, 7
        %v924 = vsub.s32 2, %v923
        %v925 = vrot.slane %v912, %v924
        %v926 = vlaneseq
        %v927 = vshrl.u32 %v926, 7
        %v928 = vsub.s32 3, %v927
        %v929 = vrot.slane %v912, %v928
        %v930 = vlaneseq
        %v931 = vshrl.u32 %v930, 7
        %v932 = vsub.s32 4, %v931
        %v933 = vrot.slane %v912, %v932
        %v934 = vlaneseq
        %v935 = vshrl.u32 %v934, 7
        %v936 = vsub.s32 5, %v935
        %v937 = vrot.slane %v912, %v936
        %v938 = vlaneseq
        %v939 = vshrl.u32 %v938, 7
        %v940 = vsub.s32 6, %v939
        %v941 = vrot.slane %v912, %v940
        %v942 = vlaneseq
        %v943 = vshrl.u32 %v942, 7
        %v944 = vsub.s32 7, %v943
        %v945 = vrot.slane %v912, %v944
        %v970 = vunpack.c.l.b16 %v896
        %v971 = vunpack.c.h.b16 %v896
        %v972 = vunpack.c.l.b16 %v897
        %v973 = vunpack.c.h.b16 %v897
        %v974 = vunpack.c.l.b16 %v898
        %v975 = vunpack.c.h.b16 %v898
        %v976 = vunpack.c.l.b16 %v899
        %v977 = vunpack.c.h.b16 %v899
        %v978 = vunpack.c.l.b16 %v900
        %v979 = vunpack.c.h.b16 %v900
        %v980 = vunpack.c.l.b16 %v901
        %v981 = vunpack.c.h.b16 %v901
        %v982 = vunpack.c.l.b16 %v902
        %v983 = vunpack.c.h.b16 %v902
        %v984 = vunpack.c.l.b16 %v903
        %v985 = vunpack.c.h.b16 %v903
        %v986 = vunpack.c.l.b16 %v904
        %v987 = vunpack.c.h.b16 %v904
        %v988 = vunpack.c.l.b16 %v905
        %v989 = vunpack.c.h.b16 %v905
        %v990 = vunpack.c.l.b16 %v906
        %v991 = vunpack.c.h.b16 %v906
        %v992 = vunpack.c.l.b16 %v907
        %v993 = vunpack.c.h.b16 %v907
        %v994 = vunpack.c.l.b16 %v908
        %v995 = vunpack.c.h.b16 %v908
        %v996 = vunpack.c.l.b16 %v909
        %v997 = vunpack.c.h.b16 %v909
        %v998 = vunpack.c.l.b16 %v910
        %v999 = vunpack.c.h.b16 %v910
        %v1000 = vunpack.c.l.b16 %v911
        %v1001 = vunpack.c.h.b16 %v911
        %v1002 = vpack.c.b16 %v978, %v970
        %v1003 = vpack.c.b16 %v979, %v971
        %v1004 = vpack.c.b16 %v980, %v972
        %v1005 = vpack.c.b16 %v981, %v973
        %v1006 = vpack.c.b16 %v982, %v974
        %v1007 = vpack.c.b16 %v983, %v975
        %v1008 = vpack.c.b16 %v984, %v976
        %v1009 = vpack.c.b16 %v985, %v977
        %v1010 = vpack.c.b16 %v994, %v986
        %v1011 = vpack.c.b16 %v995, %v987
        %v1012 = vpack.c.b16 %v996, %v988
        %v1013 = vpack.c.b16 %v997, %v989
        %v1014 = vpack.c.b16 %v998, %v990
        %v1015 = vpack.c.b16 %v999, %v991
        %v1016 = vpack.c.b16 %v1000, %v992
        %v1017 = vpack.c.b16 %v1001, %v993
        %v1035 = vsel %vm712, %v570, 0
        %1037 = vmatprep.subr.bf16.mxu0 %v1003
        %1038 = vmatpush1.bf16.msra.mxu0 %v1002
        %1039 = vmatprep.subr.bf16.mxu0 %v1011
        %1040 = vmatpush1.bf16.msra.mxu0 %v1010
        %1041 = vmatprep.subr.bf16.mxu0 0
        %1042 = vmatpush1.bf16.msra.mxu0 0
        %1043 = vmatprep.subr.bf16.mxu0 0
        %1044 = vmatpush1.bf16.msra.mxu0 0
        %1045 = vmatprep.subr.bf16.mxu0 0
        %1046 = vmatpush1.bf16.msra.mxu0 0
        %1047 = vmatprep.subr.bf16.mxu0 0
        %1048 = vmatpush1.bf16.msra.mxu0 0
        %1049 = vmatprep.subr.bf16.mxu0 0
        %1050 = vmatpush1.bf16.msra.mxu0 0
        %1051 = vmatprep.subr.bf16.mxu0 0
        %1052 = vmatpush1.bf16.msra.mxu0 0
        %1053 = vmatprep.subr.bf16.mxu0 0
        %1054 = vmatpush1.bf16.msra.mxu0 0
        %1055 = vmatprep.subr.bf16.mxu0 0
        %1056 = vmatpush1.bf16.msra.mxu0 0
        %1057 = vmatprep.subr.bf16.mxu0 0
        %1058 = vmatpush1.bf16.msra.mxu0 0
        %1059 = vmatprep.subr.bf16.mxu0 0
        %1060 = vmatpush1.bf16.msra.mxu0 0
        %1061 = vmatprep.subr.bf16.mxu0 0
        %1062 = vmatpush1.bf16.msra.mxu0 0
        %1063 = vmatprep.subr.bf16.mxu0 0
        %1064 = vmatpush1.bf16.msra.mxu0 0
        %1065 = vmatprep.subr.bf16.mxu0 0
        %1066 = vmatpush1.bf16.msra.mxu0 0
        %1067 = vmatprep.subr.bf16.mxu0 0
        %1068 = vmatpush1.bf16.msra.mxu0 0
        %1069 = vmatprep.mubr.bf16.mxu0 0
        %1070 = vmatmul.mubr.bf16.gmra.mrb[0].mxu0 %v1035
        %v1071 = vpop.f32.mrb[0].mxu0
        %v1072 = vadd.f32 %v917, %v1071
        %v1073 = vpop.f32.mrb[0].mxu0
        %v1074 = vadd.f32 %v921, %v1073
        %v1075 = vpop.f32.mrb[0].mxu0
        %v1076 = vadd.f32 %v917, %v1075
        %v1077 = vpop.f32.mrb[0].mxu0
        %v1078 = vadd.f32 %v921, %v1077
        %1079 = vdwg.mxu0
        %1080 = vmatprep.subr.bf16.mxu0 %v1005
        %1081 = vmatpush1.bf16.msra.mxu0 %v1004
        %1082 = vmatprep.subr.bf16.mxu0 %v1013
        %1083 = vmatpush1.bf16.msra.mxu0 %v1012
        %1084 = vmatprep.subr.bf16.mxu0 0
        %1085 = vmatpush1.bf16.msra.mxu0 0
        %1086 = vmatprep.subr.bf16.mxu0 0
        %1087 = vmatpush1.bf16.msra.mxu0 0
        %1088 = vmatprep.subr.bf16.mxu0 0
        %1089 = vmatpush1.bf16.msra.mxu0 0
        %1090 = vmatprep.subr.bf16.mxu0 0
        %1091 = vmatpush1.bf16.msra.mxu0 0
        %1092 = vmatprep.subr.bf16.mxu0 0
        %1093 = vmatpush1.bf16.msra.mxu0 0
        %1094 = vmatprep.subr.bf16.mxu0 0
        %1095 = vmatpush1.bf16.msra.mxu0 0
        %1096 = vmatprep.subr.bf16.mxu0 0
        %1097 = vmatpush1.bf16.msra.mxu0 0
        %1098 = vmatprep.subr.bf16.mxu0 0
        %1099 = vmatpush1.bf16.msra.mxu0 0
        %1100 = vmatprep.subr.bf16.mxu0 0
        %1101 = vmatpush1.bf16.msra.mxu0 0
        %1102 = vmatprep.subr.bf16.mxu0 0
        %1103 = vmatpush1.bf16.msra.mxu0 0
        %1104 = vmatprep.subr.bf16.mxu0 0
        %1105 = vmatpush1.bf16.msra.mxu0 0
        %1106 = vmatprep.subr.bf16.mxu0 0
        %1107 = vmatpush1.bf16.msra.mxu0 0
        %1108 = vmatprep.subr.bf16.mxu0 0
        %1109 = vmatpush1.bf16.msra.mxu0 0
        %1110 = vmatprep.subr.bf16.mxu0 0
        %1111 = vmatpush1.bf16.msra.mxu0 0
        %1112 = vmatprep.mubr.bf16.mxu0 0
        %1113 = vmatmul.mubr.bf16.gmra.mrb[0].mxu0 %v1035
        %v1114 = vpop.f32.mrb[0].mxu0
        %v1115 = vadd.f32 %v925, %v1114
        %v1116 = vpop.f32.mrb[0].mxu0
        %v1117 = vadd.f32 %v929, %v1116
        %v1118 = vpop.f32.mrb[0].mxu0
        %v1119 = vadd.f32 %v925, %v1118
        %v1120 = vpop.f32.mrb[0].mxu0
        %v1121 = vadd.f32 %v929, %v1120
        %1122 = vdwg.mxu0
        %1123 = vmatprep.subr.bf16.mxu0 %v1007
        %1124 = vmatpush1.bf16.msra.mxu0 %v1006
        %1125 = vmatprep.subr.bf16.mxu0 %v1015
        %1126 = vmatpush1.bf16.msra.mxu0 %v1014
        %1127 = vmatprep.subr.bf16.mxu0 0
        %1128 = vmatpush1.bf16.msra.mxu0 0
        %1129 = vmatprep.subr.bf16.mxu0 0
        %1130 = vmatpush1.bf16.msra.mxu0 0
        %1131 = vmatprep.subr.bf16.mxu0 0
        %1132 = vmatpush1.bf16.msra.mxu0 0
        %1133 = vmatprep.subr.bf16.mxu0 0
        %1134 = vmatpush1.bf16.msra.mxu0 0
        %1135 = vmatprep.subr.bf16.mxu0 0
        %1136 = vmatpush1.bf16.msra.mxu0 0
        %1137 = vmatprep.subr.bf16.mxu0 0
        %1138 = vmatpush1.bf16.msra.mxu0 0
        %1139 = vmatprep.subr.bf16.mxu0 0
        %1140 = vmatpush1.bf16.msra.mxu0 0
        %1141 = vmatprep.subr.bf16.mxu0 0
        %1142 = vmatpush1.bf16.msra.mxu0 0
        %1143 = vmatprep.subr.bf16.mxu0 0
        %1144 = vmatpush1.bf16.msra.mxu0 0
        %1145 = vmatprep.subr.bf16.mxu0 0
        %1146 = vmatpush1.bf16.msra.mxu0 0
        %1147 = vmatprep.subr.bf16.mxu0 0
        %1148 = vmatpush1.bf16.msra.mxu0 0
        %1149 = vmatprep.subr.bf16.mxu0 0
        %1150 = vmatpush1.bf16.msra.mxu0 0
        %1151 = vmatprep.subr.bf16.mxu0 0
        %1152 = vmatpush1.bf16.msra.mxu0 0
        %1153 = vmatprep.subr.bf16.mxu0 0
        %1154 = vmatpush1.bf16.msra.mxu0 0
        %1155 = vmatprep.mubr.bf16.mxu0 0
        %1156 = vmatmul.mubr.bf16.gmra.mrb[0].mxu0 %v1035
        %v1157 = vpop.f32.mrb[0].mxu0
        %v1158 = vadd.f32 %v933, %v1157
        %v1159 = vpop.f32.mrb[0].mxu0
        %v1160 = vadd.f32 %v937, %v1159
        %v1161 = vpop.f32.mrb[0].mxu0
        %v1162 = vadd.f32 %v933, %v1161
        %v1163 = vpop.f32.mrb[0].mxu0
        %v1164 = vadd.f32 %v937, %v1163
        %1165 = vdwg.mxu0
        %1166 = vmatprep.subr.bf16.mxu0 %v1009
        %1167 = vmatpush1.bf16.msra.mxu0 %v1008
        %1168 = vmatprep.subr.bf16.mxu0 %v1017
        %1169 = vmatpush1.bf16.msra.mxu0 %v1016
        %1170 = vmatprep.subr.bf16.mxu0 0
        %1171 = vmatpush1.bf16.msra.mxu0 0
        %1172 = vmatprep.subr.bf16.mxu0 0
        %1173 = vmatpush1.bf16.msra.mxu0 0
        %1174 = vmatprep.subr.bf16.mxu0 0
        %1175 = vmatpush1.bf16.msra.mxu0 0
        %1176 = vmatprep.subr.bf16.mxu0 0
        %1177 = vmatpush1.bf16.msra.mxu0 0
        %1178 = vmatprep.subr.bf16.mxu0 0
        %1179 = vmatpush1.bf16.msra.mxu0 0
        %1180 = vmatprep.subr.bf16.mxu0 0
        %1181 = vmatpush1.bf16.msra.mxu0 0
        %1182 = vmatprep.subr.bf16.mxu0 0
        %1183 = vmatpush1.bf16.msra.mxu0 0
        %1184 = vmatprep.subr.bf16.mxu0 0
        %1185 = vmatpush1.bf16.msra.mxu0 0
        %1186 = vmatprep.subr.bf16.mxu0 0
        %1187 = vmatpush1.bf16.msra.mxu0 0
        %1188 = vmatprep.subr.bf16.mxu0 0
        %1189 = vmatpush1.bf16.msra.mxu0 0
        %1190 = vmatprep.subr.bf16.mxu0 0
        %1191 = vmatpush1.bf16.msra.mxu0 0
        %1192 = vmatprep.subr.bf16.mxu0 0
        %1193 = vmatpush1.bf16.msra.mxu0 0
        %1194 = vmatprep.subr.bf16.mxu0 0
        %1195 = vmatpush1.bf16.msra.mxu0 0
        %1196 = vmatprep.subr.bf16.mxu0 0
        %1197 = vmatpush1.bf16.msra.mxu0 0
        %1198 = vmatprep.mubr.bf16.mxu0 0
        %1199 = vmatmul.mubr.bf16.gmra.mrb[0].mxu0 %v1035
        %v1200 = vpop.f32.mrb[0].mxu0
        %v1201 = vadd.f32 %v941, %v1200
        %v1202 = vpop.f32.mrb[0].mxu0
        %v1203 = vadd.f32 %v945, %v1202
        %v1204 = vpop.f32.mrb[0].mxu0
        %v1205 = vadd.f32 %v941, %v1204
        %v1206 = vpop.f32.mrb[0].mxu0
        %v1207 = vadd.f32 %v945, %v1206
        %1208 = vdwg.mxu0
        %v1209 = vpack.c.bf16 %v1076, %v1072
        %v1210 = vpack.c.bf16 %v1078, %v1074
        %v1211 = vpack.c.bf16 %v1119, %v1115
        %v1212 = vpack.c.bf16 %v1121, %v1117
        %v1213 = vpack.c.bf16 %v1162, %v1158
        %v1214 = vpack.c.bf16 %v1164, %v1160
        %v1215 = vpack.c.bf16 %v1205, %v1201
        %v1216 = vpack.c.bf16 %v1207, %v1203
        %v1217 = vld [vmem:[%s7] sm:$0xff]
        %v1218 = vld [vmem:[%s7 + $0x8] sm:$0xff]
        %v1219 = vld [vmem:[%s7 + $0x10] sm:$0xff]
        %v1220 = vld [vmem:[%s7 + $0x18] sm:$0xff]
        %v1221 = vld [vmem:[%s7 + $0x20] sm:$0xff]
        %v1222 = vld [vmem:[%s7 + $0x28] sm:$0xff]
        %v1223 = vld [vmem:[%s7 + $0x30] sm:$0xff]
        %v1224 = vld [vmem:[%s7 + $0x38] sm:$0xff]
        %v1225 = vld [vmem:[%s7 + $0x40] sm:$0xff]
        %v1226 = vld [vmem:[%s7 + $0x48] sm:$0xff]
        %v1227 = vld [vmem:[%s7 + $0x50] sm:$0xff]
        %v1228 = vld [vmem:[%s7 + $0x58] sm:$0xff]
        %v1229 = vld [vmem:[%s7 + $0x60] sm:$0xff]
        %v1230 = vld [vmem:[%s7 + $0x68] sm:$0xff]
        %v1231 = vld [vmem:[%s7 + $0x70] sm:$0xff]
        %v1232 = vld [vmem:[%s7 + $0x78] sm:$0xff]
        %v1233 = vld [vmem:[%s8] sm:$0xff]
        %v1235 = vlaneseq
        %v1236 = vshrl.u32 %v1235, 7
        %v1237 = vsub.s32 0, %v1236
        %v1238 = vrot.slane %v1233, %v1237
        %v1239 = vlaneseq
        %v1240 = vshrl.u32 %v1239, 7
        %v1241 = vsub.s32 1, %v1240
        %v1242 = vrot.slane %v1233, %v1241
        %v1243 = vlaneseq
        %v1244 = vshrl.u32 %v1243, 7
        %v1245 = vsub.s32 2, %v1244
        %v1246 = vrot.slane %v1233, %v1245
        %v1247 = vlaneseq
        %v1248 = vshrl.u32 %v1247, 7
        %v1249 = vsub.s32 3, %v1248
        %v1250 = vrot.slane %v1233, %v1249
        %v1251 = vlaneseq
        %v1252 = vshrl.u32 %v1251, 7
        %v1253 = vsub.s32 4, %v1252
        %v1254 = vrot.slane %v1233, %v1253
        %v1255 = vlaneseq
        %v1256 = vshrl.u32 %v1255, 7
        %v1257 = vsub.s32 5, %v1256
        %v1258 = vrot.slane %v1233, %v1257
        %v1259 = vlaneseq
        %v1260 = vshrl.u32 %v1259, 7
        %v1261 = vsub.s32 6, %v1260
        %v1262 = vrot.slane %v1233, %v1261
        %v1263 = vlaneseq
        %v1264 = vshrl.u32 %v1263, 7
        %v1265 = vsub.s32 7, %v1264
        %v1266 = vrot.slane %v1233, %v1265
        %v1291 = vunpack.c.l.b16 %v1217
        %v1292 = vunpack.c.h.b16 %v1217
        %v1293 = vunpack.c.l.b16 %v1218
        %v1294 = vunpack.c.h.b16 %v1218
        %v1295 = vunpack.c.l.b16 %v1219
        %v1296 = vunpack.c.h.b16 %v1219
        %v1297 = vunpack.c.l.b16 %v1220
        %v1298 = vunpack.c.h.b16 %v1220
        %v1299 = vunpack.c.l.b16 %v1221
        %v1300 = vunpack.c.h.b16 %v1221
        %v1301 = vunpack.c.l.b16 %v1222
        %v1302 = vunpack.c.h.b16 %v1222
        %v1303 = vunpack.c.l.b16 %v1223
        %v1304 = vunpack.c.h.b16 %v1223
        %v1305 = vunpack.c.l.b16 %v1224
        %v1306 = vunpack.c.h.b16 %v1224
        %v1307 = vunpack.c.l.b16 %v1225
        %v1308 = vunpack.c.h.b16 %v1225
        %v1309 = vunpack.c.l.b16 %v1226
        %v1310 = vunpack.c.h.b16 %v1226
        %v1311 = vunpack.c.l.b16 %v1227
        %v1312 = vunpack.c.h.b16 %v1227
        %v1313 = vunpack.c.l.b16 %v1228
        %v1314 = vunpack.c.h.b16 %v1228
        %v1315 = vunpack.c.l.b16 %v1229
        %v1316 = vunpack.c.h.b16 %v1229
        %v1317 = vunpack.c.l.b16 %v1230
        %v1318 = vunpack.c.h.b16 %v1230
        %v1319 = vunpack.c.l.b16 %v1231
        %v1320 = vunpack.c.h.b16 %v1231
        %v1321 = vunpack.c.l.b16 %v1232
        %v1322 = vunpack.c.h.b16 %v1232
        %v1323 = vpack.c.b16 %v1299, %v1291
        %v1324 = vpack.c.b16 %v1300, %v1292
        %v1325 = vpack.c.b16 %v1301, %v1293
        %v1326 = vpack.c.b16 %v1302, %v1294
        %v1327 = vpack.c.b16 %v1303, %v1295
        %v1328 = vpack.c.b16 %v1304, %v1296
        %v1329 = vpack.c.b16 %v1305, %v1297
        %v1330 = vpack.c.b16 %v1306, %v1298
        %v1331 = vpack.c.b16 %v1315, %v1307
        %v1332 = vpack.c.b16 %v1316, %v1308
        %v1333 = vpack.c.b16 %v1317, %v1309
        %v1334 = vpack.c.b16 %v1318, %v1310
        %v1335 = vpack.c.b16 %v1319, %v1311
        %v1336 = vpack.c.b16 %v1320, %v1312
        %v1337 = vpack.c.b16 %v1321, %v1313
        %v1338 = vpack.c.b16 %v1322, %v1314
        %v1356 = vsel %vm712, %v573, 0
        %1358 = vmatprep.subr.bf16.mxu0 %v1324
        %1359 = vmatpush1.bf16.msra.mxu0 %v1323
        %1360 = vmatprep.subr.bf16.mxu0 %v1332
        %1361 = vmatpush1.bf16.msra.mxu0 %v1331
        %1362 = vmatprep.subr.bf16.mxu0 0
        %1363 = vmatpush1.bf16.msra.mxu0 0
        %1364 = vmatprep.subr.bf16.mxu0 0
        %1365 = vmatpush1.bf16.msra.mxu0 0
        %1366 = vmatprep.subr.bf16.mxu0 0
        %1367 = vmatpush1.bf16.msra.mxu0 0
        %1368 = vmatprep.subr.bf16.mxu0 0
        %1369 = vmatpush1.bf16.msra.mxu0 0
        %1370 = vmatprep.subr.bf16.mxu0 0
        %1371 = vmatpush1.bf16.msra.mxu0 0
        %1372 = vmatprep.subr.bf16.mxu0 0
        %1373 = vmatpush1.bf16.msra.mxu0 0
        %1374 = vmatprep.subr.bf16.mxu0 0
        %1375 = vmatpush1.bf16.msra.mxu0 0
        %1376 = vmatprep.subr.bf16.mxu0 0
        %1377 = vmatpush1.bf16.msra.mxu0 0
        %1378 = vmatprep.subr.bf16.mxu0 0
        %1379 = vmatpush1.bf16.msra.mxu0 0
        %1380 = vmatprep.subr.bf16.mxu0 0
        %1381 = vmatpush1.bf16.msra.mxu0 0
        %1382 = vmatprep.subr.bf16.mxu0 0
        %1383 = vmatpush1.bf16.msra.mxu0 0
        %1384 = vmatprep.subr.bf16.mxu0 0
        %1385 = vmatpush1.bf16.msra.mxu0 0
        %1386 = vmatprep.subr.bf16.mxu0 0
        %1387 = vmatpush1.bf16.msra.mxu0 0
        %1388 = vmatprep.subr.bf16.mxu0 0
        %1389 = vmatpush1.bf16.msra.mxu0 0
        %1390 = vmatprep.mubr.bf16.mxu0 0
        %1391 = vmatmul.mubr.bf16.gmra.mrb[0].mxu0 %v1356
        %v1392 = vpop.f32.mrb[0].mxu0
        %v1393 = vadd.f32 %v1238, %v1392
        %v1394 = vpop.f32.mrb[0].mxu0
        %v1395 = vadd.f32 %v1242, %v1394
        %v1396 = vpop.f32.mrb[0].mxu0
        %v1397 = vadd.f32 %v1238, %v1396
        %v1398 = vpop.f32.mrb[0].mxu0
        %v1399 = vadd.f32 %v1242, %v1398
        %1400 = vdwg.mxu0
        %1401 = vmatprep.subr.bf16.mxu0 %v1326
        %1402 = vmatpush1.bf16.msra.mxu0 %v1325
        %1403 = vmatprep.subr.bf16.mxu0 %v1334
        %1404 = vmatpush1.bf16.msra.mxu0 %v1333
        %1405 = vmatprep.subr.bf16.mxu0 0
        %1406 = vmatpush1.bf16.msra.mxu0 0
        %1407 = vmatprep.subr.bf16.mxu0 0
        %1408 = vmatpush1.bf16.msra.mxu0 0
        %1409 = vmatprep.subr.bf16.mxu0 0
        %1410 = vmatpush1.bf16.msra.mxu0 0
        %1411 = vmatprep.subr.bf16.mxu0 0
        %1412 = vmatpush1.bf16.msra.mxu0 0
        %1413 = vmatprep.subr.bf16.mxu0 0
        %1414 = vmatpush1.bf16.msra.mxu0 0
        %1415 = vmatprep.subr.bf16.mxu0 0
        %1416 = vmatpush1.bf16.msra.mxu0 0
        %1417 = vmatprep.subr.bf16.mxu0 0
        %1418 = vmatpush1.bf16.msra.mxu0 0
        %1419 = vmatprep.subr.bf16.mxu0 0
        %1420 = vmatpush1.bf16.msra.mxu0 0
        %1421 = vmatprep.subr.bf16.mxu0 0
        %1422 = vmatpush1.bf16.msra.mxu0 0
        %1423 = vmatprep.subr.bf16.mxu0 0
        %1424 = vmatpush1.bf16.msra.mxu0 0
        %1425 = vmatprep.subr.bf16.mxu0 0
        %1426 = vmatpush1.bf16.msra.mxu0 0
        %1427 = vmatprep.subr.bf16.mxu0 0
        %1428 = vmatpush1.bf16.msra.mxu0 0
        %1429 = vmatprep.subr.bf16.mxu0 0
        %1430 = vmatpush1.bf16.msra.mxu0 0
        %1431 = vmatprep.subr.bf16.mxu0 0
        %1432 = vmatpush1.bf16.msra.mxu0 0
        %1433 = vmatprep.mubr.bf16.mxu0 0
        %1434 = vmatmul.mubr.bf16.gmra.mrb[0].mxu0 %v1356
        %v1435 = vpop.f32.mrb[0].mxu0
        %v1436 = vadd.f32 %v1246, %v1435
        %v1437 = vpop.f32.mrb[0].mxu0
        %v1438 = vadd.f32 %v1250, %v1437
        %v1439 = vpop.f32.mrb[0].mxu0
        %v1440 = vadd.f32 %v1246, %v1439
        %v1441 = vpop.f32.mrb[0].mxu0
        %v1442 = vadd.f32 %v1250, %v1441
        %1443 = vdwg.mxu0
        %1444 = vmatprep.subr.bf16.mxu0 %v1328
        %1445 = vmatpush1.bf16.msra.mxu0 %v1327
        %1446 = vmatprep.subr.bf16.mxu0 %v1336
        %1447 = vmatpush1.bf16.msra.mxu0 %v1335
        %1448 = vmatprep.subr.bf16.mxu0 0
        %1449 = vmatpush1.bf16.msra.mxu0 0
        %1450 = vmatprep.subr.bf16.mxu0 0
        %1451 = vmatpush1.bf16.msra.mxu0 0
        %1452 = vmatprep.subr.bf16.mxu0 0
        %1453 = vmatpush1.bf16.msra.mxu0 0
        %1454 = vmatprep.subr.bf16.mxu0 0
        %1455 = vmatpush1.bf16.msra.mxu0 0
        %1456 = vmatprep.subr.bf16.mxu0 0
        %1457 = vmatpush1.bf16.msra.mxu0 0
        %1458 = vmatprep.subr.bf16.mxu0 0
        %1459 = vmatpush1.bf16.msra.mxu0 0
        %1460 = vmatprep.subr.bf16.mxu0 0
        %1461 = vmatpush1.bf16.msra.mxu0 0
        %1462 = vmatprep.subr.bf16.mxu0 0
        %1463 = vmatpush1.bf16.msra.mxu0 0
        %1464 = vmatprep.subr.bf16.mxu0 0
        %1465 = vmatpush1.bf16.msra.mxu0 0
        %1466 = vmatprep.subr.bf16.mxu0 0
        %1467 = vmatpush1.bf16.msra.mxu0 0
        %1468 = vmatprep.subr.bf16.mxu0 0
        %1469 = vmatpush1.bf16.msra.mxu0 0
        %1470 = vmatprep.subr.bf16.mxu0 0
        %1471 = vmatpush1.bf16.msra.mxu0 0
        %1472 = vmatprep.subr.bf16.mxu0 0
        %1473 = vmatpush1.bf16.msra.mxu0 0
        %1474 = vmatprep.subr.bf16.mxu0 0
        %1475 = vmatpush1.bf16.msra.mxu0 0
        %1476 = vmatprep.mubr.bf16.mxu0 0
        %1477 = vmatmul.mubr.bf16.gmra.mrb[0].mxu0 %v1356
        %v1478 = vpop.f32.mrb[0].mxu0
        %v1479 = vadd.f32 %v1254, %v1478
        %v1480 = vpop.f32.mrb[0].mxu0
        %v1481 = vadd.f32 %v1258, %v1480
        %v1482 = vpop.f32.mrb[0].mxu0
        %v1483 = vadd.f32 %v1254, %v1482
        %v1484 = vpop.f32.mrb[0].mxu0
        %v1485 = vadd.f32 %v1258, %v1484
        %1486 = vdwg.mxu0
        %1487 = vmatprep.subr.bf16.mxu0 %v1330
        %1488 = vmatpush1.bf16.msra.mxu0 %v1329
        %1489 = vmatprep.subr.bf16.mxu0 %v1338
        %1490 = vmatpush1.bf16.msra.mxu0 %v1337
        %1491 = vmatprep.subr.bf16.mxu0 0
        %1492 = vmatpush1.bf16.msra.mxu0 0
        %1493 = vmatprep.subr.bf16.mxu0 0
        %1494 = vmatpush1.bf16.msra.mxu0 0
        %1495 = vmatprep.subr.bf16.mxu0 0
        %1496 = vmatpush1.bf16.msra.mxu0 0
        %1497 = vmatprep.subr.bf16.mxu0 0
        %1498 = vmatpush1.bf16.msra.mxu0 0
        %1499 = vmatprep.subr.bf16.mxu0 0
        %1500 = vmatpush1.bf16.msra.mxu0 0
        %1501 = vmatprep.subr.bf16.mxu0 0
        %1502 = vmatpush1.bf16.msra.mxu0 0
        %1503 = vmatprep.subr.bf16.mxu0 0
        %1504 = vmatpush1.bf16.msra.mxu0 0
        %1505 = vmatprep.subr.bf16.mxu0 0
        %1506 = vmatpush1.bf16.msra.mxu0 0
        %1507 = vmatprep.subr.bf16.mxu0 0
        %1508 = vmatpush1.bf16.msra.mxu0 0
        %1509 = vmatprep.subr.bf16.mxu0 0
        %1510 = vmatpush1.bf16.msra.mxu0 0
        %1511 = vmatprep.subr.bf16.mxu0 0
        %1512 = vmatpush1.bf16.msra.mxu0 0
        %1513 = vmatprep.subr.bf16.mxu0 0
        %1514 = vmatpush1.bf16.msra.mxu0 0
        %1515 = vmatprep.subr.bf16.mxu0 0
        %1516 = vmatpush1.bf16.msra.mxu0 0
        %1517 = vmatprep.subr.bf16.mxu0 0
        %1518 = vmatpush1.bf16.msra.mxu0 0
        %1519 = vmatprep.mubr.bf16.mxu0 0
        %1520 = vmatmul.mubr.bf16.gmra.mrb[0].mxu0 %v1356
        %v1521 = vpop.f32.mrb[0].mxu0
        %v1522 = vadd.f32 %v1262, %v1521
        %v1523 = vpop.f32.mrb[0].mxu0
        %v1524 = vadd.f32 %v1266, %v1523
        %v1525 = vpop.f32.mrb[0].mxu0
        %v1526 = vadd.f32 %v1262, %v1525
        %v1527 = vpop.f32.mrb[0].mxu0
        %v1528 = vadd.f32 %v1266, %v1527
        %1529 = vdwg.mxu0
        %v1530 = vpack.c.bf16 %v1397, %v1393
        %v1531 = vpack.c.bf16 %v1399, %v1395
        %v1532 = vpack.c.bf16 %v1440, %v1436
        %v1533 = vpack.c.bf16 %v1442, %v1438
        %v1534 = vpack.c.bf16 %v1483, %v1479
        %v1535 = vpack.c.bf16 %v1485, %v1481
        %v1536 = vpack.c.bf16 %v1526, %v1522
        %v1537 = vpack.c.bf16 %v1528, %v1524
        %1538 = vmatprep.subr.bf16.mxu0 0
        %1539 = vmatpush1.bf16.xpose.msra.mxu0 %v1209
        %1540 = vmatprep.subr.bf16.mxu0 0
        %1541 = vmatpush1.bf16.xpose.msra.mxu0 0
        %1542 = vmatprep.subr.bf16.mxu0 0
        %1543 = vmatpush1.bf16.xpose.msra.mxu0 0
        %1544 = vmatprep.subr.bf16.mxu0 0
        %1545 = vmatpush1.bf16.xpose.msra.mxu0 0
        %1546 = vmatprep.subr.bf16.mxu0 0
        %1547 = vmatpush1.bf16.xpose.msra.mxu0 0
        %1548 = vmatprep.subr.bf16.mxu0 0
        %1549 = vmatpush1.bf16.xpose.msra.mxu0 0
        %1550 = vmatprep.subr.bf16.mxu0 0
        %1551 = vmatpush1.bf16.xpose.msra.mxu0 0
        %1552 = vmatprep.subr.bf16.mxu0 0
        %1553 = vmatpush1.bf16.xpose.msra.mxu0 0
        %1554 = vmatprep.subr.bf16.mxu0 0
        %1555 = vmatpush1.bf16.xpose.msra.mxu0 0
        %1556 = vmatprep.subr.bf16.mxu0 0
        %1557 = vmatpush1.bf16.xpose.msra.mxu0 0
        %1558 = vmatprep.subr.bf16.mxu0 0
        %1559 = vmatpush1.bf16.xpose.msra.mxu0 0
        %1560 = vmatprep.subr.bf16.mxu0 0
        %1561 = vmatpush1.bf16.xpose.msra.mxu0 0
        %1562 = vmatprep.subr.bf16.mxu0 0
        %1563 = vmatpush1.bf16.xpose.msra.mxu0 0
        %1564 = vmatprep.subr.bf16.mxu0 0
        %1565 = vmatpush1.bf16.xpose.msra.mxu0 0
        %1566 = vmatprep.subr.bf16.mxu0 0
        %1567 = vmatpush1.bf16.xpose.msra.mxu0 0
        %1568 = vmatprep.subr.bf16.mxu0 0
        %1569 = vmatpush1.bf16.xpose.msra.mxu0 0
        %1570 = vmatprep.mubr.bf16.mxu0 0
        %1571 = vmatmul.mubr.bf16.gmra.mrb[0].mxu0 %v888
        %v1572 = vpop.f32.mrb[0].mxu0
        %v1573 = vadd.f32 0.0, %v1572
        %v1574 = vpop.f32.mrb[0].mxu0
        %v1575 = vpop.f32.mrb[0].mxu0
        %v1576 = vadd.f32 0.0, %v1575
        %v1577 = vpop.f32.mrb[0].mxu0
        %1578 = vdwg.mxu0
        %vm1579 = vcmask 130048
        %v1580 = vsel %vm1579, %v1573, -inf
        %1581 = vmax.xlane.f32.xlu0 %v1580
        %v1582 = vpop.xlane.xlu0 %1581
        %v1583 = vsel %vm1579, %v1576, -inf
        %1584 = vmax.xlane.f32.xlu0 %v1583
        %v1585 = vpop.xlane.xlu0 %1584
        %v1586 = vsub.f32 %v1573, %v1582
        %v1587 = vsub.f32 %v1576, %v1585
        %v1588 = vmul.f32 %v1586, 1.442695
        %v1589 = vpow.pop %v1588
        %v1590 = vmul.f32 %v1587, 1.442695
        %v1591 = vpow.pop %v1590
        %v1592 = vsel %vm1579, %v1589, 0.0
        %1593 = vadd.xlane.f32.xlu0 %v1592
        %v1594 = vpop.xlane.xlu0 %1593
        %v1595 = vsel %vm1579, %v1591, 0.0
        %1596 = vadd.xlane.f32.xlu0 %v1595
        %v1597 = vpop.xlane.xlu0 %1596
        %v1598 = vrcp.pop %v1594
        %v1599 = vrcp.pop %v1597
        %v1600 = vmul.f32 %v1589, %v1598
        %v1601 = vmul.f32 %v1591, %v1599
        %v1602 = vpack.c.bf16 %v1601, %v1600
        %v1604 = vsel %vm1579, %v1602, 0
        %1606 = vmatprep.subr.bf16.mxu0 0
        %1607 = vmatpush1.bf16.msra.mxu0 %v1530
        %1608 = vmatprep.subr.bf16.mxu0 0
        %1609 = vmatpush1.bf16.msra.mxu0 0
        %1610 = vmatprep.subr.bf16.mxu0 0
        %1611 = vmatpush1.bf16.msra.mxu0 0
        %1612 = vmatprep.subr.bf16.mxu0 0
        %1613 = vmatpush1.bf16.msra.mxu0 0
        %1614 = vmatprep.subr.bf16.mxu0 0
        %1615 = vmatpush1.bf16.msra.mxu0 0
        %1616 = vmatprep.subr.bf16.mxu0 0
        %1617 = vmatpush1.bf16.msra.mxu0 0
        %1618 = vmatprep.subr.bf16.mxu0 0
        %1619 = vmatpush1.bf16.msra.mxu0 0
        %1620 = vmatprep.subr.bf16.mxu0 0
        %1621 = vmatpush1.bf16.msra.mxu0 0
        %1622 = vmatprep.subr.bf16.mxu0 0
        %1623 = vmatpush1.bf16.msra.mxu0 0
        %1624 = vmatprep.subr.bf16.mxu0 0
        %1625 = vmatpush1.bf16.msra.mxu0 0
        %1626 = vmatprep.subr.bf16.mxu0 0
        %1627 = vmatpush1.bf16.msra.mxu0 0
        %1628 = vmatprep.subr.bf16.mxu0 0
        %1629 = vmatpush1.bf16.msra.mxu0 0
        %1630 = vmatprep.subr.bf16.mxu0 0
        %1631 = vmatpush1.bf16.msra.mxu0 0
        %1632 = vmatprep.subr.bf16.mxu0 0
        %1633 = vmatpush1.bf16.msra.mxu0 0
        %1634 = vmatprep.subr.bf16.mxu0 0
        %1635 = vmatpush1.bf16.msra.mxu0 0
        %1636 = vmatprep.subr.bf16.mxu0 0
        %1637 = vmatpush1.bf16.msra.mxu0 0
        %1638 = vmatprep.mubr.bf16.mxu0 0
        %1639 = vmatmul.mubr.bf16.gmra.mrb[0].mxu0 %v1604
        %v1640 = vpop.f32.mrb[0].mxu0
        %v1641 = vadd.f32 0.0, %v1640
        %v1642 = vpop.f32.mrb[0].mxu0
        %v1643 = vpop.f32.mrb[0].mxu0
        %v1644 = vadd.f32 0.0, %v1643
        %v1645 = vpop.f32.mrb[0].mxu0
        %1646 = vdwg.mxu0
        %1647 = vst [vmem:[#allocation2] sm:$0xff] %v1641
        %1648 = vst [vmem:[#allocation2 + $0x40] sm:$0xff] %v1644
        %1649 = vmatprep.subr.bf16.mxu0 0
        %1650 = vmatpush1.bf16.xpose.msra.mxu0 %v1210
        %1651 = vmatprep.subr.bf16.mxu0 0
        %1652 = vmatpush1.bf16.xpose.msra.mxu0 0
        %1653 = vmatprep.subr.bf16.mxu0 0
        %1654 = vmatpush1.bf16.xpose.msra.mxu0 0
        %1655 = vmatprep.subr.bf16.mxu0 0
        %1656 = vmatpush1.bf16.xpose.msra.mxu0 0
        %1657 = vmatprep.subr.bf16.mxu0 0
        %1658 = vmatpush1.bf16.xpose.msra.mxu0 0
        %1659 = vmatprep.subr.bf16.mxu0 0
        %1660 = vmatpush1.bf16.xpose.msra.mxu0 0
        %1661 = vmatprep.subr.bf16.mxu0 0
        %1662 = vmatpush1.bf16.xpose.msra.mxu0 0
        %1663 = vmatprep.subr.bf16.mxu0 0
        %1664 = vmatpush1.bf16.xpose.msra.mxu0 0
        %1665 = vmatprep.subr.bf16.mxu0 0
        %1666 = vmatpush1.bf16.xpose.msra.mxu0 0
        %1667 = vmatprep.subr.bf16.mxu0 0
        %1668 = vmatpush1.bf16.xpose.msra.mxu0 0
        %1669 = vmatprep.subr.bf16.mxu0 0
        %1670 = vmatpush1.bf16.xpose.msra.mxu0 0
        %1671 = vmatprep.subr.bf16.mxu0 0
        %1672 = vmatpush1.bf16.xpose.msra.mxu0 0
        %1673 = vmatprep.subr.bf16.mxu0 0
        %1674 = vmatpush1.bf16.xpose.msra.mxu0 0
        %1675 = vmatprep.subr.bf16.mxu0 0
        %1676 = vmatpush1.bf16.xpose.msra.mxu0 0
        %1677 = vmatprep.subr.bf16.mxu0 0
        %1678 = vmatpush1.bf16.xpose.msra.mxu0 0
        %1679 = vmatprep.subr.bf16.mxu0 0
        %1680 = vmatpush1.bf16.xpose.msra.mxu0 0
        %1681 = vmatprep.mubr.bf16.mxu0 0
        %1682 = vmatmul.mubr.bf16.gmra.mrb[0].mxu0 %v889
        %v1683 = vpop.f32.mrb[0].mxu0
        %v1684 = vadd.f32 0.0, %v1683
        %v1685 = vpop.f32.mrb[0].mxu0
        %v1686 = vpop.f32.mrb[0].mxu0
        %v1687 = vadd.f32 0.0, %v1686
        %v1688 = vpop.f32.mrb[0].mxu0
        %1689 = vdwg.mxu0
        %v1690 = vsel %vm1579, %v1684, -inf
        %1691 = vmax.xlane.f32.xlu0 %v1690
        %v1692 = vpop.xlane.xlu0 %1691
        %v1693 = vsel %vm1579, %v1687, -inf
        %1694 = vmax.xlane.f32.xlu0 %v1693
        %v1695 = vpop.xlane.xlu0 %1694
        %v1696 = vsub.f32 %v1684, %v1692
        %v1697 = vsub.f32 %v1687, %v1695
        %v1698 = vmul.f32 %v1696, 1.442695
        %v1699 = vpow.pop %v1698
        %v1700 = vmul.f32 %v1697, 1.442695
        %v1701 = vpow.pop %v1700
        %v1702 = vsel %vm1579, %v1699, 0.0
        %1703 = vadd.xlane.f32.xlu0 %v1702
        %v1704 = vpop.xlane.xlu0 %1703
        %v1705 = vsel %vm1579, %v1701, 0.0
        %1706 = vadd.xlane.f32.xlu0 %v1705
        %v1707 = vpop.xlane.xlu0 %1706
        %v1708 = vrcp.pop %v1704
        %v1709 = vrcp.pop %v1707
        %v1710 = vmul.f32 %v1699, %v1708
        %v1711 = vmul.f32 %v1701, %v1709
        %v1712 = vpack.c.bf16 %v1711, %v1710
        %v1714 = vsel %vm1579, %v1712, 0
        %1716 = vmatprep.subr.bf16.mxu0 0
        %1717 = vmatpush1.bf16.msra.mxu0 %v1531
        %1718 = vmatprep.subr.bf16.mxu0 0
        %1719 = vmatpush1.bf16.msra.mxu0 0
        %1720 = vmatprep.subr.bf16.mxu0 0
        %1721 = vmatpush1.bf16.msra.mxu0 0
        %1722 = vmatprep.subr.bf16.mxu0 0
        %1723 = vmatpush1.bf16.msra.mxu0 0
        %1724 = vmatprep.subr.bf16.mxu0 0
        %1725 = vmatpush1.bf16.msra.mxu0 0
        %1726 = vmatprep.subr.bf16.mxu0 0
        %1727 = vmatpush1.bf16.msra.mxu0 0
        %1728 = vmatprep.subr.bf16.mxu0 0
        %1729 = vmatpush1.bf16.msra.mxu0 0
        %1730 = vmatprep.subr.bf16.mxu0 0
        %1731 = vmatpush1.bf16.msra.mxu0 0
        %1732 = vmatprep.subr.bf16.mxu0 0
        %1733 = vmatpush1.bf16.msra.mxu0 0
        %1734 = vmatprep.subr.bf16.mxu0 0
        %1735 = vmatpush1.bf16.msra.mxu0 0
        %1736 = vmatprep.subr.bf16.mxu0 0
        %1737 = vmatpush1.bf16.msra.mxu0 0
        %1738 = vmatprep.subr.bf16.mxu0 0
        %1739 = vmatpush1.bf16.msra.mxu0 0
        %1740 = vmatprep.subr.bf16.mxu0 0
        %1741 = vmatpush1.bf16.msra.mxu0 0
        %1742 = vmatprep.subr.bf16.mxu0 0
        %1743 = vmatpush1.bf16.msra.mxu0 0
        %1744 = vmatprep.subr.bf16.mxu0 0
        %1745 = vmatpush1.bf16.msra.mxu0 0
        %1746 = vmatprep.subr.bf16.mxu0 0
        %1747 = vmatpush1.bf16.msra.mxu0 0
        %1748 = vmatprep.mubr.bf16.mxu0 0
        %1749 = vmatmul.mubr.bf16.gmra.mrb[0].mxu0 %v1714
        %v1750 = vpop.f32.mrb[0].mxu0
        %v1751 = vadd.f32 0.0, %v1750
        %v1752 = vpop.f32.mrb[0].mxu0
        %v1753 = vpop.f32.mrb[0].mxu0
        %v1754 = vadd.f32 0.0, %v1753
        %v1755 = vpop.f32.mrb[0].mxu0
        %1756 = vdwg.mxu0
        %1757 = vst [vmem:[#allocation2 + $0x8] sm:$0xff] %v1751
        %1758 = vst [vmem:[#allocation2 + $0x48] sm:$0xff] %v1754
        %1759 = vmatprep.subr.bf16.mxu0 0
        %1760 = vmatpush1.bf16.xpose.msra.mxu0 %v1211
        %1761 = vmatprep.subr.bf16.mxu0 0
        %1762 = vmatpush1.bf16.xpose.msra.mxu0 0
        %1763 = vmatprep.subr.bf16.mxu0 0
        %1764 = vmatpush1.bf16.xpose.msra.mxu0 0
        %1765 = vmatprep.subr.bf16.mxu0 0
        %1766 = vmatpush1.bf16.xpose.msra.mxu0 0
        %1767 = vmatprep.subr.bf16.mxu0 0
        %1768 = vmatpush1.bf16.xpose.msra.mxu0 0
        %1769 = vmatprep.subr.bf16.mxu0 0
        %1770 = vmatpush1.bf16.xpose.msra.mxu0 0
        %1771 = vmatprep.subr.bf16.mxu0 0
        %1772 = vmatpush1.bf16.xpose.msra.mxu0 0
        %1773 = vmatprep.subr.bf16.mxu0 0
        %1774 = vmatpush1.bf16.xpose.msra.mxu0 0
        %1775 = vmatprep.subr.bf16.mxu0 0
        %1776 = vmatpush1.bf16.xpose.msra.mxu0 0
        %1777 = vmatprep.subr.bf16.mxu0 0
        %1778 = vmatpush1.bf16.xpose.msra.mxu0 0
        %1779 = vmatprep.subr.bf16.mxu0 0
        %1780 = vmatpush1.bf16.xpose.msra.mxu0 0
        %1781 = vmatprep.subr.bf16.mxu0 0
        %1782 = vmatpush1.bf16.xpose.msra.mxu0 0
        %1783 = vmatprep.subr.bf16.mxu0 0
        %1784 = vmatpush1.bf16.xpose.msra.mxu0 0
        %1785 = vmatprep.subr.bf16.mxu0 0
        %1786 = vmatpush1.bf16.xpose.msra.mxu0 0
        %1787 = vmatprep.subr.bf16.mxu0 0
        %1788 = vmatpush1.bf16.xpose.msra.mxu0 0
        %1789 = vmatprep.subr.bf16.mxu0 0
        %1790 = vmatpush1.bf16.xpose.msra.mxu0 0
        %1791 = vmatprep.mubr.bf16.mxu0 0
        %1792 = vmatmul.mubr.bf16.gmra.mrb[0].mxu0 %v890
        %v1793 = vpop.f32.mrb[0].mxu0
        %v1794 = vadd.f32 0.0, %v1793
        %v1795 = vpop.f32.mrb[0].mxu0
        %v1796 = vpop.f32.mrb[0].mxu0
        %v1797 = vadd.f32 0.0, %v1796
        %v1798 = vpop.f32.mrb[0].mxu0
        %1799 = vdwg.mxu0
        %v1800 = vsel %vm1579, %v1794, -inf
        %1801 = vmax.xlane.f32.xlu0 %v1800
        %v1802 = vpop.xlane.xlu0 %1801
        %v1803 = vsel %vm1579, %v1797, -inf
        %1804 = vmax.xlane.f32.xlu0 %v1803
        %v1805 = vpop.xlane.xlu0 %1804
        %v1806 = vsub.f32 %v1794, %v1802
        %v1807 = vsub.f32 %v1797, %v1805
        %v1808 = vmul.f32 %v1806, 1.442695
        %v1809 = vpow.pop %v1808
        %v1810 = vmul.f32 %v1807, 1.442695
        %v1811 = vpow.pop %v1810
        %v1812 = vsel %vm1579, %v1809, 0.0
        %1813 = vadd.xlane.f32.xlu0 %v1812
        %v1814 = vpop.xlane.xlu0 %1813
        %v1815 = vsel %vm1579, %v1811, 0.0
        %1816 = vadd.xlane.f32.xlu0 %v1815
        %v1817 = vpop.xlane.xlu0 %1816
        %v1818 = vrcp.pop %v1814
        %v1819 = vrcp.pop %v1817
        %v1820 = vmul.f32 %v1809, %v1818
        %v1821 = vmul.f32 %v1811, %v1819
        %v1822 = vpack.c.bf16 %v1821, %v1820
        %v1824 = vsel %vm1579, %v1822, 0
        %1826 = vmatprep.subr.bf16.mxu0 0
        %1827 = vmatpush1.bf16.msra.mxu0 %v1532
        %1828 = vmatprep.subr.bf16.mxu0 0
        %1829 = vmatpush1.bf16.msra.mxu0 0
        %1830 = vmatprep.subr.bf16.mxu0 0
        %1831 = vmatpush1.bf16.msra.mxu0 0
        %1832 = vmatprep.subr.bf16.mxu0 0
        %1833 = vmatpush1.bf16.msra.mxu0 0
        %1834 = vmatprep.subr.bf16.mxu0 0
        %1835 = vmatpush1.bf16.msra.mxu0 0
        %1836 = vmatprep.subr.bf16.mxu0 0
        %1837 = vmatpush1.bf16.msra.mxu0 0
        %1838 = vmatprep.subr.bf16.mxu0 0
        %1839 = vmatpush1.bf16.msra.mxu0 0
        %1840 = vmatprep.subr.bf16.mxu0 0
        %1841 = vmatpush1.bf16.msra.mxu0 0
        %1842 = vmatprep.subr.bf16.mxu0 0
        %1843 = vmatpush1.bf16.msra.mxu0 0
        %1844 = vmatprep.subr.bf16.mxu0 0
        %1845 = vmatpush1.bf16.msra.mxu0 0
        %1846 = vmatprep.subr.bf16.mxu0 0
        %1847 = vmatpush1.bf16.msra.mxu0 0
        %1848 = vmatprep.subr.bf16.mxu0 0
        %1849 = vmatpush1.bf16.msra.mxu0 0
        %1850 = vmatprep.subr.bf16.mxu0 0
        %1851 = vmatpush1.bf16.msra.mxu0 0
        %1852 = vmatprep.subr.bf16.mxu0 0
        %1853 = vmatpush1.bf16.msra.mxu0 0
        %1854 = vmatprep.subr.bf16.mxu0 0
        %1855 = vmatpush1.bf16.msra.mxu0 0
        %1856 = vmatprep.subr.bf16.mxu0 0
        %1857 = vmatpush1.bf16.msra.mxu0 0
        %1858 = vmatprep.mubr.bf16.mxu0 0
        %1859 = vmatmul.mubr.bf16.gmra.mrb[0].mxu0 %v1824
        %v1860 = vpop.f32.mrb[0].mxu0
        %v1861 = vadd.f32 0.0, %v1860
        %v1862 = vpop.f32.mrb[0].mxu0
        %v1863 = vpop.f32.mrb[0].mxu0
        %v1864 = vadd.f32 0.0, %v1863
        %v1865 = vpop.f32.mrb[0].mxu0
        %1866 = vdwg.mxu0
        %1867 = vst [vmem:[#allocation2 + $0x10] sm:$0xff] %v1861
        %1868 = vst [vmem:[#allocation2 + $0x50] sm:$0xff] %v1864
        %1869 = vmatprep.subr.bf16.mxu0 0
        %1870 = vmatpush1.bf16.xpose.msra.mxu0 %v1212
        %1871 = vmatprep.subr.bf16.mxu0 0
        %1872 = vmatpush1.bf16.xpose.msra.mxu0 0
        %1873 = vmatprep.subr.bf16.mxu0 0
        %1874 = vmatpush1.bf16.xpose.msra.mxu0 0
        %1875 = vmatprep.subr.bf16.mxu0 0
        %1876 = vmatpush1.bf16.xpose.msra.mxu0 0
        %1877 = vmatprep.subr.bf16.mxu0 0
        %1878 = vmatpush1.bf16.xpose.msra.mxu0 0
        %1879 = vmatprep.subr.bf16.mxu0 0
        %1880 = vmatpush1.bf16.xpose.msra.mxu0 0
        %1881 = vmatprep.subr.bf16.mxu0 0
        %1882 = vmatpush1.bf16.xpose.msra.mxu0 0
        %1883 = vmatprep.subr.bf16.mxu0 0
        %1884 = vmatpush1.bf16.xpose.msra.mxu0 0
        %1885 = vmatprep.subr.bf16.mxu0 0
        %1886 = vmatpush1.bf16.xpose.msra.mxu0 0
        %1887 = vmatprep.subr.bf16.mxu0 0
        %1888 = vmatpush1.bf16.xpose.msra.mxu0 0
        %1889 = vmatprep.subr.bf16.mxu0 0
        %1890 = vmatpush1.bf16.xpose.msra.mxu0 0
        %1891 = vmatprep.subr.bf16.mxu0 0
        %1892 = vmatpush1.bf16.xpose.msra.mxu0 0
        %1893 = vmatprep.subr.bf16.mxu0 0
        %1894 = vmatpush1.bf16.xpose.msra.mxu0 0
        %1895 = vmatprep.subr.bf16.mxu0 0
        %1896 = vmatpush1.bf16.xpose.msra.mxu0 0
        %1897 = vmatprep.subr.bf16.mxu0 0
        %1898 = vmatpush1.bf16.xpose.msra.mxu0 0
        %1899 = vmatprep.subr.bf16.mxu0 0
        %1900 = vmatpush1.bf16.xpose.msra.mxu0 0
        %1901 = vmatprep.mubr.bf16.mxu0 0
        %1902 = vmatmul.mubr.bf16.gmra.mrb[0].mxu0 %v891
        %v1903 = vpop.f32.mrb[0].mxu0
        %v1904 = vadd.f32 0.0, %v1903
        %v1905 = vpop.f32.mrb[0].mxu0
        %v1906 = vpop.f32.mrb[0].mxu0
        %v1907 = vadd.f32 0.0, %v1906
        %v1908 = vpop.f32.mrb[0].mxu0
        %1909 = vdwg.mxu0
        %v1910 = vsel %vm1579, %v1904, -inf
        %1911 = vmax.xlane.f32.xlu0 %v1910
        %v1912 = vpop.xlane.xlu0 %1911
        %v1913 = vsel %vm1579, %v1907, -inf
        %1914 = vmax.xlane.f32.xlu0 %v1913
        %v1915 = vpop.xlane.xlu0 %1914
        %v1916 = vsub.f32 %v1904, %v1912
        %v1917 = vsub.f32 %v1907, %v1915
        %v1918 = vmul.f32 %v1916, 1.442695
        %v1919 = vpow.pop %v1918
        %v1920 = vmul.f32 %v1917, 1.442695
        %v1921 = vpow.pop %v1920
        %v1922 = vsel %vm1579, %v1919, 0.0
        %1923 = vadd.xlane.f32.xlu0 %v1922
        %v1924 = vpop.xlane.xlu0 %1923
        %v1925 = vsel %vm1579, %v1921, 0.0
        %1926 = vadd.xlane.f32.xlu0 %v1925
        %v1927 = vpop.xlane.xlu0 %1926
        %v1928 = vrcp.pop %v1924
        %v1929 = vrcp.pop %v1927
        %v1930 = vmul.f32 %v1919, %v1928
        %v1931 = vmul.f32 %v1921, %v1929
        %v1932 = vpack.c.bf16 %v1931, %v1930
        %v1934 = vsel %vm1579, %v1932, 0
        %1936 = vmatprep.subr.bf16.mxu0 0
        %1937 = vmatpush1.bf16.msra.mxu0 %v1533
        %1938 = vmatprep.subr.bf16.mxu0 0
        %1939 = vmatpush1.bf16.msra.mxu0 0
        %1940 = vmatprep.subr.bf16.mxu0 0
        %1941 = vmatpush1.bf16.msra.mxu0 0
        %1942 = vmatprep.subr.bf16.mxu0 0
        %1943 = vmatpush1.bf16.msra.mxu0 0
        %1944 = vmatprep.subr.bf16.mxu0 0
        %1945 = vmatpush1.bf16.msra.mxu0 0
        %1946 = vmatprep.subr.bf16.mxu0 0
        %1947 = vmatpush1.bf16.msra.mxu0 0
        %1948 = vmatprep.subr.bf16.mxu0 0
        %1949 = vmatpush1.bf16.msra.mxu0 0
        %1950 = vmatprep.subr.bf16.mxu0 0
        %1951 = vmatpush1.bf16.msra.mxu0 0
        %1952 = vmatprep.subr.bf16.mxu0 0
        %1953 = vmatpush1.bf16.msra.mxu0 0
        %1954 = vmatprep.subr.bf16.mxu0 0
        %1955 = vmatpush1.bf16.msra.mxu0 0
        %1956 = vmatprep.subr.bf16.mxu0 0
        %1957 = vmatpush1.bf16.msra.mxu0 0
        %1958 = vmatprep.subr.bf16.mxu0 0
        %1959 = vmatpush1.bf16.msra.mxu0 0
        %1960 = vmatprep.subr.bf16.mxu0 0
        %1961 = vmatpush1.bf16.msra.mxu0 0
        %1962 = vmatprep.subr.bf16.mxu0 0
        %1963 = vmatpush1.bf16.msra.mxu0 0
        %1964 = vmatprep.subr.bf16.mxu0 0
        %1965 = vmatpush1.bf16.msra.mxu0 0
        %1966 = vmatprep.subr.bf16.mxu0 0
        %1967 = vmatpush1.bf16.msra.mxu0 0
        %1968 = vmatprep.mubr.bf16.mxu0 0
        %1969 = vmatmul.mubr.bf16.gmra.mrb[0].mxu0 %v1934
        %v1970 = vpop.f32.mrb[0].mxu0
        %v1971 = vadd.f32 0.0, %v1970
        %v1972 = vpop.f32.mrb[0].mxu0
        %v1973 = vpop.f32.mrb[0].mxu0
        %v1974 = vadd.f32 0.0, %v1973
        %v1975 = vpop.f32.mrb[0].mxu0
        %1976 = vdwg.mxu0
        %1977 = vst [vmem:[#allocation2 + $0x18] sm:$0xff] %v1971
        %1978 = vst [vmem:[#allocation2 + $0x58] sm:$0xff] %v1974
        %1979 = vmatprep.subr.bf16.mxu0 0
        %1980 = vmatpush1.bf16.xpose.msra.mxu0 %v1213
        %1981 = vmatprep.subr.bf16.mxu0 0
        %1982 = vmatpush1.bf16.xpose.msra.mxu0 0
        %1983 = vmatprep.subr.bf16.mxu0 0
        %1984 = vmatpush1.bf16.xpose.msra.mxu0 0
        %1985 = vmatprep.subr.bf16.mxu0 0
        %1986 = vmatpush1.bf16.xpose.msra.mxu0 0
        %1987 = vmatprep.subr.bf16.mxu0 0
        %1988 = vmatpush1.bf16.xpose.msra.mxu0 0
        %1989 = vmatprep.subr.bf16.mxu0 0
        %1990 = vmatpush1.bf16.xpose.msra.mxu0 0
        %1991 = vmatprep.subr.bf16.mxu0 0
        %1992 = vmatpush1.bf16.xpose.msra.mxu0 0
        %1993 = vmatprep.subr.bf16.mxu0 0
        %1994 = vmatpush1.bf16.xpose.msra.mxu0 0
        %1995 = vmatprep.subr.bf16.mxu0 0
        %1996 = vmatpush1.bf16.xpose.msra.mxu0 0
        %1997 = vmatprep.subr.bf16.mxu0 0
        %1998 = vmatpush1.bf16.xpose.msra.mxu0 0
        %1999 = vmatprep.subr.bf16.mxu0 0
        %2000 = vmatpush1.bf16.xpose.msra.mxu0 0
        %2001 = vmatprep.subr.bf16.mxu0 0
        %2002 = vmatpush1.bf16.xpose.msra.mxu0 0
        %2003 = vmatprep.subr.bf16.mxu0 0
        %2004 = vmatpush1.bf16.xpose.msra.mxu0 0
        %2005 = vmatprep.subr.bf16.mxu0 0
        %2006 = vmatpush1.bf16.xpose.msra.mxu0 0
        %2007 = vmatprep.subr.bf16.mxu0 0
        %2008 = vmatpush1.bf16.xpose.msra.mxu0 0
        %2009 = vmatprep.subr.bf16.mxu0 0
        %2010 = vmatpush1.bf16.xpose.msra.mxu0 0
        %2011 = vmatprep.mubr.bf16.mxu0 0
        %2012 = vmatmul.mubr.bf16.gmra.mrb[0].mxu0 %v892
        %v2013 = vpop.f32.mrb[0].mxu0
        %v2014 = vadd.f32 0.0, %v2013
        %v2015 = vpop.f32.mrb[0].mxu0
        %v2016 = vpop.f32.mrb[0].mxu0
        %v2017 = vadd.f32 0.0, %v2016
        %v2018 = vpop.f32.mrb[0].mxu0
        %2019 = vdwg.mxu0
        %v2020 = vsel %vm1579, %v2014, -inf
        %2021 = vmax.xlane.f32.xlu0 %v2020
        %v2022 = vpop.xlane.xlu0 %2021
        %v2023 = vsel %vm1579, %v2017, -inf
        %2024 = vmax.xlane.f32.xlu0 %v2023
        %v2025 = vpop.xlane.xlu0 %2024
        %v2026 = vsub.f32 %v2014, %v2022
        %v2027 = vsub.f32 %v2017, %v2025
        %v2028 = vmul.f32 %v2026, 1.442695
        %v2029 = vpow.pop %v2028
        %v2030 = vmul.f32 %v2027, 1.442695
        %v2031 = vpow.pop %v2030
        %v2032 = vsel %vm1579, %v2029, 0.0
        %2033 = vadd.xlane.f32.xlu0 %v2032
        %v2034 = vpop.xlane.xlu0 %2033
        %v2035 = vsel %vm1579, %v2031, 0.0
        %2036 = vadd.xlane.f32.xlu0 %v2035
        %v2037 = vpop.xlane.xlu0 %2036
        %v2038 = vrcp.pop %v2034
        %v2039 = vrcp.pop %v2037
        %v2040 = vmul.f32 %v2029, %v2038
        %v2041 = vmul.f32 %v2031, %v2039
        %v2042 = vpack.c.bf16 %v2041, %v2040
        %v2044 = vsel %vm1579, %v2042, 0
        %2046 = vmatprep.subr.bf16.mxu0 0
        %2047 = vmatpush1.bf16.msra.mxu0 %v1534
        %2048 = vmatprep.subr.bf16.mxu0 0
        %2049 = vmatpush1.bf16.msra.mxu0 0
        %2050 = vmatprep.subr.bf16.mxu0 0
        %2051 = vmatpush1.bf16.msra.mxu0 0
        %2052 = vmatprep.subr.bf16.mxu0 0
        %2053 = vmatpush1.bf16.msra.mxu0 0
        %2054 = vmatprep.subr.bf16.mxu0 0
        %2055 = vmatpush1.bf16.msra.mxu0 0
        %2056 = vmatprep.subr.bf16.mxu0 0
        %2057 = vmatpush1.bf16.msra.mxu0 0
        %2058 = vmatprep.subr.bf16.mxu0 0
        %2059 = vmatpush1.bf16.msra.mxu0 0
        %2060 = vmatprep.subr.bf16.mxu0 0
        %2061 = vmatpush1.bf16.msra.mxu0 0
        %2062 = vmatprep.subr.bf16.mxu0 0
        %2063 = vmatpush1.bf16.msra.mxu0 0
        %2064 = vmatprep.subr.bf16.mxu0 0
        %2065 = vmatpush1.bf16.msra.mxu0 0
        %2066 = vmatprep.subr.bf16.mxu0 0
        %2067 = vmatpush1.bf16.msra.mxu0 0
        %2068 = vmatprep.subr.bf16.mxu0 0
        %2069 = vmatpush1.bf16.msra.mxu0 0
        %2070 = vmatprep.subr.bf16.mxu0 0
        %2071 = vmatpush1.bf16.msra.mxu0 0
        %2072 = vmatprep.subr.bf16.mxu0 0
        %2073 = vmatpush1.bf16.msra.mxu0 0
        %2074 = vmatprep.subr.bf16.mxu0 0
        %2075 = vmatpush1.bf16.msra.mxu0 0
        %2076 = vmatprep.subr.bf16.mxu0 0
        %2077 = vmatpush1.bf16.msra.mxu0 0
        %2078 = vmatprep.mubr.bf16.mxu0 0
        %2079 = vmatmul.mubr.bf16.gmra.mrb[0].mxu0 %v2044
        %v2080 = vpop.f32.mrb[0].mxu0
        %v2081 = vadd.f32 0.0, %v2080
        %v2082 = vpop.f32.mrb[0].mxu0
        %v2083 = vpop.f32.mrb[0].mxu0
        %v2084 = vadd.f32 0.0, %v2083
        %v2085 = vpop.f32.mrb[0].mxu0
        %2086 = vdwg.mxu0
        %2087 = vst [vmem:[#allocation2 + $0x20] sm:$0xff] %v2081
        %2088 = vst [vmem:[#allocation2 + $0x60] sm:$0xff] %v2084
        %2089 = vmatprep.subr.bf16.mxu0 0
        %2090 = vmatpush1.bf16.xpose.msra.mxu0 %v1214
        %2091 = vmatprep.subr.bf16.mxu0 0
        %2092 = vmatpush1.bf16.xpose.msra.mxu0 0
        %2093 = vmatprep.subr.bf16.mxu0 0
        %2094 = vmatpush1.bf16.xpose.msra.mxu0 0
        %2095 = vmatprep.subr.bf16.mxu0 0
        %2096 = vmatpush1.bf16.xpose.msra.mxu0 0
        %2097 = vmatprep.subr.bf16.mxu0 0
        %2098 = vmatpush1.bf16.xpose.msra.mxu0 0
        %2099 = vmatprep.subr.bf16.mxu0 0
        %2100 = vmatpush1.bf16.xpose.msra.mxu0 0
        %2101 = vmatprep.subr.bf16.mxu0 0
        %2102 = vmatpush1.bf16.xpose.msra.mxu0 0
        %2103 = vmatprep.subr.bf16.mxu0 0
        %2104 = vmatpush1.bf16.xpose.msra.mxu0 0
        %2105 = vmatprep.subr.bf16.mxu0 0
        %2106 = vmatpush1.bf16.xpose.msra.mxu0 0
        %2107 = vmatprep.subr.bf16.mxu0 0
        %2108 = vmatpush1.bf16.xpose.msra.mxu0 0
        %2109 = vmatprep.subr.bf16.mxu0 0
        %2110 = vmatpush1.bf16.xpose.msra.mxu0 0
        %2111 = vmatprep.subr.bf16.mxu0 0
        %2112 = vmatpush1.bf16.xpose.msra.mxu0 0
        %2113 = vmatprep.subr.bf16.mxu0 0
        %2114 = vmatpush1.bf16.xpose.msra.mxu0 0
        %2115 = vmatprep.subr.bf16.mxu0 0
        %2116 = vmatpush1.bf16.xpose.msra.mxu0 0
        %2117 = vmatprep.subr.bf16.mxu0 0
        %2118 = vmatpush1.bf16.xpose.msra.mxu0 0
        %2119 = vmatprep.subr.bf16.mxu0 0
        %2120 = vmatpush1.bf16.xpose.msra.mxu0 0
        %2121 = vmatprep.mubr.bf16.mxu0 0
        %2122 = vmatmul.mubr.bf16.gmra.mrb[0].mxu0 %v893
        %v2123 = vpop.f32.mrb[0].mxu0
        %v2124 = vadd.f32 0.0, %v2123
        %v2125 = vpop.f32.mrb[0].mxu0
        %v2126 = vpop.f32.mrb[0].mxu0
        %v2127 = vadd.f32 0.0, %v2126
        %v2128 = vpop.f32.mrb[0].mxu0
        %2129 = vdwg.mxu0
        %v2130 = vsel %vm1579, %v2124, -inf
        %2131 = vmax.xlane.f32.xlu0 %v2130
        %v2132 = vpop.xlane.xlu0 %2131
        %v2133 = vsel %vm1579, %v2127, -inf
        %2134 = vmax.xlane.f32.xlu0 %v2133
        %v2135 = vpop.xlane.xlu0 %2134
        %v2136 = vsub.f32 %v2124, %v2132
        %v2137 = vsub.f32 %v2127, %v2135
        %v2138 = vmul.f32 %v2136, 1.442695
        %v2139 = vpow.pop %v2138
        %v2140 = vmul.f32 %v2137, 1.442695
        %v2141 = vpow.pop %v2140
        %v2142 = vsel %vm1579, %v2139, 0.0
        %2143 = vadd.xlane.f32.xlu0 %v2142
        %v2144 = vpop.xlane.xlu0 %2143
        %v2145 = vsel %vm1579, %v2141, 0.0
        %2146 = vadd.xlane.f32.xlu0 %v2145
        %v2147 = vpop.xlane.xlu0 %2146
        %v2148 = vrcp.pop %v2144
        %v2149 = vrcp.pop %v2147
        %v2150 = vmul.f32 %v2139, %v2148
        %v2151 = vmul.f32 %v2141, %v2149
        %v2152 = vpack.c.bf16 %v2151, %v2150
        %v2154 = vsel %vm1579, %v2152, 0
        %2156 = vmatprep.subr.bf16.mxu0 0
        %2157 = vmatpush1.bf16.msra.mxu0 %v1535
        %2158 = vmatprep.subr.bf16.mxu0 0
        %2159 = vmatpush1.bf16.msra.mxu0 0
        %2160 = vmatprep.subr.bf16.mxu0 0
        %2161 = vmatpush1.bf16.msra.mxu0 0
        %2162 = vmatprep.subr.bf16.mxu0 0
        %2163 = vmatpush1.bf16.msra.mxu0 0
        %2164 = vmatprep.subr.bf16.mxu0 0
        %2165 = vmatpush1.bf16.msra.mxu0 0
        %2166 = vmatprep.subr.bf16.mxu0 0
        %2167 = vmatpush1.bf16.msra.mxu0 0
        %2168 = vmatprep.subr.bf16.mxu0 0
        %2169 = vmatpush1.bf16.msra.mxu0 0
        %2170 = vmatprep.subr.bf16.mxu0 0
        %2171 = vmatpush1.bf16.msra.mxu0 0
        %2172 = vmatprep.subr.bf16.mxu0 0
        %2173 = vmatpush1.bf16.msra.mxu0 0
        %2174 = vmatprep.subr.bf16.mxu0 0
        %2175 = vmatpush1.bf16.msra.mxu0 0
        %2176 = vmatprep.subr.bf16.mxu0 0
        %2177 = vmatpush1.bf16.msra.mxu0 0
        %2178 = vmatprep.subr.bf16.mxu0 0
        %2179 = vmatpush1.bf16.msra.mxu0 0
        %2180 = vmatprep.subr.bf16.mxu0 0
        %2181 = vmatpush1.bf16.msra.mxu0 0
        %2182 = vmatprep.subr.bf16.mxu0 0
        %2183 = vmatpush1.bf16.msra.mxu0 0
        %2184 = vmatprep.subr.bf16.mxu0 0
        %2185 = vmatpush1.bf16.msra.mxu0 0
        %2186 = vmatprep.subr.bf16.mxu0 0
        %2187 = vmatpush1.bf16.msra.mxu0 0
        %2188 = vmatprep.mubr.bf16.mxu0 0
        %2189 = vmatmul.mubr.bf16.gmra.mrb[0].mxu0 %v2154
        %v2190 = vpop.f32.mrb[0].mxu0
        %v2191 = vadd.f32 0.0, %v2190
        %v2192 = vpop.f32.mrb[0].mxu0
        %v2193 = vpop.f32.mrb[0].mxu0
        %v2194 = vadd.f32 0.0, %v2193
        %v2195 = vpop.f32.mrb[0].mxu0
        %2196 = vdwg.mxu0
        %2197 = vst [vmem:[#allocation2 + $0x28] sm:$0xff] %v2191
        %2198 = vst [vmem:[#allocation2 + $0x68] sm:$0xff] %v2194
        %2199 = vmatprep.subr.bf16.mxu0 0
        %2200 = vmatpush1.bf16.xpose.msra.mxu0 %v1215
        %2201 = vmatprep.subr.bf16.mxu0 0
        %2202 = vmatpush1.bf16.xpose.msra.mxu0 0
        %2203 = vmatprep.subr.bf16.mxu0 0
        %2204 = vmatpush1.bf16.xpose.msra.mxu0 0
        %2205 = vmatprep.subr.bf16.mxu0 0
        %2206 = vmatpush1.bf16.xpose.msra.mxu0 0
        %2207 = vmatprep.subr.bf16.mxu0 0
        %2208 = vmatpush1.bf16.xpose.msra.mxu0 0
        %2209 = vmatprep.subr.bf16.mxu0 0
        %2210 = vmatpush1.bf16.xpose.msra.mxu0 0
        %2211 = vmatprep.subr.bf16.mxu0 0
        %2212 = vmatpush1.bf16.xpose.msra.mxu0 0
        %2213 = vmatprep.subr.bf16.mxu0 0
        %2214 = vmatpush1.bf16.xpose.msra.mxu0 0
        %2215 = vmatprep.subr.bf16.mxu0 0
        %2216 = vmatpush1.bf16.xpose.msra.mxu0 0
        %2217 = vmatprep.subr.bf16.mxu0 0
        %2218 = vmatpush1.bf16.xpose.msra.mxu0 0
        %2219 = vmatprep.subr.bf16.mxu0 0
        %2220 = vmatpush1.bf16.xpose.msra.mxu0 0
        %2221 = vmatprep.subr.bf16.mxu0 0
        %2222 = vmatpush1.bf16.xpose.msra.mxu0 0
        %2223 = vmatprep.subr.bf16.mxu0 0
        %2224 = vmatpush1.bf16.xpose.msra.mxu0 0
        %2225 = vmatprep.subr.bf16.mxu0 0
        %2226 = vmatpush1.bf16.xpose.msra.mxu0 0
        %2227 = vmatprep.subr.bf16.mxu0 0
        %2228 = vmatpush1.bf16.xpose.msra.mxu0 0
        %2229 = vmatprep.subr.bf16.mxu0 0
        %2230 = vmatpush1.bf16.xpose.msra.mxu0 0
        %2231 = vmatprep.mubr.bf16.mxu0 0
        %2232 = vmatmul.mubr.bf16.gmra.mrb[0].mxu0 %v894
        %v2233 = vpop.f32.mrb[0].mxu0
        %v2234 = vadd.f32 0.0, %v2233
        %v2235 = vpop.f32.mrb[0].mxu0
        %v2236 = vpop.f32.mrb[0].mxu0
        %v2237 = vadd.f32 0.0, %v2236
        %v2238 = vpop.f32.mrb[0].mxu0
        %2239 = vdwg.mxu0
        %v2240 = vsel %vm1579, %v2234, -inf
        %2241 = vmax.xlane.f32.xlu0 %v2240
        %v2242 = vpop.xlane.xlu0 %2241
        %v2243 = vsel %vm1579, %v2237, -inf
        %2244 = vmax.xlane.f32.xlu0 %v2243
        %v2245 = vpop.xlane.xlu0 %2244
        %v2246 = vsub.f32 %v2234, %v2242
        %v2247 = vsub.f32 %v2237, %v2245
        %v2248 = vmul.f32 %v2246, 1.442695
        %v2249 = vpow.pop %v2248
        %v2250 = vmul.f32 %v2247, 1.442695
        %v2251 = vpow.pop %v2250
        %v2252 = vsel %vm1579, %v2249, 0.0
        %2253 = vadd.xlane.f32.xlu0 %v2252
        %v2254 = vpop.xlane.xlu0 %2253
        %v2255 = vsel %vm1579, %v2251, 0.0
        %2256 = vadd.xlane.f32.xlu0 %v2255
        %v2257 = vpop.xlane.xlu0 %2256
        %v2258 = vrcp.pop %v2254
        %v2259 = vrcp.pop %v2257
        %v2260 = vmul.f32 %v2249, %v2258
        %v2261 = vmul.f32 %v2251, %v2259
        %v2262 = vpack.c.bf16 %v2261, %v2260
        %v2264 = vsel %vm1579, %v2262, 0
        %2266 = vmatprep.subr.bf16.mxu0 0
        %2267 = vmatpush1.bf16.msra.mxu0 %v1536
        %2268 = vmatprep.subr.bf16.mxu0 0
        %2269 = vmatpush1.bf16.msra.mxu0 0
        %2270 = vmatprep.subr.bf16.mxu0 0
        %2271 = vmatpush1.bf16.msra.mxu0 0
        %2272 = vmatprep.subr.bf16.mxu0 0
        %2273 = vmatpush1.bf16.msra.mxu0 0
        %2274 = vmatprep.subr.bf16.mxu0 0
        %2275 = vmatpush1.bf16.msra.mxu0 0
        %2276 = vmatprep.subr.bf16.mxu0 0
        %2277 = vmatpush1.bf16.msra.mxu0 0
        %2278 = vmatprep.subr.bf16.mxu0 0
        %2279 = vmatpush1.bf16.msra.mxu0 0
        %2280 = vmatprep.subr.bf16.mxu0 0
        %2281 = vmatpush1.bf16.msra.mxu0 0
        %2282 = vmatprep.subr.bf16.mxu0 0
        %2283 = vmatpush1.bf16.msra.mxu0 0
        %2284 = vmatprep.subr.bf16.mxu0 0
        %2285 = vmatpush1.bf16.msra.mxu0 0
        %2286 = vmatprep.subr.bf16.mxu0 0
        %2287 = vmatpush1.bf16.msra.mxu0 0
        %2288 = vmatprep.subr.bf16.mxu0 0
        %2289 = vmatpush1.bf16.msra.mxu0 0
        %2290 = vmatprep.subr.bf16.mxu0 0
        %2291 = vmatpush1.bf16.msra.mxu0 0
        %2292 = vmatprep.subr.bf16.mxu0 0
        %2293 = vmatpush1.bf16.msra.mxu0 0
        %2294 = vmatprep.subr.bf16.mxu0 0
        %2295 = vmatpush1.bf16.msra.mxu0 0
        %2296 = vmatprep.subr.bf16.mxu0 0
        %2297 = vmatpush1.bf16.msra.mxu0 0
        %2298 = vmatprep.mubr.bf16.mxu0 0
        %2299 = vmatmul.mubr.bf16.gmra.mrb[0].mxu0 %v2264
        %v2300 = vpop.f32.mrb[0].mxu0
        %v2301 = vadd.f32 0.0, %v2300
        %v2302 = vpop.f32.mrb[0].mxu0
        %v2303 = vpop.f32.mrb[0].mxu0
        %v2304 = vadd.f32 0.0, %v2303
        %v2305 = vpop.f32.mrb[0].mxu0
        %2306 = vdwg.mxu0
        %2307 = vst [vmem:[#allocation2 + $0x30] sm:$0xff] %v2301
        %2308 = vst [vmem:[#allocation2 + $0x70] sm:$0xff] %v2304
        %2309 = vmatprep.subr.bf16.mxu0 0
        %2310 = vmatpush1.bf16.xpose.msra.mxu0 %v1216
        %2311 = vmatprep.subr.bf16.mxu0 0
        %2312 = vmatpush1.bf16.xpose.msra.mxu0 0
        %2313 = vmatprep.subr.bf16.mxu0 0
        %2314 = vmatpush1.bf16.xpose.msra.mxu0 0
        %2315 = vmatprep.subr.bf16.mxu0 0
        %2316 = vmatpush1.bf16.xpose.msra.mxu0 0
        %2317 = vmatprep.subr.bf16.mxu0 0
        %2318 = vmatpush1.bf16.xpose.msra.mxu0 0
        %2319 = vmatprep.subr.bf16.mxu0 0
        %2320 = vmatpush1.bf16.xpose.msra.mxu0 0
        %2321 = vmatprep.subr.bf16.mxu0 0
        %2322 = vmatpush1.bf16.xpose.msra.mxu0 0
        %2323 = vmatprep.subr.bf16.mxu0 0
        %2324 = vmatpush1.bf16.xpose.msra.mxu0 0
        %2325 = vmatprep.subr.bf16.mxu0 0
        %2326 = vmatpush1.bf16.xpose.msra.mxu0 0
        %2327 = vmatprep.subr.bf16.mxu0 0
        %2328 = vmatpush1.bf16.xpose.msra.mxu0 0
        %2329 = vmatprep.subr.bf16.mxu0 0
        %2330 = vmatpush1.bf16.xpose.msra.mxu0 0
        %2331 = vmatprep.subr.bf16.mxu0 0
        %2332 = vmatpush1.bf16.xpose.msra.mxu0 0
        %2333 = vmatprep.subr.bf16.mxu0 0
        %2334 = vmatpush1.bf16.xpose.msra.mxu0 0
        %2335 = vmatprep.subr.bf16.mxu0 0
        %2336 = vmatpush1.bf16.xpose.msra.mxu0 0
        %2337 = vmatprep.subr.bf16.mxu0 0
        %2338 = vmatpush1.bf16.xpose.msra.mxu0 0
        %2339 = vmatprep.subr.bf16.mxu0 0
        %2340 = vmatpush1.bf16.xpose.msra.mxu0 0
        %2341 = vmatprep.mubr.bf16.mxu0 0
        %2342 = vmatmul.mubr.bf16.gmra.mrb[0].mxu0 %v895
        %v2343 = vpop.f32.mrb[0].mxu0
        %v2344 = vadd.f32 0.0, %v2343
        %v2345 = vpop.f32.mrb[0].mxu0
        %v2346 = vpop.f32.mrb[0].mxu0
        %v2347 = vadd.f32 0.0, %v2346
        %v2348 = vpop.f32.mrb[0].mxu0
        %2349 = vdwg.mxu0
        %v2350 = vsel %vm1579, %v2344, -inf
        %2351 = vmax.xlane.f32.xlu0 %v2350
        %v2352 = vpop.xlane.xlu0 %2351
        %v2353 = vsel %vm1579, %v2347, -inf
        %2354 = vmax.xlane.f32.xlu0 %v2353
        %v2355 = vpop.xlane.xlu0 %2354
        %v2356 = vsub.f32 %v2344, %v2352
        %v2357 = vsub.f32 %v2347, %v2355
        %v2358 = vmul.f32 %v2356, 1.442695
        %v2359 = vpow.pop %v2358
        %v2360 = vmul.f32 %v2357, 1.442695
        %v2361 = vpow.pop %v2360
        %v2362 = vsel %vm1579, %v2359, 0.0
        %2363 = vadd.xlane.f32.xlu0 %v2362
        %v2364 = vpop.xlane.xlu0 %2363
        %v2365 = vsel %vm1579, %v2361, 0.0
        %2366 = vadd.xlane.f32.xlu0 %v2365
        %v2367 = vpop.xlane.xlu0 %2366
        %v2368 = vrcp.pop %v2364
        %v2369 = vrcp.pop %v2367
        %v2370 = vmul.f32 %v2359, %v2368
        %v2371 = vmul.f32 %v2361, %v2369
        %v2372 = vpack.c.bf16 %v2371, %v2370
        %v2374 = vsel %vm1579, %v2372, 0
        %2376 = vmatprep.subr.bf16.mxu0 0
        %2377 = vmatpush1.bf16.msra.mxu0 %v1537
        %2378 = vmatprep.subr.bf16.mxu0 0
        %2379 = vmatpush1.bf16.msra.mxu0 0
        %2380 = vmatprep.subr.bf16.mxu0 0
        %2381 = vmatpush1.bf16.msra.mxu0 0
        %2382 = vmatprep.subr.bf16.mxu0 0
        %2383 = vmatpush1.bf16.msra.mxu0 0
        %2384 = vmatprep.subr.bf16.mxu0 0
        %2385 = vmatpush1.bf16.msra.mxu0 0
        %2386 = vmatprep.subr.bf16.mxu0 0
        %2387 = vmatpush1.bf16.msra.mxu0 0
        %2388 = vmatprep.subr.bf16.mxu0 0
        %2389 = vmatpush1.bf16.msra.mxu0 0
        %2390 = vmatprep.subr.bf16.mxu0 0
        %2391 = vmatpush1.bf16.msra.mxu0 0
        %2392 = vmatprep.subr.bf16.mxu0 0
        %2393 = vmatpush1.bf16.msra.mxu0 0
        %2394 = vmatprep.subr.bf16.mxu0 0
        %2395 = vmatpush1.bf16.msra.mxu0 0
        %2396 = vmatprep.subr.bf16.mxu0 0
        %2397 = vmatpush1.bf16.msra.mxu0 0
        %2398 = vmatprep.subr.bf16.mxu0 0
        %2399 = vmatpush1.bf16.msra.mxu0 0
        %2400 = vmatprep.subr.bf16.mxu0 0
        %2401 = vmatpush1.bf16.msra.mxu0 0
        %2402 = vmatprep.subr.bf16.mxu0 0
        %2403 = vmatpush1.bf16.msra.mxu0 0
        %2404 = vmatprep.subr.bf16.mxu0 0
        %2405 = vmatpush1.bf16.msra.mxu0 0
        %2406 = vmatprep.subr.bf16.mxu0 0
        %2407 = vmatpush1.bf16.msra.mxu0 0
        %2408 = vmatprep.mubr.bf16.mxu0 0
        %2409 = vmatmul.mubr.bf16.gmra.mrb[0].mxu0 %v2374
        %v2410 = vpop.f32.mrb[0].mxu0
        %v2411 = vadd.f32 0.0, %v2410
        %v2412 = vpop.f32.mrb[0].mxu0
        %v2413 = vpop.f32.mrb[0].mxu0
        %v2414 = vadd.f32 0.0, %v2413
        %v2415 = vpop.f32.mrb[0].mxu0
        %2416 = vdwg.mxu0
        %2417 = vst [vmem:[#allocation2 + $0x38] sm:$0xff] %v2411
        %2418 = vst [vmem:[#allocation2 + $0x78] sm:$0xff] %v2414
        %v2419 = vld [vmem:[#allocation2] sm:$0xff]
        %v2420 = vld [vmem:[#allocation2 + $0x8] sm:$0xff]
        %v2421 = vld [vmem:[#allocation2 + $0x10] sm:$0xff]
        %v2422 = vld [vmem:[#allocation2 + $0x18] sm:$0xff]
        %v2423 = vld [vmem:[#allocation2 + $0x20] sm:$0xff]
        %v2424 = vld [vmem:[#allocation2 + $0x28] sm:$0xff]
        %v2425 = vld [vmem:[#allocation2 + $0x30] sm:$0xff]
        %v2426 = vld [vmem:[#allocation2 + $0x38] sm:$0xff]
        %v2427 = vld [vmem:[#allocation2 + $0x40] sm:$0xff]
        %v2428 = vld [vmem:[#allocation2 + $0x48] sm:$0xff]
        %v2429 = vld [vmem:[#allocation2 + $0x50] sm:$0xff]
        %v2430 = vld [vmem:[#allocation2 + $0x58] sm:$0xff]
        %v2431 = vld [vmem:[#allocation2 + $0x60] sm:$0xff]
        %v2432 = vld [vmem:[#allocation2 + $0x68] sm:$0xff]
        %v2433 = vld [vmem:[#allocation2 + $0x70] sm:$0xff]
        %v2434 = vld [vmem:[#allocation2 + $0x78] sm:$0xff]
        %v2435 = vpack.c.bf16 %v2427, %v2419
        %v2436 = vpack.c.bf16 %v2428, %v2420
        %v2437 = vpack.c.bf16 %v2429, %v2421
        %v2438 = vpack.c.bf16 %v2430, %v2422
        %v2439 = vpack.c.bf16 %v2431, %v2423
        %v2440 = vpack.c.bf16 %v2432, %v2424
        %v2441 = vpack.c.bf16 %v2433, %v2425
        %v2442 = vpack.c.bf16 %v2434, %v2426
        %v2443 = vld [vmem:[%s9] sm:$0xf]
        %v2444 = vld [vmem:[%s9 + $0x4] sm:$0xf]
        %v2445 = vld [vmem:[%s9 + $0x8] sm:$0xf]
        %v2446 = vld [vmem:[%s9 + $0xc] sm:$0xf]
        %v2447 = vld [vmem:[%s9 + $0x10] sm:$0xf]
        %v2448 = vld [vmem:[%s9 + $0x14] sm:$0xf]
        %v2449 = vld [vmem:[%s9 + $0x18] sm:$0xf]
        %v2450 = vld [vmem:[%s9 + $0x1c] sm:$0xf]
        %v2451 = vld [vmem:[%s9 + $0x20] sm:$0xf]
        %v2452 = vld [vmem:[%s9 + $0x24] sm:$0xf]
        %v2453 = vld [vmem:[%s9 + $0x28] sm:$0xf]
        %v2454 = vld [vmem:[%s9 + $0x2c] sm:$0xf]
        %v2455 = vld [vmem:[%s9 + $0x30] sm:$0xf]
        %v2456 = vld [vmem:[%s9 + $0x34] sm:$0xf]
        %v2457 = vld [vmem:[%s9 + $0x38] sm:$0xf]
        %v2458 = vld [vmem:[%s9 + $0x3c] sm:$0xf]
        %v2459 = vld [vmem:[%s9 + $0x40] sm:$0xf]
        %v2460 = vld [vmem:[%s9 + $0x44] sm:$0xf]
        %v2461 = vld [vmem:[%s9 + $0x48] sm:$0xf]
        %v2462 = vld [vmem:[%s9 + $0x4c] sm:$0xf]
        %v2463 = vld [vmem:[%s9 + $0x50] sm:$0xf]
        %v2464 = vld [vmem:[%s9 + $0x54] sm:$0xf]
        %v2465 = vld [vmem:[%s9 + $0x58] sm:$0xf]
        %v2466 = vld [vmem:[%s9 + $0x5c] sm:$0xf]
        %v2467 = vld [vmem:[%s9 + $0x60] sm:$0xf]
        %v2468 = vld [vmem:[%s9 + $0x64] sm:$0xf]
        %v2469 = vld [vmem:[%s9 + $0x68] sm:$0xf]
        %v2470 = vld [vmem:[%s9 + $0x6c] sm:$0xf]
        %v2471 = vld [vmem:[%s9 + $0x70] sm:$0xf]
        %v2472 = vld [vmem:[%s9 + $0x74] sm:$0xf]
        %v2473 = vld [vmem:[%s9 + $0x78] sm:$0xf]
        %v2474 = vld [vmem:[%s9 + $0x7c] sm:$0xf]
        %v2475 = vld [vmem:[%s9 + $0x80] sm:$0xf]
        %v2476 = vld [vmem:[%s9 + $0x84] sm:$0xf]
        %v2477 = vld [vmem:[%s9 + $0x88] sm:$0xf]
        %v2478 = vld [vmem:[%s9 + $0x8c] sm:$0xf]
        %v2479 = vld [vmem:[%s9 + $0x90] sm:$0xf]
        %v2480 = vld [vmem:[%s9 + $0x94] sm:$0xf]
        %v2481 = vld [vmem:[%s9 + $0x98] sm:$0xf]
        %v2482 = vld [vmem:[%s9 + $0x9c] sm:$0xf]
        %v2483 = vld [vmem:[%s9 + $0xa0] sm:$0xf]
        %v2484 = vld [vmem:[%s9 + $0xa4] sm:$0xf]
        %v2485 = vld [vmem:[%s9 + $0xa8] sm:$0xf]
        %v2486 = vld [vmem:[%s9 + $0xac] sm:$0xf]
        %v2487 = vld [vmem:[%s9 + $0xb0] sm:$0xf]
        %v2488 = vld [vmem:[%s9 + $0xb4] sm:$0xf]
        %v2489 = vld [vmem:[%s9 + $0xb8] sm:$0xf]
        %v2490 = vld [vmem:[%s9 + $0xbc] sm:$0xf]
        %v2491 = vld [vmem:[%s9 + $0xc0] sm:$0xf]
        %v2492 = vld [vmem:[%s9 + $0xc4] sm:$0xf]
        %v2493 = vld [vmem:[%s9 + $0xc8] sm:$0xf]
        %v2494 = vld [vmem:[%s9 + $0xcc] sm:$0xf]
        %v2495 = vld [vmem:[%s9 + $0xd0] sm:$0xf]
        %v2496 = vld [vmem:[%s9 + $0xd4] sm:$0xf]
        %v2497 = vld [vmem:[%s9 + $0xd8] sm:$0xf]
        %v2498 = vld [vmem:[%s9 + $0xdc] sm:$0xf]
        %v2499 = vld [vmem:[%s9 + $0xe0] sm:$0xf]
        %v2500 = vld [vmem:[%s9 + $0xe4] sm:$0xf]
        %v2501 = vld [vmem:[%s9 + $0xe8] sm:$0xf]
        %v2502 = vld [vmem:[%s9 + $0xec] sm:$0xf]
        %v2503 = vld [vmem:[%s9 + $0xf0] sm:$0xf]
        %v2504 = vld [vmem:[%s9 + $0xf4] sm:$0xf]
        %v2505 = vld [vmem:[%s9 + $0xf8] sm:$0xf]
        %v2506 = vld [vmem:[%s9 + $0xfc] sm:$0xf]
        %v2507 = vld [vmem:[%s9 + $0x100] sm:$0xf]
        %v2508 = vld [vmem:[%s9 + $0x104] sm:$0xf]
        %v2509 = vld [vmem:[%s9 + $0x108] sm:$0xf]
        %v2510 = vld [vmem:[%s9 + $0x10c] sm:$0xf]
        %v2511 = vld [vmem:[%s9 + $0x110] sm:$0xf]
        %v2512 = vld [vmem:[%s9 + $0x114] sm:$0xf]
        %v2513 = vld [vmem:[%s9 + $0x118] sm:$0xf]
        %v2514 = vld [vmem:[%s9 + $0x11c] sm:$0xf]
        %v2515 = vld [vmem:[%s9 + $0x120] sm:$0xf]
        %v2516 = vld [vmem:[%s9 + $0x124] sm:$0xf]
        %v2517 = vld [vmem:[%s9 + $0x128] sm:$0xf]
        %v2518 = vld [vmem:[%s9 + $0x12c] sm:$0xf]
        %v2519 = vld [vmem:[%s9 + $0x130] sm:$0xf]
        %v2520 = vld [vmem:[%s9 + $0x134] sm:$0xf]
        %v2521 = vld [vmem:[%s9 + $0x138] sm:$0xf]
        %v2522 = vld [vmem:[%s9 + $0x13c] sm:$0xf]
        %v2523 = vld [vmem:[%s9 + $0x140] sm:$0xf]
        %v2524 = vld [vmem:[%s9 + $0x144] sm:$0xf]
        %v2525 = vld [vmem:[%s9 + $0x148] sm:$0xf]
        %v2526 = vld [vmem:[%s9 + $0x14c] sm:$0xf]
        %v2527 = vld [vmem:[%s9 + $0x150] sm:$0xf]
        %v2528 = vld [vmem:[%s9 + $0x154] sm:$0xf]
        %v2529 = vld [vmem:[%s9 + $0x158] sm:$0xf]
        %v2530 = vld [vmem:[%s9 + $0x15c] sm:$0xf]
        %v2531 = vld [vmem:[%s9 + $0x160] sm:$0xf]
        %v2532 = vld [vmem:[%s9 + $0x164] sm:$0xf]
        %v2533 = vld [vmem:[%s9 + $0x168] sm:$0xf]
        %v2534 = vld [vmem:[%s9 + $0x16c] sm:$0xf]
        %v2535 = vld [vmem:[%s9 + $0x170] sm:$0xf]
        %v2536 = vld [vmem:[%s9 + $0x174] sm:$0xf]
        %v2537 = vld [vmem:[%s9 + $0x178] sm:$0xf]
        %v2538 = vld [vmem:[%s9 + $0x17c] sm:$0xf]
        %v2539 = vld [vmem:[%s9 + $0x180] sm:$0xf]
        %v2540 = vld [vmem:[%s9 + $0x184] sm:$0xf]
        %v2541 = vld [vmem:[%s9 + $0x188] sm:$0xf]
        %v2542 = vld [vmem:[%s9 + $0x18c] sm:$0xf]
        %v2543 = vld [vmem:[%s9 + $0x190] sm:$0xf]
        %v2544 = vld [vmem:[%s9 + $0x194] sm:$0xf]
        %v2545 = vld [vmem:[%s9 + $0x198] sm:$0xf]
        %v2546 = vld [vmem:[%s9 + $0x19c] sm:$0xf]
        %v2547 = vld [vmem:[%s9 + $0x1a0] sm:$0xf]
        %v2548 = vld [vmem:[%s9 + $0x1a4] sm:$0xf]
        %v2549 = vld [vmem:[%s9 + $0x1a8] sm:$0xf]
        %v2550 = vld [vmem:[%s9 + $0x1ac] sm:$0xf]
        %v2551 = vld [vmem:[%s9 + $0x1b0] sm:$0xf]
        %v2552 = vld [vmem:[%s9 + $0x1b4] sm:$0xf]
        %v2553 = vld [vmem:[%s9 + $0x1b8] sm:$0xf]
        %v2554 = vld [vmem:[%s9 + $0x1bc] sm:$0xf]
        %v2555 = vld [vmem:[%s9 + $0x1c0] sm:$0xf]
        %v2556 = vld [vmem:[%s9 + $0x1c4] sm:$0xf]
        %v2557 = vld [vmem:[%s9 + $0x1c8] sm:$0xf]
        %v2558 = vld [vmem:[%s9 + $0x1cc] sm:$0xf]
        %v2559 = vld [vmem:[%s9 + $0x1d0] sm:$0xf]
        %v2560 = vld [vmem:[%s9 + $0x1d4] sm:$0xf]
        %v2561 = vld [vmem:[%s9 + $0x1d8] sm:$0xf]
        %v2562 = vld [vmem:[%s9 + $0x1dc] sm:$0xf]
        %v2563 = vld [vmem:[%s9 + $0x1e0] sm:$0xf]
        %v2564 = vld [vmem:[%s9 + $0x1e4] sm:$0xf]
        %v2565 = vld [vmem:[%s9 + $0x1e8] sm:$0xf]
        %v2566 = vld [vmem:[%s9 + $0x1ec] sm:$0xf]
        %v2567 = vld [vmem:[%s9 + $0x1f0] sm:$0xf]
        %v2568 = vld [vmem:[%s9 + $0x1f4] sm:$0xf]
        %v2569 = vld [vmem:[%s9 + $0x1f8] sm:$0xf]
        %v2570 = vld [vmem:[%s9 + $0x1fc] sm:$0xf]
        %v2571 = vld [vmem:[%s10] sm:$0x1]
        %v2573 = vlaneseq
        %v2574 = vshrl.u32 %v2573, 7
        %v2575 = vsub.s32 0, %v2574
        %v2576 = vrot.slane %v2571, %v2575
        %v2706 = vunpack.c.l.b16 %v2443
        %v2707 = vunpack.c.l.b16 %v2444
        %v2708 = vunpack.c.l.b16 %v2445
        %v2709 = vunpack.c.l.b16 %v2446
        %v2710 = vunpack.c.l.b16 %v2447
        %v2711 = vunpack.c.l.b16 %v2448
        %v2712 = vunpack.c.l.b16 %v2449
        %v2713 = vunpack.c.l.b16 %v2450
        %v2714 = vunpack.c.l.b16 %v2451
        %v2715 = vunpack.c.l.b16 %v2452
        %v2716 = vunpack.c.l.b16 %v2453
        %v2717 = vunpack.c.l.b16 %v2454
        %v2718 = vunpack.c.l.b16 %v2455
        %v2719 = vunpack.c.l.b16 %v2456
        %v2720 = vunpack.c.l.b16 %v2457
        %v2721 = vunpack.c.l.b16 %v2458
        %v2722 = vunpack.c.l.b16 %v2459
        %v2723 = vunpack.c.l.b16 %v2460
        %v2724 = vunpack.c.l.b16 %v2461
        %v2725 = vunpack.c.l.b16 %v2462
        %v2726 = vunpack.c.l.b16 %v2463
        %v2727 = vunpack.c.l.b16 %v2464
        %v2728 = vunpack.c.l.b16 %v2465
        %v2729 = vunpack.c.l.b16 %v2466
        %v2730 = vunpack.c.l.b16 %v2467
        %v2731 = vunpack.c.l.b16 %v2468
        %v2732 = vunpack.c.l.b16 %v2469
        %v2733 = vunpack.c.l.b16 %v2470
        %v2734 = vunpack.c.l.b16 %v2471
        %v2735 = vunpack.c.l.b16 %v2472
        %v2736 = vunpack.c.l.b16 %v2473
        %v2737 = vunpack.c.l.b16 %v2474
        %v2738 = vunpack.c.l.b16 %v2475
        %v2739 = vunpack.c.l.b16 %v2476
        %v2740 = vunpack.c.l.b16 %v2477
        %v2741 = vunpack.c.l.b16 %v2478
        %v2742 = vunpack.c.l.b16 %v2479
        %v2743 = vunpack.c.l.b16 %v2480
        %v2744 = vunpack.c.l.b16 %v2481
        %v2745 = vunpack.c.l.b16 %v2482
        %v2746 = vunpack.c.l.b16 %v2483
        %v2747 = vunpack.c.l.b16 %v2484
        %v2748 = vunpack.c.l.b16 %v2485
        %v2749 = vunpack.c.l.b16 %v2486
        %v2750 = vunpack.c.l.b16 %v2487
        %v2751 = vunpack.c.l.b16 %v2488
        %v2752 = vunpack.c.l.b16 %v2489
        %v2753 = vunpack.c.l.b16 %v2490
        %v2754 = vunpack.c.l.b16 %v2491
        %v2755 = vunpack.c.l.b16 %v2492
        %v2756 = vunpack.c.l.b16 %v2493
        %v2757 = vunpack.c.l.b16 %v2494
        %v2758 = vunpack.c.l.b16 %v2495
        %v2759 = vunpack.c.l.b16 %v2496
        %v2760 = vunpack.c.l.b16 %v2497
        %v2761 = vunpack.c.l.b16 %v2498
        %v2762 = vunpack.c.l.b16 %v2499
        %v2763 = vunpack.c.l.b16 %v2500
        %v2764 = vunpack.c.l.b16 %v2501
        %v2765 = vunpack.c.l.b16 %v2502
        %v2766 = vunpack.c.l.b16 %v2503
        %v2767 = vunpack.c.l.b16 %v2504
        %v2768 = vunpack.c.l.b16 %v2505
        %v2769 = vunpack.c.l.b16 %v2506
        %v2770 = vunpack.c.l.b16 %v2507
        %v2771 = vunpack.c.l.b16 %v2508
        %v2772 = vunpack.c.l.b16 %v2509
        %v2773 = vunpack.c.l.b16 %v2510
        %v2774 = vunpack.c.l.b16 %v2511
        %v2775 = vunpack.c.l.b16 %v2512
        %v2776 = vunpack.c.l.b16 %v2513
        %v2777 = vunpack.c.l.b16 %v2514
        %v2778 = vunpack.c.l.b16 %v2515
        %v2779 = vunpack.c.l.b16 %v2516
        %v2780 = vunpack.c.l.b16 %v2517
        %v2781 = vunpack.c.l.b16 %v2518
        %v2782 = vunpack.c.l.b16 %v2519
        %v2783 = vunpack.c.l.b16 %v2520
        %v2784 = vunpack.c.l.b16 %v2521
        %v2785 = vunpack.c.l.b16 %v2522
        %v2786 = vunpack.c.l.b16 %v2523
        %v2787 = vunpack.c.l.b16 %v2524
        %v2788 = vunpack.c.l.b16 %v2525
        %v2789 = vunpack.c.l.b16 %v2526
        %v2790 = vunpack.c.l.b16 %v2527
        %v2791 = vunpack.c.l.b16 %v2528
        %v2792 = vunpack.c.l.b16 %v2529
        %v2793 = vunpack.c.l.b16 %v2530
        %v2794 = vunpack.c.l.b16 %v2531
        %v2795 = vunpack.c.l.b16 %v2532
        %v2796 = vunpack.c.l.b16 %v2533
        %v2797 = vunpack.c.l.b16 %v2534
        %v2798 = vunpack.c.l.b16 %v2535
        %v2799 = vunpack.c.l.b16 %v2536
        %v2800 = vunpack.c.l.b16 %v2537
        %v2801 = vunpack.c.l.b16 %v2538
        %v2802 = vunpack.c.l.b16 %v2539
        %v2803 = vunpack.c.l.b16 %v2540
        %v2804 = vunpack.c.l.b16 %v2541
        %v2805 = vunpack.c.l.b16 %v2542
        %v2806 = vunpack.c.l.b16 %v2543
        %v2807 = vunpack.c.l.b16 %v2544
        %v2808 = vunpack.c.l.b16 %v2545
        %v2809 = vunpack.c.l.b16 %v2546
        %v2810 = vunpack.c.l.b16 %v2547
        %v2811 = vunpack.c.l.b16 %v2548
        %v2812 = vunpack.c.l.b16 %v2549
        %v2813 = vunpack.c.l.b16 %v2550
        %v2814 = vunpack.c.l.b16 %v2551
        %v2815 = vunpack.c.l.b16 %v2552
        %v2816 = vunpack.c.l.b16 %v2553
        %v2817 = vunpack.c.l.b16 %v2554
        %v2818 = vunpack.c.l.b16 %v2555
        %v2819 = vunpack.c.l.b16 %v2556
        %v2820 = vunpack.c.l.b16 %v2557
        %v2821 = vunpack.c.l.b16 %v2558
        %v2822 = vunpack.c.l.b16 %v2559
        %v2823 = vunpack.c.l.b16 %v2560
        %v2824 = vunpack.c.l.b16 %v2561
        %v2825 = vunpack.c.l.b16 %v2562
        %v2826 = vunpack.c.l.b16 %v2563
        %v2827 = vunpack.c.l.b16 %v2564
        %v2828 = vunpack.c.l.b16 %v2565
        %v2829 = vunpack.c.l.b16 %v2566
        %v2830 = vunpack.c.l.b16 %v2567
        %v2831 = vunpack.c.l.b16 %v2568
        %v2832 = vunpack.c.l.b16 %v2569
        %v2833 = vunpack.c.l.b16 %v2570
        %v2834 = vpack.c.b16 %v2707, %v2706
        %v2835 = vpack.c.b16 %v2709, %v2708
        %v2836 = vpack.c.b16 %v2711, %v2710
        %v2837 = vpack.c.b16 %v2713, %v2712
        %v2838 = vpack.c.b16 %v2715, %v2714
        %v2839 = vpack.c.b16 %v2717, %v2716
        %v2840 = vpack.c.b16 %v2719, %v2718
        %v2841 = vpack.c.b16 %v2721, %v2720
        %v2842 = vpack.c.b16 %v2723, %v2722
        %v2843 = vpack.c.b16 %v2725, %v2724
        %v2844 = vpack.c.b16 %v2727, %v2726
        %v2845 = vpack.c.b16 %v2729, %v2728
        %v2846 = vpack.c.b16 %v2731, %v2730
        %v2847 = vpack.c.b16 %v2733, %v2732
        %v2848 = vpack.c.b16 %v2735, %v2734
        %v2849 = vpack.c.b16 %v2737, %v2736
        %v2850 = vpack.c.b16 %v2739, %v2738
        %v2851 = vpack.c.b16 %v2741, %v2740
        %v2852 = vpack.c.b16 %v2743, %v2742
        %v2853 = vpack.c.b16 %v2745, %v2744
        %v2854 = vpack.c.b16 %v2747, %v2746
        %v2855 = vpack.c.b16 %v2749, %v2748
        %v2856 = vpack.c.b16 %v2751, %v2750
        %v2857 = vpack.c.b16 %v2753, %v2752
        %v2858 = vpack.c.b16 %v2755, %v2754
        %v2859 = vpack.c.b16 %v2757, %v2756
        %v2860 = vpack.c.b16 %v2759, %v2758
        %v2861 = vpack.c.b16 %v2761, %v2760
        %v2862 = vpack.c.b16 %v2763, %v2762
        %v2863 = vpack.c.b16 %v2765, %v2764
        %v2864 = vpack.c.b16 %v2767, %v2766
        %v2865 = vpack.c.b16 %v2769, %v2768
        %v2866 = vpack.c.b16 %v2771, %v2770
        %v2867 = vpack.c.b16 %v2773, %v2772
        %v2868 = vpack.c.b16 %v2775, %v2774
        %v2869 = vpack.c.b16 %v2777, %v2776
        %v2870 = vpack.c.b16 %v2779, %v2778
        %v2871 = vpack.c.b16 %v2781, %v2780
        %v2872 = vpack.c.b16 %v2783, %v2782
        %v2873 = vpack.c.b16 %v2785, %v2784
        %v2874 = vpack.c.b16 %v2787, %v2786
        %v2875 = vpack.c.b16 %v2789, %v2788
        %v2876 = vpack.c.b16 %v2791, %v2790
        %v2877 = vpack.c.b16 %v2793, %v2792
        %v2878 = vpack.c.b16 %v2795, %v2794
        %v2879 = vpack.c.b16 %v2797, %v2796
        %v2880 = vpack.c.b16 %v2799, %v2798
        %v2881 = vpack.c.b16 %v2801, %v2800
        %v2882 = vpack.c.b16 %v2803, %v2802
        %v2883 = vpack.c.b16 %v2805, %v2804
        %v2884 = vpack.c.b16 %v2807, %v2806
        %v2885 = vpack.c.b16 %v2809, %v2808
        %v2886 = vpack.c.b16 %v2811, %v2810
        %v2887 = vpack.c.b16 %v2813, %v2812
        %v2888 = vpack.c.b16 %v2815, %v2814
        %v2889 = vpack.c.b16 %v2817, %v2816
        %v2890 = vpack.c.b16 %v2819, %v2818
        %v2891 = vpack.c.b16 %v2821, %v2820
        %v2892 = vpack.c.b16 %v2823, %v2822
        %v2893 = vpack.c.b16 %v2825, %v2824
        %v2894 = vpack.c.b16 %v2827, %v2826
        %v2895 = vpack.c.b16 %v2829, %v2828
        %v2896 = vpack.c.b16 %v2831, %v2830
        %v2897 = vpack.c.b16 %v2833, %v2832
        %2962 = vmatprep.subr.bf16.mxu0 0
        %2963 = vmatpush1.bf16.msra.mxu0 %v2834
        %2964 = vmatprep.subr.bf16.mxu0 0
        %2965 = vmatpush1.bf16.msra.mxu0 %v2835
        %2966 = vmatprep.subr.bf16.mxu0 0
        %2967 = vmatpush1.bf16.msra.mxu0 %v2836
        %2968 = vmatprep.subr.bf16.mxu0 0
        %2969 = vmatpush1.bf16.msra.mxu0 %v2837
        %2970 = vmatprep.subr.bf16.mxu0 0
        %2971 = vmatpush1.bf16.msra.mxu0 %v2838
        %2972 = vmatprep.subr.bf16.mxu0 0
        %2973 = vmatpush1.bf16.msra.mxu0 %v2839
        %2974 = vmatprep.subr.bf16.mxu0 0
        %2975 = vmatpush1.bf16.msra.mxu0 %v2840
        %2976 = vmatprep.subr.bf16.mxu0 0
        %2977 = vmatpush1.bf16.msra.mxu0 %v2841
        %2978 = vmatprep.subr.bf16.mxu0 0
        %2979 = vmatpush1.bf16.msra.mxu0 %v2842
        %2980 = vmatprep.subr.bf16.mxu0 0
        %2981 = vmatpush1.bf16.msra.mxu0 %v2843
        %2982 = vmatprep.subr.bf16.mxu0 0
        %2983 = vmatpush1.bf16.msra.mxu0 %v2844
        %2984 = vmatprep.subr.bf16.mxu0 0
        %2985 = vmatpush1.bf16.msra.mxu0 %v2845
        %2986 = vmatprep.subr.bf16.mxu0 0
        %2987 = vmatpush1.bf16.msra.mxu0 %v2846
        %2988 = vmatprep.subr.bf16.mxu0 0
        %2989 = vmatpush1.bf16.msra.mxu0 %v2847
        %2990 = vmatprep.subr.bf16.mxu0 0
        %2991 = vmatpush1.bf16.msra.mxu0 %v2848
        %2992 = vmatprep.subr.bf16.mxu0 0
        %2993 = vmatpush1.bf16.msra.mxu0 %v2849
        %2994 = vmatprep.mubr.bf16.mxu0 %v2436
        %2995 = vmatmul.mubr.bf16.gmra.mrb[0].mxu0 %v2435
        %v2996 = vpop.f32.mrb[0].mxu0
        %v2997 = vadd.f32 %v2576, %v2996
        %v2998 = vpop.f32.mrb[0].mxu0
        %v2999 = vpop.f32.mrb[0].mxu0
        %v3000 = vadd.f32 %v2576, %v2999
        %v3001 = vpop.f32.mrb[0].mxu0
        %3002 = vdwg.mxu0
        %3003 = vmatprep.subr.bf16.mxu0 0
        %3004 = vmatpush1.bf16.msra.mxu0 %v2850
        %3005 = vmatprep.subr.bf16.mxu0 0
        %3006 = vmatpush1.bf16.msra.mxu0 %v2851
        %3007 = vmatprep.subr.bf16.mxu0 0
        %3008 = vmatpush1.bf16.msra.mxu0 %v2852
        %3009 = vmatprep.subr.bf16.mxu0 0
        %3010 = vmatpush1.bf16.msra.mxu0 %v2853
        %3011 = vmatprep.subr.bf16.mxu0 0
        %3012 = vmatpush1.bf16.msra.mxu0 %v2854
        %3013 = vmatprep.subr.bf16.mxu0 0
        %3014 = vmatpush1.bf16.msra.mxu0 %v2855
        %3015 = vmatprep.subr.bf16.mxu0 0
        %3016 = vmatpush1.bf16.msra.mxu0 %v2856
        %3017 = vmatprep.subr.bf16.mxu0 0
        %3018 = vmatpush1.bf16.msra.mxu0 %v2857
        %3019 = vmatprep.subr.bf16.mxu0 0
        %3020 = vmatpush1.bf16.msra.mxu0 %v2858
        %3021 = vmatprep.subr.bf16.mxu0 0
        %3022 = vmatpush1.bf16.msra.mxu0 %v2859
        %3023 = vmatprep.subr.bf16.mxu0 0
        %3024 = vmatpush1.bf16.msra.mxu0 %v2860
        %3025 = vmatprep.subr.bf16.mxu0 0
        %3026 = vmatpush1.bf16.msra.mxu0 %v2861
        %3027 = vmatprep.subr.bf16.mxu0 0
        %3028 = vmatpush1.bf16.msra.mxu0 %v2862
        %3029 = vmatprep.subr.bf16.mxu0 0
        %3030 = vmatpush1.bf16.msra.mxu0 %v2863
        %3031 = vmatprep.subr.bf16.mxu0 0
        %3032 = vmatpush1.bf16.msra.mxu0 %v2864
        %3033 = vmatprep.subr.bf16.mxu0 0
        %3034 = vmatpush1.bf16.msra.mxu0 %v2865
        %3035 = vmatprep.mubr.bf16.mxu0 %v2438
        %3036 = vmatmul.mubr.bf16.gmra.mrb[0].mxu0 %v2437
        %v3037 = vpop.f32.mrb[0].mxu0
        %v3038 = vadd.f32 %v2997, %v3037
        %v3039 = vpop.f32.mrb[0].mxu0
        %v3040 = vpop.f32.mrb[0].mxu0
        %v3041 = vadd.f32 %v3000, %v3040
        %v3042 = vpop.f32.mrb[0].mxu0
        %3043 = vdwg.mxu0
        %3044 = vmatprep.subr.bf16.mxu0 0
        %3045 = vmatpush1.bf16.msra.mxu0 %v2866
        %3046 = vmatprep.subr.bf16.mxu0 0
        %3047 = vmatpush1.bf16.msra.mxu0 %v2867
        %3048 = vmatprep.subr.bf16.mxu0 0
        %3049 = vmatpush1.bf16.msra.mxu0 %v2868
        %3050 = vmatprep.subr.bf16.mxu0 0
        %3051 = vmatpush1.bf16.msra.mxu0 %v2869
        %3052 = vmatprep.subr.bf16.mxu0 0
        %3053 = vmatpush1.bf16.msra.mxu0 %v2870
        %3054 = vmatprep.subr.bf16.mxu0 0
        %3055 = vmatpush1.bf16.msra.mxu0 %v2871
        %3056 = vmatprep.subr.bf16.mxu0 0
        %3057 = vmatpush1.bf16.msra.mxu0 %v2872
        %3058 = vmatprep.subr.bf16.mxu0 0
        %3059 = vmatpush1.bf16.msra.mxu0 %v2873
        %3060 = vmatprep.subr.bf16.mxu0 0
        %3061 = vmatpush1.bf16.msra.mxu0 %v2874
        %3062 = vmatprep.subr.bf16.mxu0 0
        %3063 = vmatpush1.bf16.msra.mxu0 %v2875
        %3064 = vmatprep.subr.bf16.mxu0 0
        %3065 = vmatpush1.bf16.msra.mxu0 %v2876
        %3066 = vmatprep.subr.bf16.mxu0 0
        %3067 = vmatpush1.bf16.msra.mxu0 %v2877
        %3068 = vmatprep.subr.bf16.mxu0 0
        %3069 = vmatpush1.bf16.msra.mxu0 %v2878
        %3070 = vmatprep.subr.bf16.mxu0 0
        %3071 = vmatpush1.bf16.msra.mxu0 %v2879
        %3072 = vmatprep.subr.bf16.mxu0 0
        %3073 = vmatpush1.bf16.msra.mxu0 %v2880
        %3074 = vmatprep.subr.bf16.mxu0 0
        %3075 = vmatpush1.bf16.msra.mxu0 %v2881
        %3076 = vmatprep.mubr.bf16.mxu0 %v2440
        %3077 = vmatmul.mubr.bf16.gmra.mrb[0].mxu0 %v2439
        %v3078 = vpop.f32.mrb[0].mxu0
        %v3079 = vadd.f32 %v3038, %v3078
        %v3080 = vpop.f32.mrb[0].mxu0
        %v3081 = vpop.f32.mrb[0].mxu0
        %v3082 = vadd.f32 %v3041, %v3081
        %v3083 = vpop.f32.mrb[0].mxu0
        %3084 = vdwg.mxu0
        %3085 = vmatprep.subr.bf16.mxu0 0
        %3086 = vmatpush1.bf16.msra.mxu0 %v2882
        %3087 = vmatprep.subr.bf16.mxu0 0
        %3088 = vmatpush1.bf16.msra.mxu0 %v2883
        %3089 = vmatprep.subr.bf16.mxu0 0
        %3090 = vmatpush1.bf16.msra.mxu0 %v2884
        %3091 = vmatprep.subr.bf16.mxu0 0
        %3092 = vmatpush1.bf16.msra.mxu0 %v2885
        %3093 = vmatprep.subr.bf16.mxu0 0
        %3094 = vmatpush1.bf16.msra.mxu0 %v2886
        %3095 = vmatprep.subr.bf16.mxu0 0
        %3096 = vmatpush1.bf16.msra.mxu0 %v2887
        %3097 = vmatprep.subr.bf16.mxu0 0
        %3098 = vmatpush1.bf16.msra.mxu0 %v2888
        %3099 = vmatprep.subr.bf16.mxu0 0
        %3100 = vmatpush1.bf16.msra.mxu0 %v2889
        %3101 = vmatprep.subr.bf16.mxu0 0
        %3102 = vmatpush1.bf16.msra.mxu0 %v2890
        %3103 = vmatprep.subr.bf16.mxu0 0
        %3104 = vmatpush1.bf16.msra.mxu0 %v2891
        %3105 = vmatprep.subr.bf16.mxu0 0
        %3106 = vmatpush1.bf16.msra.mxu0 %v2892
        %3107 = vmatprep.subr.bf16.mxu0 0
        %3108 = vmatpush1.bf16.msra.mxu0 %v2893
        %3109 = vmatprep.subr.bf16.mxu0 0
        %3110 = vmatpush1.bf16.msra.mxu0 %v2894
        %3111 = vmatprep.subr.bf16.mxu0 0
        %3112 = vmatpush1.bf16.msra.mxu0 %v2895
        %3113 = vmatprep.subr.bf16.mxu0 0
        %3114 = vmatpush1.bf16.msra.mxu0 %v2896
        %3115 = vmatprep.subr.bf16.mxu0 0
        %3116 = vmatpush1.bf16.msra.mxu0 %v2897
        %3117 = vmatprep.mubr.bf16.mxu0 %v2442
        %3118 = vmatmul.mubr.bf16.gmra.mrb[0].mxu0 %v2441
        %v3119 = vpop.f32.mrb[0].mxu0
        %v3120 = vadd.f32 %v3079, %v3119
        %v3121 = vpop.f32.mrb[0].mxu0
        %v3122 = vpop.f32.mrb[0].mxu0
        %v3123 = vadd.f32 %v3082, %v3122
        %v3124 = vpop.f32.mrb[0].mxu0
        %3125 = vdwg.mxu0
        %v3126 = vpack.c.bf16 %v3123, %v3120
        %v3127 = vld [vmem:[%s11] sm:$0xf]
        %v3128 = vld [vmem:[%s11 + $0x4] sm:$0xf]
        %v3129 = vld [vmem:[%s11 + $0x8] sm:$0xf]
        %v3130 = vld [vmem:[%s11 + $0xc] sm:$0xf]
        %v3131 = vld [vmem:[%s12] sm:$0x1]
        %v3133 = vlaneseq
        %v3134 = vshrl.u32 %v3133, 7
        %v3135 = vsub.s32 0, %v3134
        %v3136 = vrot.slane %v3131, %v3135
        %v3142 = vunpack.c.l.b16 %v3127
        %v3143 = vunpack.c.l.b16 %v3128
        %v3144 = vunpack.c.l.b16 %v3129
        %v3145 = vunpack.c.l.b16 %v3130
        %v3146 = vpack.c.b16 %v3143, %v3142
        %v3147 = vpack.c.b16 %v3145, %v3144
        %v3151 = vsel %vm712, %v3126, 0
        %3153 = vmatprep.subr.bf16.mxu0 0
        %3154 = vmatpush1.bf16.msra.mxu0 %v3146
        %3155 = vmatprep.subr.bf16.mxu0 0
        %3156 = vmatpush1.bf16.msra.mxu0 %v3147
        %3157 = vmatprep.subr.bf16.mxu0 0
        %3158 = vmatpush1.bf16.msra.mxu0 0
        %3159 = vmatprep.subr.bf16.mxu0 0
        %3160 = vmatpush1.bf16.msra.mxu0 0
        %3161 = vmatprep.subr.bf16.mxu0 0
        %3162 = vmatpush1.bf16.msra.mxu0 0
        %3163 = vmatprep.subr.bf16.mxu0 0
        %3164 = vmatpush1.bf16.msra.mxu0 0
        %3165 = vmatprep.subr.bf16.mxu0 0
        %3166 = vmatpush1.bf16.msra.mxu0 0
        %3167 = vmatprep.subr.bf16.mxu0 0
        %3168 = vmatpush1.bf16.msra.mxu0 0
        %3169 = vmatprep.subr.bf16.mxu0 0
        %3170 = vmatpush1.bf16.msra.mxu0 0
        %3171 = vmatprep.subr.bf16.mxu0 0
        %3172 = vmatpush1.bf16.msra.mxu0 0
        %3173 = vmatprep.subr.bf16.mxu0 0
        %3174 = vmatpush1.bf16.msra.mxu0 0
        %3175 = vmatprep.subr.bf16.mxu0 0
        %3176 = vmatpush1.bf16.msra.mxu0 0
        %3177 = vmatprep.subr.bf16.mxu0 0
        %3178 = vmatpush1.bf16.msra.mxu0 0
        %3179 = vmatprep.subr.bf16.mxu0 0
        %3180 = vmatpush1.bf16.msra.mxu0 0
        %3181 = vmatprep.subr.bf16.mxu0 0
        %3182 = vmatpush1.bf16.msra.mxu0 0
        %3183 = vmatprep.subr.bf16.mxu0 0
        %3184 = vmatpush1.bf16.msra.mxu0 0
        %3185 = vmatprep.mubr.bf16.mxu0 0
        %3186 = vmatmul.mubr.bf16.gmra.mrb[0].mxu0 %v3151
        %v3187 = vpop.f32.mrb[0].mxu0
        %v3188 = vadd.f32 %v3136, %v3187
        %v3189 = vpop.f32.mrb[0].mxu0
        %v3190 = vpop.f32.mrb[0].mxu0
        %v3191 = vadd.f32 %v3136, %v3190
        %v3192 = vpop.f32.mrb[0].mxu0
        %3193 = vdwg.mxu0
        %v3194 = vmax.f32 %v3188, 0.0
        %v3195 = vmax.f32 %v3191, 0.0
        %v3196 = vpack.c.bf16 %v3195, %v3194
        %v3197 = vld [vmem:[%s13] sm:$0xf]
        %v3198 = vld [vmem:[%s13 + $0x4] sm:$0xf]
        %v3199 = vld [vmem:[%s13 + $0x8] sm:$0xf]
        %v3200 = vld [vmem:[%s13 + $0xc] sm:$0xf]
        %v3201 = vld [vmem:[%s13 + $0x10] sm:$0xf]
        %v3202 = vld [vmem:[%s13 + $0x14] sm:$0xf]
        %v3203 = vld [vmem:[%s13 + $0x18] sm:$0xf]
        %v3204 = vld [vmem:[%s13 + $0x1c] sm:$0xf]
        %v3205 = vld [vmem:[%s13 + $0x20] sm:$0xf]
        %v3206 = vld [vmem:[%s13 + $0x24] sm:$0xf]
        %v3207 = vld [vmem:[%s13 + $0x28] sm:$0xf]
        %v3208 = vld [vmem:[%s13 + $0x2c] sm:$0xf]
        %v3209 = vld [vmem:[%s13 + $0x30] sm:$0xf]
        %v3210 = vld [vmem:[%s13 + $0x34] sm:$0xf]
        %v3211 = vld [vmem:[%s13 + $0x38] sm:$0xf]
        %v3212 = vld [vmem:[%s13 + $0x3c] sm:$0xf]
        %v3213 = vld [vmem:[%s14] sm:$0x1]
        %v3215 = vlaneseq
        %v3216 = vshrl.u32 %v3215, 7
        %v3217 = vsub.s32 0, %v3216
        %v3218 = vrot.slane %v3213, %v3217
        %v3236 = vunpack.c.l.b16 %v3197
        %v3237 = vunpack.c.l.b16 %v3198
        %v3238 = vunpack.c.l.b16 %v3199
        %v3239 = vunpack.c.l.b16 %v3200
        %v3240 = vunpack.c.l.b16 %v3201
        %v3241 = vunpack.c.l.b16 %v3202
        %v3242 = vunpack.c.l.b16 %v3203
        %v3243 = vunpack.c.l.b16 %v3204
        %v3244 = vunpack.c.l.b16 %v3205
        %v3245 = vunpack.c.l.b16 %v3206
        %v3246 = vunpack.c.l.b16 %v3207
        %v3247 = vunpack.c.l.b16 %v3208
        %v3248 = vunpack.c.l.b16 %v3209
        %v3249 = vunpack.c.l.b16 %v3210
        %v3250 = vunpack.c.l.b16 %v3211
        %v3251 = vunpack.c.l.b16 %v3212
        %v3252 = vpack.c.b16 %v3237, %v3236
        %v3253 = vpack.c.b16 %v3239, %v3238
        %v3254 = vpack.c.b16 %v3241, %v3240
        %v3255 = vpack.c.b16 %v3243, %v3242
        %v3256 = vpack.c.b16 %v3245, %v3244
        %v3257 = vpack.c.b16 %v3247, %v3246
        %v3258 = vpack.c.b16 %v3249, %v3248
        %v3259 = vpack.c.b16 %v3251, %v3250
        %3268 = vmatprep.subr.bf16.mxu0 0
        %3269 = vmatpush1.bf16.msra.mxu0 %v3252
        %3270 = vmatprep.subr.bf16.mxu0 0
        %3271 = vmatpush1.bf16.msra.mxu0 %v3253
        %3272 = vmatprep.subr.bf16.mxu0 0
        %3273 = vmatpush1.bf16.msra.mxu0 %v3254
        %3274 = vmatprep.subr.bf16.mxu0 0
        %3275 = vmatpush1.bf16.msra.mxu0 %v3255
        %3276 = vmatprep.subr.bf16.mxu0 0
        %3277 = vmatpush1.bf16.msra.mxu0 %v3256
        %3278 = vmatprep.subr.bf16.mxu0 0
        %3279 = vmatpush1.bf16.msra.mxu0 %v3257
        %3280 = vmatprep.subr.bf16.mxu0 0
        %3281 = vmatpush1.bf16.msra.mxu0 %v3258
        %3282 = vmatprep.subr.bf16.mxu0 0
        %3283 = vmatpush1.bf16.msra.mxu0 %v3259
        %3284 = vmatprep.subr.bf16.mxu0 0
        %3285 = vmatpush1.bf16.msra.mxu0 0
        %3286 = vmatprep.subr.bf16.mxu0 0
        %3287 = vmatpush1.bf16.msra.mxu0 0
        %3288 = vmatprep.subr.bf16.mxu0 0
        %3289 = vmatpush1.bf16.msra.mxu0 0
        %3290 = vmatprep.subr.bf16.mxu0 0
        %3291 = vmatpush1.bf16.msra.mxu0 0
        %3292 = vmatprep.subr.bf16.mxu0 0
        %3293 = vmatpush1.bf16.msra.mxu0 0
        %3294 = vmatprep.subr.bf16.mxu0 0
        %3295 = vmatpush1.bf16.msra.mxu0 0
        %3296 = vmatprep.subr.bf16.mxu0 0
        %3297 = vmatpush1.bf16.msra.mxu0 0
        %3298 = vmatprep.subr.bf16.mxu0 0
        %3299 = vmatpush1.bf16.msra.mxu0 0
        %3300 = vmatprep.mubr.bf16.mxu0 0
        %3301 = vmatmul.mubr.bf16.gmra.mrb[0].mxu0 %v3196
        %v3302 = vpop.f32.mrb[0].mxu0
        %v3303 = vadd.f32 %v3218, %v3302
        %v3304 = vpop.f32.mrb[0].mxu0
        %v3305 = vpop.f32.mrb[0].mxu0
        %v3306 = vadd.f32 %v3218, %v3305
        %v3307 = vpop.f32.mrb[0].mxu0
        %3308 = vdwg.mxu0
        %v3309 = vadd.f32 %v3303, %v565
        %v3310 = vadd.f32 %v3306, %v566
        %3311 = vst.msk [vmem:[%s542] sm:$0xff] %vm712, %v3309
        %3312 = vst.msk [vmem:[%s542 + $0x8] sm:$0xff] %vm712, %v3310
        %s3313 = sand.u32 %s383, 1
        %s3314 = scalar_lea.sflag [#allocation4], %s3313
        %s3315 = sand.u32 %s383, 1
        %s3316 = smul.addr %s3315, 16
        %s3317 = scalar_lea.vmem [#allocation3], %s3316
        // Predicated region
        $region81: #{tpu_custom_call.1} parent=79 // pred_check
          %p3318 = pneg %p393
        $region82: #{tpu_custom_call.1} parent=79 // pred_check_branch
          %3320 = sbr.rel (%p3318) target = $region84
        $region83: #{tpu_custom_call.1} parent=79 // pred_region
          %s3321 = smul.u32 2, %s34
          %s3323 = ssub.s32 256, 256
          %3324 = vsyncadd %s3314, %s3323
          %s3325 = smul.addr %s33, 2
          %s3326 = sadd.s32 %s3321, %s3325
          %s3327 = smul.addr %s3326, 128
          %s3328 = scalar_lea.hbm %s15, %s3327
          %s3329 = sshll.u32 %s3317, 4
          %s3330 = int_to_ptr.vmem [resolvable:$true] %s3329
          %3335 = dma.vmem_to_hbm [thread:$0]  %s3330, 256, %s3328, %s3314, 128, 128, 8
        $region84: #{tpu_custom_call.1} parent=79 // pred_fallthru
          _
      $region80: #{tpu_custom_call.1} parent=5 // pred_fallthru
        _
      %p3336 = scmp.le.s32.totalorder 2, %s24
      // Predicated region
      $region85: #{tpu_custom_call.1} parent=5 // pred_check
        %p3337 = pneg %p3336
      $region86: #{tpu_custom_call.1} parent=5 // pred_check_branch
        %3339 = sbr.rel (%p3337) target = $region88
      $region87: #{tpu_custom_call.1} parent=5 // pred_region
        %s3340 = ssub.s32 %s24, 2
        // Predicated region
        $region89: #{tpu_custom_call.1} parent=87 // pred_check
          %p3341 = pneg %p399
        $region90: #{tpu_custom_call.1} parent=87 // pred_check_branch
          %3343 = sbr.rel (%p3341) target = $region92
        $region91: #{tpu_custom_call.1} parent=87 // pred_region
          %s3344 = sand.u32 %s384, 1
          %s3345 = scalar_lea.sflag [#allocation4], %s3344
          %s3346 = sand.u32 %s384, 1
          %s3347 = smul.addr %s3346, 16
          %s3348 = scalar_lea.vmem [#allocation3], %s3347
          %3349 = dma.done %s3345, 256
        $region92: #{tpu_custom_call.1} parent=87 // pred_fallthru
          _
      $region88: #{tpu_custom_call.1} parent=5 // pred_fallthru
        _
    $region6: #{tpu_custom_call.1} parent=1 // loop_footer
      %s28 = sadd.s32 1, %s24
    $region7: #{tpu_custom_call.1} parent=1 // loop_footer_branch
      %23 = sbr.rel target = $region3
    $region8: #{tpu_custom_call.1} parent=1 // loop_exit
      _
    %3350 = vsyncpa [#allocation4], 1
    %s3351 = scalar_lea.sflag [#allocation4], 1
    %3352 = vsyncpa %s3351, 1

</llo_original>
